<compile_context>
chip_gen: v5e
topology: v5e:2x2
jax: 0.10.0
libtpu: 0.0.40
codegen_flags: <defaults>
</compile_context>

<pallas_src>
import functools

import jax
import jax.numpy as jnp
from jax.experimental import pallas as pl
from jax.experimental.pallas import tpu as pltpu

# ----------------------------- small config ---------------------------------
B = 2              # batch
NUM_GROUP = 8      # G (groups / sequence length before masking)
GROUP_SIZE = 16    # N (points per group)
TRANS_DIM = 64     # transformer width (== encoder_dims in Point-MAE)
ENC_DIM = 64       # encoder_channel
DEPTH = 2
NUM_HEADS = 4
MLP_RATIO = 4
MASK_RATIO = 0.5
MASK_TYPE = "rand"     # TODO(synk): mask_type='block' path not implemented
LN_EPS = 1e-5

_INV_SQRT2 = 0.7071067811865475


# --------------------------- in-kernel helpers -------------------------------
def _layernorm(x, g, b):
    mu = jnp.mean(x, axis=-1, keepdims=True)
    var = jnp.mean((x - mu) ** 2, axis=-1, keepdims=True)
    return (x - mu) * jax.lax.rsqrt(var + LN_EPS) * g + b


def _gelu(x):
    # exact (erf) GELU, matching torch.nn.GELU default
    return 0.5 * x * (1.0 + jax.lax.erf(x * _INV_SQRT2))


def _full_spec(shape):
    n = len(shape)
    return pl.BlockSpec(shape, lambda i, _n=n: (0,) * _n)


# --------------------------- Encoder_5D kernel -------------------------------
# One grid step = one batch element: slab of (G*N, 5) points.
#   conv1x1(5->128)+BN+ReLU -> conv1x1(128->256) -> per-group max ->
#   [global;local] handled as split-weight matmul -> conv1x1(512->512)+BN+ReLU
#   -> conv1x1(512->ENC) -> per-group max.
def _encoder_kernel(pg_ref, w1_ref, b1_ref, s1_ref, t1_ref, w2_ref, b2_ref,
                    w3g_ref, w3l_ref, b3_ref, s2_ref, t2_ref, w4_ref, b4_ref,
                    out_ref, *, g, n):
    x = pg_ref[0]                                                     # (G*N, 5)
    h = jnp.dot(x, w1_ref[...], preferred_element_type=jnp.float32) + b1_ref[...]
    h = jnp.maximum(h * s1_ref[...] + t1_ref[...], 0.0)               # BN(eval)+ReLU
    h = jnp.dot(h, w2_ref[...], preferred_element_type=jnp.float32) + b2_ref[...]  # (G*N, 256)

    hg = jnp.max(h.reshape(g, n, h.shape[-1]), axis=1)                # (G, 256) global feat
    glob = jnp.dot(hg, w3g_ref[...], preferred_element_type=jnp.float32)            # (G, 512)
    loc = jnp.dot(h, w3l_ref[...], preferred_element_type=jnp.float32)              # (G*N, 512)
    h = loc.reshape(g, n, loc.shape[-1]) + glob[:, None, :] + b3_ref[...]
    h = jnp.maximum(h * s2_ref[...] + t2_ref[...], 0.0)               # (G, N, 512)

    h = jnp.dot(h.reshape(g * n, h.shape[-1]), w4_ref[...],
                preferred_element_type=jnp.float32) + b4_ref[...]     # (G*N, ENC)
    out_ref[...] = jnp.max(h.reshape(g, n, h.shape[-1]), axis=1)[None]  # (1, G, ENC)


def encoder_5d(point_groups, p):
    bs, g, n, _ = point_groups.shape
    pg = point_groups.reshape(bs, g * n, 5)
    kernel = functools.partial(_encoder_kernel, g=g, n=n)
    args = (pg, p["w1"], p["b1"], p["s1"], p["t1"], p["w2"], p["b2"],
            p["w3g"], p["w3l"], p["b3"], p["s2"], p["t2"], p["w4"], p["b4"])
    in_specs = [pl.BlockSpec((1, g * n, 5), lambda i: (i, 0, 0))] + \
               [_full_spec(a.shape) for a in args[1:]]
    return pl.pallas_call(
        kernel,
        grid=(bs,),
        in_specs=in_specs,
        out_specs=pl.BlockSpec((1, g, ENC_DIM), lambda i: (i, 0, 0)),
        out_shape=jax.ShapeDtypeStruct((bs, g, ENC_DIM), jnp.float32),
        compiler_params=pltpu.CompilerParams(dimension_semantics=("parallel",)),
    )(*args)


# ------------- fused pos_embed + transformer blocks + final LN kernel ---------
# One grid step = one batch element's visible tokens (S=G_vis, D=TRANS_DIM).
# TransformerEncoder semantics: x = block(x + pos) for each block, where
# block(u) = u + Attn(LN1(u)); u = u + MLP(LN2(u)).  DropPath/Dropout = identity.
def _transformer_kernel(tok_ref, ctr_ref,
                        pw1_ref, pb1_ref, pw2_ref, pb2_ref,
                        ln1g_ref, ln1b_ref, wqkv_ref, wproj_ref, bproj_ref,
                        ln2g_ref, ln2b_ref, wfc1_ref, bfc1_ref, wfc2_ref, bfc2_ref,
                        ng_ref, nb_ref, out_ref, *, depth, num_heads):
    c = ctr_ref[0]                                                    # (S, 5)
    ph = jnp.dot(c, pw1_ref[...], preferred_element_type=jnp.float32) + pb1_ref[...]
    pos = jnp.dot(_gelu(ph), pw2_ref[...],
                  preferred_element_type=jnp.float32) + pb2_ref[...]  # (S, D)

    x = tok_ref[0]                                                    # (S, D)
    s, d = x.shape
    dh = d // num_heads
    scale = 1.0 / (dh ** 0.5)

    for l in range(depth):
        x = x + pos
        h = _layernorm(x, ln1g_ref[l], ln1b_ref[l])
        qkv = jnp.dot(h, wqkv_ref[l], preferred_element_type=jnp.float32)   # (S, 3D)
        q, k, v = qkv[:, 0:d], qkv[:, d:2 * d], qkv[:, 2 * d:3 * d]
        # batched multi-head attention: (H, S, dh) with head as leading batch dim
        qh = jnp.stack([q[:, i * dh:(i + 1) * dh] for i in range(num_heads)], axis=0)
        kh = jnp.stack([k[:, i * dh:(i + 1) * dh] for i in range(num_heads)], axis=0)
        vh = jnp.stack([v[:, i * dh:(i + 1) * dh] for i in range(num_heads)], axis=0)
        sc = jnp.einsum('hqd,hkd->hqk', qh, kh,
                        preferred_element_type=jnp.float32) * scale         # (H, S, S)
        m = jnp.max(sc, axis=-1, keepdims=True)
        e = jnp.exp(sc - m)
        p = e * pl.reciprocal(jnp.sum(e, axis=-1, keepdims=True), approx=True)
        oh = jnp.einsum('hqk,hkd->hqd', p, vh,
                        preferred_element_type=jnp.float32)                 # (H, S, dh)
        attn = jnp.concatenate([oh[i] for i in range(num_heads)], axis=-1)  # (S, D)
        attn = jnp.dot(attn, wproj_ref[l],
                       preferred_element_type=jnp.float32) + bproj_ref[l]
        x = x + attn

        h2 = _layernorm(x, ln2g_ref[l], ln2b_ref[l])
        m1 = _gelu(jnp.dot(h2, wfc1_ref[l],
                           preferred_element_type=jnp.float32) + bfc1_ref[l])
        m2 = jnp.dot(m1, wfc2_ref[l],
                     preferred_element_type=jnp.float32) + bfc2_ref[l]
        x = x + m2

    out_ref[...] = _layernorm(x, ng_ref[...], nb_ref[...])[None]


def transformer_stack(x_vis, center_vis, params):
    bsz, s, d = x_vis.shape
    pp, bp, nrm = params["pos_embed"], params["blocks"], params["norm"]
    kernel = functools.partial(_transformer_kernel, depth=DEPTH, num_heads=NUM_HEADS)
    args = (x_vis, center_vis,
            pp["w1"], pp["b1"], pp["w2"], pp["b2"],
            bp["ln1_g"], bp["ln1_b"], bp["w_qkv"], bp["w_proj"], bp["b_proj"],
            bp["ln2_g"], bp["ln2_b"], bp["w_fc1"], bp["b_fc1"], bp["w_fc2"], bp["b_fc2"],
            nrm["g"], nrm["b"])
    in_specs = [pl.BlockSpec((1, s, d), lambda i: (i, 0, 0)),
                pl.BlockSpec((1, s, 5), lambda i: (i, 0, 0))] + \
               [_full_spec(a.shape) for a in args[2:]]
    return pl.pallas_call(
        kernel,
        grid=(bsz,),
        in_specs=in_specs,
        out_specs=pl.BlockSpec((1, s, d), lambda i: (i, 0, 0)),
        out_shape=jax.ShapeDtypeStruct((bsz, s, d), jnp.float32),
        compiler_params=pltpu.CompilerParams(dimension_semantics=("parallel",)),
    )(*args)


# ------------------------------- masking (glue) --------------------------------
# _mask_center_rand: exactly int(ratio*G) masked positions per row.  Reference
# uses host np.random; here a jax.random key gives a deterministic equivalent.
def mask_center_rand(key, bsz, g, mask_ratio):
    num_mask = int(mask_ratio * g)
    if num_mask == 0:
        return jnp.zeros((bsz, g), dtype=bool)
    keys = jax.random.split(key, bsz)

    def one(k):
        perm = jax.random.permutation(k, g)
        return jnp.zeros((g,), dtype=bool).at[perm[:num_mask]].set(True)

    return jax.vmap(one)(keys)


# --------------------------------- forward ------------------------------------
def forward(neighborhood, center, params, mask_key, noaug=False):
    """neighborhood: (B, G, N, 5), center: (B, G, 5) -> (x_vis, bool_masked_pos)."""
    bsz, g, _, _ = neighborhood.shape
    if noaug or MASK_RATIO == 0:
        bool_masked_pos = jnp.zeros((bsz, g), dtype=bool)
        n_vis = g
    else:
        bool_masked_pos = mask_center_rand(mask_key, bsz, g, MASK_RATIO)
        n_vis = g - int(MASK_RATIO * g)

    group_input_tokens = encoder_5d(neighborhood, params["encoder"])   # (B, G, C)

    # visible-token gather: data-dependent indexing kept as plain-JAX glue.
    vis_idx = jnp.argsort(bool_masked_pos.astype(jnp.int32), axis=1,
                          stable=True)[:, :n_vis]                      # (B, n_vis)
    x_vis = jnp.take_along_axis(group_input_tokens, vis_idx[:, :, None], axis=1)
    masked_center = jnp.take_along_axis(center, vis_idx[:, :, None], axis=1)

    # fused pos_embed + DEPTH blocks + final LayerNorm (single pallas_call)
    x_vis = transformer_stack(x_vis, masked_center, params)            # (B, n_vis, D)
    return x_vis, bool_masked_pos


# ----------------------------- parameter init ----------------------------------
def init_params(key):
    keys = iter(jax.random.split(key, 64))
    nk = lambda: next(keys)

    def w(shape, std=0.02):
        return std * jax.random.normal(nk(), shape, jnp.float32)

    def bias(*shape):
        return 0.01 * jax.random.normal(nk(), shape, jnp.float32)

    def bn(c):
        gamma = 1.0 + 0.02 * jax.random.normal(nk(), (c,), jnp.float32)
        beta = 0.02 * jax.random.normal(nk(), (c,), jnp.float32)
        rmean = 0.02 * jax.random.normal(nk(), (c,), jnp.float32)
        rvar = 1.0 + 0.1 * jnp.abs(jax.random.normal(nk(), (c,), jnp.float32))
        scale = gamma * jax.lax.rsqrt(rvar + 1e-5)
        shift = beta - rmean * scale
        return scale.reshape(1, c), shift.reshape(1, c)

    enc_s1, enc_t1 = bn(128)
    enc_s2, enc_t2 = bn(512)
    w3 = w((512, 512))
    encoder = {
        "w1": w((5, 128)), "b1": bias(1, 128), "s1": enc_s1, "t1": enc_t1,
        "w2": w((128, 256)), "b2": bias(1, 256),
        # second_conv input is cat([global(256); local(256)]) -> split w3 rows
        "w3g": w3[:256], "w3l": w3[256:], "b3": bias(1, 512),
        "s2": enc_s2, "t2": enc_t2,
        "w4": w((512, ENC_DIM)), "b4": bias(1, ENC_DIM),
    }

    pos_p = {"w1": w((5, 128)), "b1": bias(1, 128),
             "w2": w((128, TRANS_DIM)), "b2": bias(1, TRANS_DIM)}

    L, D = DEPTH, TRANS_DIM
    hidden = MLP_RATIO * TRANS_DIM
    blocks = {
        "ln1_g": jnp.ones((L, 1, D), jnp.float32),
        "ln1_b": jnp.zeros((L, 1, D), jnp.float32),
        "w_qkv": w((L, D, 3 * D)),                       # qkv_bias=False
        "w_proj": w((L, D, D)), "b_proj": bias(L, 1, D),
        "ln2_g": jnp.ones((L, 1, D), jnp.float32),
        "ln2_b": jnp.zeros((L, 1, D), jnp.float32),
        "w_fc1": w((L, D, hidden)), "b_fc1": bias(L, 1, hidden),
        "w_fc2": w((L, hidden, D)), "b_fc2": bias(L, 1, D),
    }

    return {
        "encoder": encoder,
        "pos_embed": pos_p,
        "blocks": blocks,
        "norm": {"g": jnp.ones((1, TRANS_DIM), jnp.float32),
                 "b": jnp.zeros((1, TRANS_DIM), jnp.float32)},
    }


if __name__ == "__main__":
    key = jax.random.PRNGKey(0)
    pkey, nkey, ckey, mkey = jax.random.split(key, 4)
    params = init_params(pkey)
    neighborhood = jax.random.normal(nkey, (B, NUM_GROUP, GROUP_SIZE, 5), jnp.float32)
    center = jax.random.normal(ckey, (B, NUM_GROUP, 5), jnp.float32)

    fwd = jax.jit(forward, static_argnames=("noaug",))
    x_vis, mask = fwd(neighborhood, center, params, mkey, noaug=False)
    x_vis, mask = jax.block_until_ready((x_vis, mask))

    num_mask = int(MASK_RATIO * NUM_GROUP)
    n_vis = NUM_GROUP - num_mask
    assert x_vis.shape == (B, n_vis, TRANS_DIM), x_vis.shape
    assert mask.shape == (B, NUM_GROUP) and mask.dtype == jnp.bool_, (mask.shape, mask.dtype)
    assert bool(jnp.all(jnp.isfinite(x_vis)))
    assert bool(jnp.all(jnp.sum(mask, axis=1) == num_mask))
    print("KERNEL_OK")
</pallas_src>

<mosaic_0001>
module attributes {stable_mosaic.version = 11 : i64} {
  func.func @_encoder_kernel(%arg0: i32, %arg1: memref<1x128x5xf32, #tpu.memory_space<vmem>>, %arg2: memref<5x128xf32, #tpu.memory_space<vmem>>, %arg3: memref<1x128xf32, #tpu.memory_space<vmem>>, %arg4: memref<1x128xf32, #tpu.memory_space<vmem>>, %arg5: memref<1x128xf32, #tpu.memory_space<vmem>>, %arg6: memref<128x256xf32, #tpu.memory_space<vmem>>, %arg7: memref<1x256xf32, #tpu.memory_space<vmem>>, %arg8: memref<256x512xf32, #tpu.memory_space<vmem>>, %arg9: memref<256x512xf32, #tpu.memory_space<vmem>>, %arg10: memref<1x512xf32, #tpu.memory_space<vmem>>, %arg11: memref<1x512xf32, #tpu.memory_space<vmem>>, %arg12: memref<1x512xf32, #tpu.memory_space<vmem>>, %arg13: memref<512x64xf32, #tpu.memory_space<vmem>>, %arg14: memref<1x64xf32, #tpu.memory_space<vmem>>, %arg15: memref<1x8x64xf32, #tpu.memory_space<vmem>>) attributes {dimension_semantics = [#tpu.dimension_semantics<parallel>], iteration_bounds = array<i64: 2>, scalar_prefetch = 0 : i64, scratch_operands = 0 : i64, tpu.core_type = #tpu.core_type<tc>, window_params = [{transform_indices = @transform_0, window_bounds = array<i64: 1, 128, 5>}, {pipeline_mode = #tpu.pipeline_mode<synchronous>, transform_indices = @transform_1, window_bounds = array<i64: 5, 128>}, {pipeline_mode = #tpu.pipeline_mode<synchronous>, transform_indices = @transform_2, window_bounds = array<i64: 1, 128>}, {pipeline_mode = #tpu.pipeline_mode<synchronous>, transform_indices = @transform_3, window_bounds = array<i64: 1, 128>}, {pipeline_mode = #tpu.pipeline_mode<synchronous>, transform_indices = @transform_4, window_bounds = array<i64: 1, 128>}, {pipeline_mode = #tpu.pipeline_mode<synchronous>, transform_indices = @transform_5, window_bounds = array<i64: 128, 256>}, {pipeline_mode = #tpu.pipeline_mode<synchronous>, transform_indices = @transform_6, window_bounds = array<i64: 1, 256>}, {pipeline_mode = #tpu.pipeline_mode<synchronous>, transform_indices = @transform_7, window_bounds = array<i64: 256, 512>}, {pipeline_mode = #tpu.pipeline_mode<synchronous>, transform_indices = @transform_8, window_bounds = array<i64: 256, 512>}, {pipeline_mode = #tpu.pipeline_mode<synchronous>, transform_indices = @transform_9, window_bounds = array<i64: 1, 512>}, {pipeline_mode = #tpu.pipeline_mode<synchronous>, transform_indices = @transform_10, window_bounds = array<i64: 1, 512>}, {pipeline_mode = #tpu.pipeline_mode<synchronous>, transform_indices = @transform_11, window_bounds = array<i64: 1, 512>}, {pipeline_mode = #tpu.pipeline_mode<synchronous>, transform_indices = @transform_12, window_bounds = array<i64: 512, 64>}, {pipeline_mode = #tpu.pipeline_mode<synchronous>, transform_indices = @transform_13, window_bounds = array<i64: 1, 64>}, {transform_indices = @transform_14, window_bounds = array<i64: 1, 8, 64>}]} {
    %c0 = arith.constant 0 : index
    %c0_0 = arith.constant 0 : index
    %c0_1 = arith.constant 0 : index
    %0 = vector.load %arg1[%c0, %c0_0, %c0_1] : memref<1x128x5xf32, #tpu.memory_space<vmem>>, vector<1x128x5xf32>
    %1 = vector.shape_cast %0 : vector<1x128x5xf32> to vector<128x5xf32>
    %c0_2 = arith.constant 0 : index
    %c0_3 = arith.constant 0 : index
    %2 = vector.load %arg2[%c0_2, %c0_3] : memref<5x128xf32, #tpu.memory_space<vmem>>, vector<5x128xf32>
    %cst = arith.constant dense<0.000000e+00> : vector<128x128xf32>
    %3 = tpu.matmul %1, %2, %cst {dimension_numbers = #tpu.dot_dimension_numbers<[1], [0], [0], [1], [0, 0, 1, 1], [], []>} : vector<128x5xf32>, vector<5x128xf32>, vector<128x128xf32> -> vector<128x128xf32>
    %c0_4 = arith.constant 0 : index
    %c0_5 = arith.constant 0 : index
    %4 = vector.load %arg3[%c0_4, %c0_5] : memref<1x128xf32, #tpu.memory_space<vmem>>, vector<1x128xf32>
    %5 = vector.broadcast %4 : vector<1x128xf32> to vector<128x128xf32>
    %6 = arith.addf %3, %5 : vector<128x128xf32>
    %c0_6 = arith.constant 0 : index
    %c0_7 = arith.constant 0 : index
    %7 = vector.load %arg4[%c0_6, %c0_7] : memref<1x128xf32, #tpu.memory_space<vmem>>, vector<1x128xf32>
    %8 = vector.broadcast %7 : vector<1x128xf32> to vector<128x128xf32>
    %9 = arith.mulf %6, %8 : vector<128x128xf32>
    %c0_8 = arith.constant 0 : index
    %c0_9 = arith.constant 0 : index
    %10 = vector.load %arg5[%c0_8, %c0_9] : memref<1x128xf32, #tpu.memory_space<vmem>>, vector<1x128xf32>
    %11 = vector.broadcast %10 : vector<1x128xf32> to vector<128x128xf32>
    %12 = arith.addf %9, %11 : vector<128x128xf32>
    %cst_10 = arith.constant 0.000000e+00 : f32
    %13 = vector.broadcast %cst_10 : f32 to vector<128x128xf32>
    %14 = arith.maximumf %12, %13 : vector<128x128xf32>
    %c0_11 = arith.constant 0 : index
    %c0_12 = arith.constant 0 : index
    %15 = vector.load %arg6[%c0_11, %c0_12] : memref<128x256xf32, #tpu.memory_space<vmem>>, vector<128x256xf32>
    %cst_13 = arith.constant dense<0.000000e+00> : vector<128x256xf32>
    %16 = tpu.matmul %14, %15, %cst_13 {dimension_numbers = #tpu.dot_dimension_numbers<[1], [0], [0], [1], [0, 0, 1, 1], [], []>} : vector<128x128xf32>, vector<128x256xf32>, vector<128x256xf32> -> vector<128x256xf32>
    %c0_14 = arith.constant 0 : index
    %c0_15 = arith.constant 0 : index
    %17 = vector.load %arg7[%c0_14, %c0_15] : memref<1x256xf32, #tpu.memory_space<vmem>>, vector<1x256xf32>
    %18 = vector.broadcast %17 : vector<1x256xf32> to vector<128x256xf32>
    %19 = arith.addf %16, %18 : vector<128x256xf32>
    %20 = vector.shape_cast %19 : vector<128x256xf32> to vector<8x16x256xf32>
    %cst_16 = arith.constant dense<0xFF800000> : vector<8x256xf32>
    %21 = vector.multi_reduction <maximumf>, %20, %cst_16 [1] : vector<8x16x256xf32> to vector<8x256xf32>
    %c0_17 = arith.constant 0 : index
    %c0_18 = arith.constant 0 : index
    %22 = vector.load %arg8[%c0_17, %c0_18] : memref<256x512xf32, #tpu.memory_space<vmem>>, vector<256x512xf32>
    %cst_19 = arith.constant dense<0.000000e+00> : vector<8x512xf32>
    %23 = tpu.matmul %21, %22, %cst_19 {dimension_numbers = #tpu.dot_dimension_numbers<[1], [0], [0], [1], [0, 0, 1, 1], [], []>} : vector<8x256xf32>, vector<256x512xf32>, vector<8x512xf32> -> vector<8x512xf32>
    %c0_20 = arith.constant 0 : index
    %c0_21 = arith.constant 0 : index
    %24 = vector.load %arg9[%c0_20, %c0_21] : memref<256x512xf32, #tpu.memory_space<vmem>>, vector<256x512xf32>
    %cst_22 = arith.constant dense<0.000000e+00> : vector<128x512xf32>
    %25 = tpu.matmul %19, %24, %cst_22 {dimension_numbers = #tpu.dot_dimension_numbers<[1], [0], [0], [1], [0, 0, 1, 1], [], []>} : vector<128x256xf32>, vector<256x512xf32>, vector<128x512xf32> -> vector<128x512xf32>
    %26 = vector.shape_cast %25 : vector<128x512xf32> to vector<8x16x512xf32>
    %27 = vector.shape_cast %23 : vector<8x512xf32> to vector<8x1x512xf32>
    %28 = vector.broadcast %27 : vector<8x1x512xf32> to vector<8x16x512xf32>
    %29 = arith.addf %26, %28 : vector<8x16x512xf32>
    %c0_23 = arith.constant 0 : index
    %c0_24 = arith.constant 0 : index
    %30 = vector.load %arg10[%c0_23, %c0_24] : memref<1x512xf32, #tpu.memory_space<vmem>>, vector<1x512xf32>
    %31 = vector.shape_cast %30 : vector<1x512xf32> to vector<1x1x512xf32>
    %32 = vector.broadcast %31 : vector<1x1x512xf32> to vector<8x16x512xf32>
    %33 = arith.addf %29, %32 : vector<8x16x512xf32>
    %c0_25 = arith.constant 0 : index
    %c0_26 = arith.constant 0 : index
    %34 = vector.load %arg11[%c0_25, %c0_26] : memref<1x512xf32, #tpu.memory_space<vmem>>, vector<1x512xf32>
    %35 = vector.shape_cast %34 : vector<1x512xf32> to vector<1x1x512xf32>
    %36 = vector.broadcast %35 : vector<1x1x512xf32> to vector<8x16x512xf32>
    %37 = arith.mulf %33, %36 : vector<8x16x512xf32>
    %c0_27 = arith.constant 0 : index
    %c0_28 = arith.constant 0 : index
    %38 = vector.load %arg12[%c0_27, %c0_28] : memref<1x512xf32, #tpu.memory_space<vmem>>, vector<1x512xf32>
    %39 = vector.shape_cast %38 : vector<1x512xf32> to vector<1x1x512xf32>
    %40 = vector.broadcast %39 : vector<1x1x512xf32> to vector<8x16x512xf32>
    %41 = arith.addf %37, %40 : vector<8x16x512xf32>
    %cst_29 = arith.constant 0.000000e+00 : f32
    %42 = vector.broadcast %cst_29 : f32 to vector<8x16x512xf32>
    %43 = arith.maximumf %41, %42 : vector<8x16x512xf32>
    %44 = vector.shape_cast %43 : vector<8x16x512xf32> to vector<128x512xf32>
    %c0_30 = arith.constant 0 : index
    %c0_31 = arith.constant 0 : index
    %45 = vector.load %arg13[%c0_30, %c0_31] : memref<512x64xf32, #tpu.memory_space<vmem>>, vector<512x64xf32>
    %cst_32 = arith.constant dense<0.000000e+00> : vector<128x64xf32>
    %46 = tpu.matmul %44, %45, %cst_32 {dimension_numbers = #tpu.dot_dimension_numbers<[1], [0], [0], [1], [0, 0, 1, 1], [], []>} : vector<128x512xf32>, vector<512x64xf32>, vector<128x64xf32> -> vector<128x64xf32>
    %c0_33 = arith.constant 0 : index
    %c0_34 = arith.constant 0 : index
    %47 = vector.load %arg14[%c0_33, %c0_34] : memref<1x64xf32, #tpu.memory_space<vmem>>, vector<1x64xf32>
    %48 = vector.broadcast %47 : vector<1x64xf32> to vector<128x64xf32>
    %49 = arith.addf %46, %48 : vector<128x64xf32>
    %50 = vector.shape_cast %49 : vector<128x64xf32> to vector<8x16x64xf32>
    %cst_35 = arith.constant dense<0xFF800000> : vector<8x64xf32>
    %51 = vector.multi_reduction <maximumf>, %50, %cst_35 [1] : vector<8x16x64xf32> to vector<8x64xf32>
    %52 = vector.shape_cast %51 : vector<8x64xf32> to vector<1x8x64xf32>
    %c0_36 = arith.constant 0 : index
    %c0_37 = arith.constant 0 : index
    %c0_38 = arith.constant 0 : index
    %53 = vector.load %arg15[%c0_36, %c0_37, %c0_38] : memref<1x8x64xf32, #tpu.memory_space<vmem>>, vector<1x8x64xf32>
    tpu.vector_store %arg15[%c0_36, %c0_37, %c0_38], %52 {strides = array<i32>} : memref<1x8x64xf32, #tpu.memory_space<vmem>>, vector<1x8x64xf32>,
    return
  }
  func.func @transform_0(%arg0: i32) -> (i32, i32, i32) {
    %c0_i32 = arith.constant 0 : i32
    %c0_i32_0 = arith.constant 0 : i32
    %c0_i32_1 = arith.constant 0 : i32
    return %arg0, %c0_i32, %c0_i32_0 : i32, i32, i32
  }
  func.func @transform_1(%arg0: i32) -> (i32, i32) {
    %c0_i32 = arith.constant 0 : i32
    %c0_i32_0 = arith.constant 0 : i32
    %c0_i32_1 = arith.constant 0 : i32
    return %c0_i32, %c0_i32_0 : i32, i32
  }
  func.func @transform_2(%arg0: i32) -> (i32, i32) {
    %c0_i32 = arith.constant 0 : i32
    %c0_i32_0 = arith.constant 0 : i32
    %c0_i32_1 = arith.constant 0 : i32
    return %c0_i32, %c0_i32_0 : i32, i32
  }
  func.func @transform_3(%arg0: i32) -> (i32, i32) {
    %c0_i32 = arith.constant 0 : i32
    %c0_i32_0 = arith.constant 0 : i32
    %c0_i32_1 = arith.constant 0 : i32
    return %c0_i32, %c0_i32_0 : i32, i32
  }
  func.func @transform_4(%arg0: i32) -> (i32, i32) {
    %c0_i32 = arith.constant 0 : i32
    %c0_i32_0 = arith.constant 0 : i32
    %c0_i32_1 = arith.constant 0 : i32
    return %c0_i32, %c0_i32_0 : i32, i32
  }
  func.func @transform_5(%arg0: i32) -> (i32, i32) {
    %c0_i32 = arith.constant 0 : i32
    %c0_i32_0 = arith.constant 0 : i32
    %c0_i32_1 = arith.constant 0 : i32
    return %c0_i32, %c0_i32_0 : i32, i32
  }
  func.func @transform_6(%arg0: i32) -> (i32, i32) {
    %c0_i32 = arith.constant 0 : i32
    %c0_i32_0 = arith.constant 0 : i32
    %c0_i32_1 = arith.constant 0 : i32
    return %c0_i32, %c0_i32_0 : i32, i32
  }
  func.func @transform_7(%arg0: i32) -> (i32, i32) {
    %c0_i32 = arith.constant 0 : i32
    %c0_i32_0 = arith.constant 0 : i32
    %c0_i32_1 = arith.constant 0 : i32
    return %c0_i32, %c0_i32_0 : i32, i32
  }
  func.func @transform_8(%arg0: i32) -> (i32, i32) {
    %c0_i32 = arith.constant 0 : i32
    %c0_i32_0 = arith.constant 0 : i32
    %c0_i32_1 = arith.constant 0 : i32
    return %c0_i32, %c0_i32_0 : i32, i32
  }
  func.func @transform_9(%arg0: i32) -> (i32, i32) {
    %c0_i32 = arith.constant 0 : i32
    %c0_i32_0 = arith.constant 0 : i32
    %c0_i32_1 = arith.constant 0 : i32
    return %c0_i32, %c0_i32_0 : i32, i32
  }
  func.func @transform_10(%arg0: i32) -> (i32, i32) {
    %c0_i32 = arith.constant 0 : i32
    %c0_i32_0 = arith.constant 0 : i32
    %c0_i32_1 = arith.constant 0 : i32
    return %c0_i32, %c0_i32_0 : i32, i32
  }
  func.func @transform_11(%arg0: i32) -> (i32, i32) {
    %c0_i32 = arith.constant 0 : i32
    %c0_i32_0 = arith.constant 0 : i32
    %c0_i32_1 = arith.constant 0 : i32
    return %c0_i32, %c0_i32_0 : i32, i32
  }
  func.func @transform_12(%arg0: i32) -> (i32, i32) {
    %c0_i32 = arith.constant 0 : i32
    %c0_i32_0 = arith.constant 0 : i32
    %c0_i32_1 = arith.constant 0 : i32
    return %c0_i32, %c0_i32_0 : i32, i32
  }
  func.func @transform_13(%arg0: i32) -> (i32, i32) {
    %c0_i32 = arith.constant 0 : i32
    %c0_i32_0 = arith.constant 0 : i32
    %c0_i32_1 = arith.constant 0 : i32
    return %c0_i32, %c0_i32_0 : i32, i32
  }
  func.func @transform_14(%arg0: i32) -> (i32, i32, i32) {
    %c0_i32 = arith.constant 0 : i32
    %c0_i32_0 = arith.constant 0 : i32
    %c0_i32_1 = arith.constant 0 : i32
    return %arg0, %c0_i32, %c0_i32_0 : i32, i32, i32
  }
}

module attributes {stable_mosaic.version = 11 : i64} {
  func.func @_transformer_kernel(%arg0: i32, %arg1: memref<1x4x64xf32, #tpu.memory_space<vmem>>, %arg2: memref<1x4x5xf32, #tpu.memory_space<vmem>>, %arg3: memref<5x128xf32, #tpu.memory_space<vmem>>, %arg4: memref<1x128xf32, #tpu.memory_space<vmem>>, %arg5: memref<128x64xf32, #tpu.memory_space<vmem>>, %arg6: memref<1x64xf32, #tpu.memory_space<vmem>>, %arg7: memref<2x1x64xf32, #tpu.memory_space<vmem>>, %arg8: memref<2x1x64xf32, #tpu.memory_space<vmem>>, %arg9: memref<2x64x192xf32, #tpu.memory_space<vmem>>, %arg10: memref<2x64x64xf32, #tpu.memory_space<vmem>>, %arg11: memref<2x1x64xf32, #tpu.memory_space<vmem>>, %arg12: memref<2x1x64xf32, #tpu.memory_space<vmem>>, %arg13: memref<2x1x64xf32, #tpu.memory_space<vmem>>, %arg14: memref<2x64x256xf32, #tpu.memory_space<vmem>>, %arg15: memref<2x1x256xf32, #tpu.memory_space<vmem>>, %arg16: memref<2x256x64xf32, #tpu.memory_space<vmem>>, %arg17: memref<2x1x64xf32, #tpu.memory_space<vmem>>, %arg18: memref<1x64xf32, #tpu.memory_space<vmem>>, %arg19: memref<1x64xf32, #tpu.memory_space<vmem>>, %arg20: memref<1x4x64xf32, #tpu.memory_space<vmem>>) attributes {dimension_semantics = [#tpu.dimension_semantics<parallel>], iteration_bounds = array<i64: 2>, scalar_prefetch = 0 : i64, scratch_operands = 0 : i64, tpu.core_type = #tpu.core_type<tc>, window_params = [{transform_indices = @transform_0, window_bounds = array<i64: 1, 4, 64>}, {transform_indices = @transform_1, window_bounds = array<i64: 1, 4, 5>}, {pipeline_mode = #tpu.pipeline_mode<synchronous>, transform_indices = @transform_2, window_bounds = array<i64: 5, 128>}, {pipeline_mode = #tpu.pipeline_mode<synchronous>, transform_indices = @transform_3, window_bounds = array<i64: 1, 128>}, {pipeline_mode = #tpu.pipeline_mode<synchronous>, transform_indices = @transform_4, window_bounds = array<i64: 128, 64>}, {pipeline_mode = #tpu.pipeline_mode<synchronous>, transform_indices = @transform_5, window_bounds = array<i64: 1, 64>}, {pipeline_mode = #tpu.pipeline_mode<synchronous>, transform_indices = @transform_6, window_bounds = array<i64: 2, 1, 64>}, {pipeline_mode = #tpu.pipeline_mode<synchronous>, transform_indices = @transform_7, window_bounds = array<i64: 2, 1, 64>}, {pipeline_mode = #tpu.pipeline_mode<synchronous>, transform_indices = @transform_8, window_bounds = array<i64: 2, 64, 192>}, {pipeline_mode = #tpu.pipeline_mode<synchronous>, transform_indices = @transform_9, window_bounds = array<i64: 2, 64, 64>}, {pipeline_mode = #tpu.pipeline_mode<synchronous>, transform_indices = @transform_10, window_bounds = array<i64: 2, 1, 64>}, {pipeline_mode = #tpu.pipeline_mode<synchronous>, transform_indices = @transform_11, window_bounds = array<i64: 2, 1, 64>}, {pipeline_mode = #tpu.pipeline_mode<synchronous>, transform_indices = @transform_12, window_bounds = array<i64: 2, 1, 64>}, {pipeline_mode = #tpu.pipeline_mode<synchronous>, transform_indices = @transform_13, window_bounds = array<i64: 2, 64, 256>}, {pipeline_mode = #tpu.pipeline_mode<synchronous>, transform_indices = @transform_14, window_bounds = array<i64: 2, 1, 256>}, {pipeline_mode = #tpu.pipeline_mode<synchronous>, transform_indices = @transform_15, window_bounds = array<i64: 2, 256, 64>}, {pipeline_mode = #tpu.pipeline_mode<synchronous>, transform_indices = @transform_16, window_bounds = array<i64: 2, 1, 64>}, {pipeline_mode = #tpu.pipeline_mode<synchronous>, transform_indices = @transform_17, window_bounds = array<i64: 1, 64>}, {pipeline_mode = #tpu.pipeline_mode<synchronous>, transform_indices = @transform_18, window_bounds = array<i64: 1, 64>}, {transform_indices = @transform_19, window_bounds = array<i64: 1, 4, 64>}]} {
    %c0 = arith.constant 0 : index
    %c0_0 = arith.constant 0 : index
    %c0_1 = arith.constant 0 : index
    %0 = vector.load %arg2[%c0, %c0_0, %c0_1] : memref<1x4x5xf32, #tpu.memory_space<vmem>>, vector<1x4x5xf32>
    %1 = vector.shape_cast %0 : vector<1x4x5xf32> to vector<4x5xf32>
    %c0_2 = arith.constant 0 : index
    %c0_3 = arith.constant 0 : index
    %2 = vector.load %arg3[%c0_2, %c0_3] : memref<5x128xf32, #tpu.memory_space<vmem>>, vector<5x128xf32>
    %cst = arith.constant dense<0.000000e+00> : vector<4x128xf32>
    %3 = tpu.matmul %1, %2, %cst {dimension_numbers = #tpu.dot_dimension_numbers<[1], [0], [0], [1], [0, 0, 1, 1], [], []>} : vector<4x5xf32>, vector<5x128xf32>, vector<4x128xf32> -> vector<4x128xf32>
    %c0_4 = arith.constant 0 : index
    %c0_5 = arith.constant 0 : index
    %4 = vector.load %arg4[%c0_4, %c0_5] : memref<1x128xf32, #tpu.memory_space<vmem>>, vector<1x128xf32>
    %5 = vector.broadcast %4 : vector<1x128xf32> to vector<4x128xf32>
    %6 = arith.addf %3, %5 : vector<4x128xf32>
    %cst_6 = arith.constant 5.000000e-01 : f32
    %7 = vector.broadcast %cst_6 : f32 to vector<4x128xf32>
    %8 = arith.mulf %7, %6 : vector<4x128xf32>
    %cst_7 = arith.constant 0.707106769 : f32
    %9 = vector.broadcast %cst_7 : f32 to vector<4x128xf32>
    %10 = arith.mulf %6, %9 : vector<4x128xf32>
    %11 = math.erf %10 : vector<4x128xf32>
    %cst_8 = arith.constant 1.000000e+00 : f32
    %12 = vector.broadcast %cst_8 : f32 to vector<4x128xf32>
    %13 = arith.addf %12, %11 : vector<4x128xf32>
    %14 = arith.mulf %8, %13 : vector<4x128xf32>
    %c0_9 = arith.constant 0 : index
    %c0_10 = arith.constant 0 : index
    %15 = vector.load %arg5[%c0_9, %c0_10] : memref<128x64xf32, #tpu.memory_space<vmem>>, vector<128x64xf32>
    %cst_11 = arith.constant dense<0.000000e+00> : vector<4x64xf32>
    %16 = tpu.matmul %14, %15, %cst_11 {dimension_numbers = #tpu.dot_dimension_numbers<[1], [0], [0], [1], [0, 0, 1, 1], [], []>} : vector<4x128xf32>, vector<128x64xf32>, vector<4x64xf32> -> vector<4x64xf32>
    %c0_12 = arith.constant 0 : index
    %c0_13 = arith.constant 0 : index
    %17 = vector.load %arg6[%c0_12, %c0_13] : memref<1x64xf32, #tpu.memory_space<vmem>>, vector<1x64xf32>
    %18 = vector.broadcast %17 : vector<1x64xf32> to vector<4x64xf32>
    %19 = arith.addf %16, %18 : vector<4x64xf32>
    %c0_14 = arith.constant 0 : index
    %c0_15 = arith.constant 0 : index
    %c0_16 = arith.constant 0 : index
    %20 = vector.load %arg1[%c0_14, %c0_15, %c0_16] : memref<1x4x64xf32, #tpu.memory_space<vmem>>, vector<1x4x64xf32>
    %21 = vector.shape_cast %20 : vector<1x4x64xf32> to vector<4x64xf32>
    %22 = arith.addf %21, %19 : vector<4x64xf32>
    %c0_17 = arith.constant 0 : index
    %c0_18 = arith.constant 0 : index
    %c0_19 = arith.constant 0 : index
    %23 = vector.load %arg7[%c0_17, %c0_18, %c0_19] : memref<2x1x64xf32, #tpu.memory_space<vmem>>, vector<1x1x64xf32>
    %24 = vector.shape_cast %23 : vector<1x1x64xf32> to vector<1x64xf32>
    %c0_20 = arith.constant 0 : index
    %c0_21 = arith.constant 0 : index
    %c0_22 = arith.constant 0 : index
    %25 = vector.load %arg8[%c0_20, %c0_21, %c0_22] : memref<2x1x64xf32, #tpu.memory_space<vmem>>, vector<1x1x64xf32>
    %26 = vector.shape_cast %25 : vector<1x1x64xf32> to vector<1x64xf32>
    %cst_23 = arith.constant dense<0.000000e+00> : vector<4xf32>
    %27 = vector.multi_reduction <add>, %22, %cst_23 [1] : vector<4x64xf32> to vector<4xf32>
    %28 = vector.shape_cast %27 : vector<4xf32> to vector<4x1xf32>
    %cst_24 = arith.constant 6.400000e+01 : f32
    %29 = vector.broadcast %cst_24 : f32 to vector<4x1xf32>
    %30 = arith.divf %28, %29 : vector<4x1xf32>
    %31 = vector.broadcast %30 : vector<4x1xf32> to vector<4x64xf32>
    %32 = arith.subf %22, %31 : vector<4x64xf32>
    %33 = arith.mulf %32, %32 : vector<4x64xf32>
    %cst_25 = arith.constant dense<0.000000e+00> : vector<4xf32>
    %34 = vector.multi_reduction <add>, %33, %cst_25 [1] : vector<4x64xf32> to vector<4xf32>
    %35 = vector.shape_cast %34 : vector<4xf32> to vector<4x1xf32>
    %cst_26 = arith.constant 6.400000e+01 : f32
    %36 = vector.broadcast %cst_26 : f32 to vector<4x1xf32>
    %37 = arith.divf %35, %36 : vector<4x1xf32>
    %38 = vector.broadcast %30 : vector<4x1xf32> to vector<4x64xf32>
    %39 = arith.subf %22, %38 : vector<4x64xf32>
    %cst_27 = arith.constant 9.99999974E-6 : f32
    %40 = vector.broadcast %cst_27 : f32 to vector<4x1xf32>
    %41 = arith.addf %37, %40 : vector<4x1xf32>
    %42 = math.rsqrt %41 : vector<4x1xf32>
    %43 = vector.broadcast %42 : vector<4x1xf32> to vector<4x64xf32>
    %44 = arith.mulf %39, %43 : vector<4x64xf32>
    %45 = vector.broadcast %24 : vector<1x64xf32> to vector<4x64xf32>
    %46 = arith.mulf %44, %45 : vector<4x64xf32>
    %47 = vector.broadcast %26 : vector<1x64xf32> to vector<4x64xf32>
    %48 = arith.addf %46, %47 : vector<4x64xf32>
    %c0_28 = arith.constant 0 : index
    %c0_29 = arith.constant 0 : index
    %c0_30 = arith.constant 0 : index
    %49 = vector.load %arg9[%c0_28, %c0_29, %c0_30] : memref<2x64x192xf32, #tpu.memory_space<vmem>>, vector<1x64x192xf32>
    %50 = vector.shape_cast %49 : vector<1x64x192xf32> to vector<64x192xf32>
    %cst_31 = arith.constant dense<0.000000e+00> : vector<4x192xf32>
    %51 = tpu.matmul %48, %50, %cst_31 {dimension_numbers = #tpu.dot_dimension_numbers<[1], [0], [0], [1], [0, 0, 1, 1], [], []>} : vector<4x64xf32>, vector<64x192xf32>, vector<4x192xf32> -> vector<4x192xf32>
    %52 = vector.extract_strided_slice %51 {offsets = [0, 0], sizes = [4, 64], strides = [1, 1]} : vector<4x192xf32> to vector<4x64xf32>
    %53 = vector.extract_strided_slice %51 {offsets = [0, 64], sizes = [4, 64], strides = [1, 1]} : vector<4x192xf32> to vector<4x64xf32>
    %54 = vector.extract_strided_slice %51 {offsets = [0, 128], sizes = [4, 64], strides = [1, 1]} : vector<4x192xf32> to vector<4x64xf32>
    %55 = vector.extract_strided_slice %52 {offsets = [0, 0], sizes = [4, 16], strides = [1, 1]} : vector<4x64xf32> to vector<4x16xf32>
    %56 = vector.extract_strided_slice %52 {offsets = [0, 16], sizes = [4, 16], strides = [1, 1]} : vector<4x64xf32> to vector<4x16xf32>
    %57 = vector.extract_strided_slice %52 {offsets = [0, 32], sizes = [4, 16], strides = [1, 1]} : vector<4x64xf32> to vector<4x16xf32>
    %58 = vector.extract_strided_slice %52 {offsets = [0, 48], sizes = [4, 16], strides = [1, 1]} : vector<4x64xf32> to vector<4x16xf32>
    %59 = vector.shape_cast %55 : vector<4x16xf32> to vector<1x4x16xf32>
    %60 = vector.shape_cast %56 : vector<4x16xf32> to vector<1x4x16xf32>
    %61 = vector.shape_cast %57 : vector<4x16xf32> to vector<1x4x16xf32>
    %62 = vector.shape_cast %58 : vector<4x16xf32> to vector<1x4x16xf32>
    %63 = tpu.concatenate %59, %60, %61, %62 in 0 : vector<1x4x16xf32>, vector<1x4x16xf32>, vector<1x4x16xf32>, vector<1x4x16xf32> -> vector<4x4x16xf32>
    %64 = vector.extract_strided_slice %53 {offsets = [0, 0], sizes = [4, 16], strides = [1, 1]} : vector<4x64xf32> to vector<4x16xf32>
    %65 = vector.extract_strided_slice %53 {offsets = [0, 16], sizes = [4, 16], strides = [1, 1]} : vector<4x64xf32> to vector<4x16xf32>
    %66 = vector.extract_strided_slice %53 {offsets = [0, 32], sizes = [4, 16], strides = [1, 1]} : vector<4x64xf32> to vector<4x16xf32>
    %67 = vector.extract_strided_slice %53 {offsets = [0, 48], sizes = [4, 16], strides = [1, 1]} : vector<4x64xf32> to vector<4x16xf32>
    %68 = vector.shape_cast %64 : vector<4x16xf32> to vector<1x4x16xf32>
    %69 = vector.shape_cast %65 : vector<4x16xf32> to vector<1x4x16xf32>
    %70 = vector.shape_cast %66 : vector<4x16xf32> to vector<1x4x16xf32>
    %71 = vector.shape_cast %67 : vector<4x16xf32> to vector<1x4x16xf32>
    %72 = tpu.concatenate %68, %69, %70, %71 in 0 : vector<1x4x16xf32>, vector<1x4x16xf32>, vector<1x4x16xf32>, vector<1x4x16xf32> -> vector<4x4x16xf32>
    %73 = vector.extract_strided_slice %54 {offsets = [0, 0], sizes = [4, 16], strides = [1, 1]} : vector<4x64xf32> to vector<4x16xf32>
    %74 = vector.extract_strided_slice %54 {offsets = [0, 16], sizes = [4, 16], strides = [1, 1]} : vector<4x64xf32> to vector<4x16xf32>
    %75 = vector.extract_strided_slice %54 {offsets = [0, 32], sizes = [4, 16], strides = [1, 1]} : vector<4x64xf32> to vector<4x16xf32>
    %76 = vector.extract_strided_slice %54 {offsets = [0, 48], sizes = [4, 16], strides = [1, 1]} : vector<4x64xf32> to vector<4x16xf32>
    %77 = vector.shape_cast %73 : vector<4x16xf32> to vector<1x4x16xf32>
    %78 = vector.shape_cast %74 : vector<4x16xf32> to vector<1x4x16xf32>
    %79 = vector.shape_cast %75 : vector<4x16xf32> to vector<1x4x16xf32>
    %80 = vector.shape_cast %76 : vector<4x16xf32> to vector<1x4x16xf32>
    %81 = tpu.concatenate %77, %78, %79, %80 in 0 : vector<1x4x16xf32>, vector<1x4x16xf32>, vector<1x4x16xf32>, vector<1x4x16xf32> -> vector<4x4x16xf32>
    "tpu.trace_start"() <{level = 10 : i32, message = "hqd,hkd->hqk"}> : () -> ()
    %cst_32 = arith.constant dense<0.000000e+00> : vector<4x4x4xf32>
    %82 = tpu.matmul %63, %72, %cst_32 {dimension_numbers = #tpu.dot_dimension_numbers<[2], [2], [1], [1], [0, 0, 0, 1, 1, 1], [0], [0]>} : vector<4x4x16xf32>, vector<4x4x16xf32>, vector<4x4x4xf32> -> vector<4x4x4xf32>
    "tpu.trace_stop"() : () -> ()
    %cst_33 = arith.constant 2.500000e-01 : f32
    %83 = vector.broadcast %cst_33 : f32 to vector<4x4x4xf32>
    %84 = arith.mulf %82, %83 : vector<4x4x4xf32>
    %cst_34 = arith.constant dense<0xFF800000> : vector<4x4xf32>
    %85 = vector.multi_reduction <maximumf>, %84, %cst_34 [2] : vector<4x4x4xf32> to vector<4x4xf32>
    %86 = vector.shape_cast %85 : vector<4x4xf32> to vector<4x4x1xf32>
    %87 = vector.broadcast %86 : vector<4x4x1xf32> to vector<4x4x4xf32>
    %88 = arith.subf %84, %87 : vector<4x4x4xf32>
    %89 = math.exp %88 : vector<4x4x4xf32>
    %cst_35 = arith.constant dense<0.000000e+00> : vector<4x4xf32>
    %90 = vector.multi_reduction <add>, %89, %cst_35 [2] : vector<4x4x4xf32> to vector<4x4xf32>
    %91 = vector.shape_cast %90 : vector<4x4xf32> to vector<4x4x1xf32>
    %92 = tpu.reciprocal %91 {approx = true} : vector<4x4x1xf32> -> vector<4x4x1xf32>
    %93 = vector.broadcast %92 : vector<4x4x1xf32> to vector<4x4x4xf32>
    %94 = arith.mulf %89, %93 : vector<4x4x4xf32>
    "tpu.trace_start"() <{level = 10 : i32, message = "hqk,hkd->hqd"}> : () -> ()
    %cst_36 = arith.constant dense<0.000000e+00> : vector<4x4x16xf32>
    %95 = tpu.matmul %94, %81, %cst_36 {dimension_numbers = #tpu.dot_dimension_numbers<[2], [1], [1], [2], [0, 0, 0, 1, 1, 2], [0], [0]>} : vector<4x4x4xf32>, vector<4x4x16xf32>, vector<4x4x16xf32> -> vector<4x4x16xf32>
    "tpu.trace_stop"() : () -> ()
    %96 = vector.extract_strided_slice %95 {offsets = [0, 0, 0], sizes = [1, 4, 16], strides = [1, 1, 1]} : vector<4x4x16xf32> to vector<1x4x16xf32>
    %97 = vector.shape_cast %96 : vector<1x4x16xf32> to vector<4x16xf32>
    %98 = vector.extract_strided_slice %95 {offsets = [1, 0, 0], sizes = [1, 4, 16], strides = [1, 1, 1]} : vector<4x4x16xf32> to vector<1x4x16xf32>
    %99 = vector.shape_cast %98 : vector<1x4x16xf32> to vector<4x16xf32>
    %100 = vector.extract_strided_slice %95 {offsets = [2, 0, 0], sizes = [1, 4, 16], strides = [1, 1, 1]} : vector<4x4x16xf32> to vector<1x4x16xf32>
    %101 = vector.shape_cast %100 : vector<1x4x16xf32> to vector<4x16xf32>
    %102 = vector.extract_strided_slice %95 {offsets = [3, 0, 0], sizes = [1, 4, 16], strides = [1, 1, 1]} : vector<4x4x16xf32> to vector<1x4x16xf32>
    %103 = vector.shape_cast %102 : vector<1x4x16xf32> to vector<4x16xf32>
    %104 = tpu.concatenate %97, %99, %101, %103 in 1 : vector<4x16xf32>, vector<4x16xf32>, vector<4x16xf32>, vector<4x16xf32> -> vector<4x64xf32>
    %c0_37 = arith.constant 0 : index
    %c0_38 = arith.constant 0 : index
    %c0_39 = arith.constant 0 : index
    %105 = vector.load %arg10[%c0_37, %c0_38, %c0_39] : memref<2x64x64xf32, #tpu.memory_space<vmem>>, vector<1x64x64xf32>
    %106 = vector.shape_cast %105 : vector<1x64x64xf32> to vector<64x64xf32>
    %cst_40 = arith.constant dense<0.000000e+00> : vector<4x64xf32>
    %107 = tpu.matmul %104, %106, %cst_40 {dimension_numbers = #tpu.dot_dimension_numbers<[1], [0], [0], [1], [0, 0, 1, 1], [], []>} : vector<4x64xf32>, vector<64x64xf32>, vector<4x64xf32> -> vector<4x64xf32>
    %c0_41 = arith.constant 0 : index
    %c0_42 = arith.constant 0 : index
    %c0_43 = arith.constant 0 : index
    %108 = vector.load %arg11[%c0_41, %c0_42, %c0_43] : memref<2x1x64xf32, #tpu.memory_space<vmem>>, vector<1x1x64xf32>
    %109 = vector.shape_cast %108 : vector<1x1x64xf32> to vector<1x64xf32>
    %110 = vector.broadcast %109 : vector<1x64xf32> to vector<4x64xf32>
    %111 = arith.addf %107, %110 : vector<4x64xf32>
    %112 = arith.addf %22, %111 : vector<4x64xf32>
    %c0_44 = arith.constant 0 : index
    %c0_45 = arith.constant 0 : index
    %c0_46 = arith.constant 0 : index
    %113 = vector.load %arg12[%c0_44, %c0_45, %c0_46] : memref<2x1x64xf32, #tpu.memory_space<vmem>>, vector<1x1x64xf32>
    %114 = vector.shape_cast %113 : vector<1x1x64xf32> to vector<1x64xf32>
    %c0_47 = arith.constant 0 : index
    %c0_48 = arith.constant 0 : index
    %c0_49 = arith.constant 0 : index
    %115 = vector.load %arg13[%c0_47, %c0_48, %c0_49] : memref<2x1x64xf32, #tpu.memory_space<vmem>>, vector<1x1x64xf32>
    %116 = vector.shape_cast %115 : vector<1x1x64xf32> to vector<1x64xf32>
    %cst_50 = arith.constant dense<0.000000e+00> : vector<4xf32>
    %117 = vector.multi_reduction <add>, %112, %cst_50 [1] : vector<4x64xf32> to vector<4xf32>
    %118 = vector.shape_cast %117 : vector<4xf32> to vector<4x1xf32>
    %cst_51 = arith.constant 6.400000e+01 : f32
    %119 = vector.broadcast %cst_51 : f32 to vector<4x1xf32>
    %120 = arith.divf %118, %119 : vector<4x1xf32>
    %121 = vector.broadcast %120 : vector<4x1xf32> to vector<4x64xf32>
    %122 = arith.subf %112, %121 : vector<4x64xf32>
    %123 = arith.mulf %122, %122 : vector<4x64xf32>
    %cst_52 = arith.constant dense<0.000000e+00> : vector<4xf32>
    %124 = vector.multi_reduction <add>, %123, %cst_52 [1] : vector<4x64xf32> to vector<4xf32>
    %125 = vector.shape_cast %124 : vector<4xf32> to vector<4x1xf32>
    %cst_53 = arith.constant 6.400000e+01 : f32
    %126 = vector.broadcast %cst_53 : f32 to vector<4x1xf32>
    %127 = arith.divf %125, %126 : vector<4x1xf32>
    %128 = vector.broadcast %120 : vector<4x1xf32> to vector<4x64xf32>
    %129 = arith.subf %112, %128 : vector<4x64xf32>
    %cst_54 = arith.constant 9.99999974E-6 : f32
    %130 = vector.broadcast %cst_54 : f32 to vector<4x1xf32>
    %131 = arith.addf %127, %130 : vector<4x1xf32>
    %132 = math.rsqrt %131 : vector<4x1xf32>
    %133 = vector.broadcast %132 : vector<4x1xf32> to vector<4x64xf32>
    %134 = arith.mulf %129, %133 : vector<4x64xf32>
    %135 = vector.broadcast %114 : vector<1x64xf32> to vector<4x64xf32>
    %136 = arith.mulf %134, %135 : vector<4x64xf32>
    %137 = vector.broadcast %116 : vector<1x64xf32> to vector<4x64xf32>
    %138 = arith.addf %136, %137 : vector<4x64xf32>
    %c0_55 = arith.constant 0 : index
    %c0_56 = arith.constant 0 : index
    %c0_57 = arith.constant 0 : index
    %139 = vector.load %arg14[%c0_55, %c0_56, %c0_57] : memref<2x64x256xf32, #tpu.memory_space<vmem>>, vector<1x64x256xf32>
    %140 = vector.shape_cast %139 : vector<1x64x256xf32> to vector<64x256xf32>
    %cst_58 = arith.constant dense<0.000000e+00> : vector<4x256xf32>
    %141 = tpu.matmul %138, %140, %cst_58 {dimension_numbers = #tpu.dot_dimension_numbers<[1], [0], [0], [1], [0, 0, 1, 1], [], []>} : vector<4x64xf32>, vector<64x256xf32>, vector<4x256xf32> -> vector<4x256xf32>
    %c0_59 = arith.constant 0 : index
    %c0_60 = arith.constant 0 : index
    %c0_61 = arith.constant 0 : index
    %142 = vector.load %arg15[%c0_59, %c0_60, %c0_61] : memref<2x1x256xf32, #tpu.memory_space<vmem>>, vector<1x1x256xf32>
    %143 = vector.shape_cast %142 : vector<1x1x256xf32> to vector<1x256xf32>
    %144 = vector.broadcast %143 : vector<1x256xf32> to vector<4x256xf32>
    %145 = arith.addf %141, %144 : vector<4x256xf32>
    %cst_62 = arith.constant 5.000000e-01 : f32
    %146 = vector.broadcast %cst_62 : f32 to vector<4x256xf32>
    %147 = arith.mulf %146, %145 : vector<4x256xf32>
    %cst_63 = arith.constant 0.707106769 : f32
    %148 = vector.broadcast %cst_63 : f32 to vector<4x256xf32>
    %149 = arith.mulf %145, %148 : vector<4x256xf32>
    %150 = math.erf %149 : vector<4x256xf32>
    %cst_64 = arith.constant 1.000000e+00 : f32
    %151 = vector.broadcast %cst_64 : f32 to vector<4x256xf32>
    %152 = arith.addf %151, %150 : vector<4x256xf32>
    %153 = arith.mulf %147, %152 : vector<4x256xf32>
    %c0_65 = arith.constant 0 : index
    %c0_66 = arith.constant 0 : index
    %c0_67 = arith.constant 0 : index
    %154 = vector.load %arg16[%c0_65, %c0_66, %c0_67] : memref<2x256x64xf32, #tpu.memory_space<vmem>>, vector<1x256x64xf32>
    %155 = vector.shape_cast %154 : vector<1x256x64xf32> to vector<256x64xf32>
    %cst_68 = arith.constant dense<0.000000e+00> : vector<4x64xf32>
    %156 = tpu.matmul %153, %155, %cst_68 {dimension_numbers = #tpu.dot_dimension_numbers<[1], [0], [0], [1], [0, 0, 1, 1], [], []>} : vector<4x256xf32>, vector<256x64xf32>, vector<4x64xf32> -> vector<4x64xf32>
    %c0_69 = arith.constant 0 : index
    %c0_70 = arith.constant 0 : index
    %c0_71 = arith.constant 0 : index
    %157 = vector.load %arg17[%c0_69, %c0_70, %c0_71] : memref<2x1x64xf32, #tpu.memory_space<vmem>>, vector<1x1x64xf32>
    %158 = vector.shape_cast %157 : vector<1x1x64xf32> to vector<1x64xf32>
    %159 = vector.broadcast %158 : vector<1x64xf32> to vector<4x64xf32>
    %160 = arith.addf %156, %159 : vector<4x64xf32>
    %161 = arith.addf %112, %160 : vector<4x64xf32>
    %162 = arith.addf %161, %19 : vector<4x64xf32>
    %c1 = arith.constant 1 : index
    %c0_72 = arith.constant 0 : index
    %c0_73 = arith.constant 0 : index
    %163 = vector.load %arg7[%c1, %c0_72, %c0_73] : memref<2x1x64xf32, #tpu.memory_space<vmem>>, vector<1x1x64xf32>
    %164 = vector.shape_cast %163 : vector<1x1x64xf32> to vector<1x64xf32>
    %c1_74 = arith.constant 1 : index
    %c0_75 = arith.constant 0 : index
    %c0_76 = arith.constant 0 : index
    %165 = vector.load %arg8[%c1_74, %c0_75, %c0_76] : memref<2x1x64xf32, #tpu.memory_space<vmem>>, vector<1x1x64xf32>
    %166 = vector.shape_cast %165 : vector<1x1x64xf32> to vector<1x64xf32>
    %cst_77 = arith.constant dense<0.000000e+00> : vector<4xf32>
    %167 = vector.multi_reduction <add>, %162, %cst_77 [1] : vector<4x64xf32> to vector<4xf32>
    %168 = vector.shape_cast %167 : vector<4xf32> to vector<4x1xf32>
    %cst_78 = arith.constant 6.400000e+01 : f32
    %169 = vector.broadcast %cst_78 : f32 to vector<4x1xf32>
    %170 = arith.divf %168, %169 : vector<4x1xf32>
    %171 = vector.broadcast %170 : vector<4x1xf32> to vector<4x64xf32>
    %172 = arith.subf %162, %171 : vector<4x64xf32>
    %173 = arith.mulf %172, %172 : vector<4x64xf32>
    %cst_79 = arith.constant dense<0.000000e+00> : vector<4xf32>
    %174 = vector.multi_reduction <add>, %173, %cst_79 [1] : vector<4x64xf32> to vector<4xf32>
    %175 = vector.shape_cast %174 : vector<4xf32> to vector<4x1xf32>
    %cst_80 = arith.constant 6.400000e+01 : f32
    %176 = vector.broadcast %cst_80 : f32 to vector<4x1xf32>
    %177 = arith.divf %175, %176 : vector<4x1xf32>
    %178 = vector.broadcast %170 : vector<4x1xf32> to vector<4x64xf32>
    %179 = arith.subf %162, %178 : vector<4x64xf32>
    %cst_81 = arith.constant 9.99999974E-6 : f32
    %180 = vector.broadcast %cst_81 : f32 to vector<4x1xf32>
    %181 = arith.addf %177, %180 : vector<4x1xf32>
    %182 = math.rsqrt %181 : vector<4x1xf32>
    %183 = vector.broadcast %182 : vector<4x1xf32> to vector<4x64xf32>
    %184 = arith.mulf %179, %183 : vector<4x64xf32>
    %185 = vector.broadcast %164 : vector<1x64xf32> to vector<4x64xf32>
    %186 = arith.mulf %184, %185 : vector<4x64xf32>
    %187 = vector.broadcast %166 : vector<1x64xf32> to vector<4x64xf32>
    %188 = arith.addf %186, %187 : vector<4x64xf32>
    %c1_82 = arith.constant 1 : index
    %c0_83 = arith.constant 0 : index
    %c0_84 = arith.constant 0 : index
    %189 = vector.load %arg9[%c1_82, %c0_83, %c0_84] : memref<2x64x192xf32, #tpu.memory_space<vmem>>, vector<1x64x192xf32>
    %190 = vector.shape_cast %189 : vector<1x64x192xf32> to vector<64x192xf32>
    %cst_85 = arith.constant dense<0.000000e+00> : vector<4x192xf32>
    %191 = tpu.matmul %188, %190, %cst_85 {dimension_numbers = #tpu.dot_dimension_numbers<[1], [0], [0], [1], [0, 0, 1, 1], [], []>} : vector<4x64xf32>, vector<64x192xf32>, vector<4x192xf32> -> vector<4x192xf32>
    %192 = vector.extract_strided_slice %191 {offsets = [0, 0], sizes = [4, 64], strides = [1, 1]} : vector<4x192xf32> to vector<4x64xf32>
    %193 = vector.extract_strided_slice %191 {offsets = [0, 64], sizes = [4, 64], strides = [1, 1]} : vector<4x192xf32> to vector<4x64xf32>
    %194 = vector.extract_strided_slice %191 {offsets = [0, 128], sizes = [4, 64], strides = [1, 1]} : vector<4x192xf32> to vector<4x64xf32>
    %195 = vector.extract_strided_slice %192 {offsets = [0, 0], sizes = [4, 16], strides = [1, 1]} : vector<4x64xf32> to vector<4x16xf32>
    %196 = vector.extract_strided_slice %192 {offsets = [0, 16], sizes = [4, 16], strides = [1, 1]} : vector<4x64xf32> to vector<4x16xf32>
    %197 = vector.extract_strided_slice %192 {offsets = [0, 32], sizes = [4, 16], strides = [1, 1]} : vector<4x64xf32> to vector<4x16xf32>
    %198 = vector.extract_strided_slice %192 {offsets = [0, 48], sizes = [4, 16], strides = [1, 1]} : vector<4x64xf32> to vector<4x16xf32>
    %199 = vector.shape_cast %195 : vector<4x16xf32> to vector<1x4x16xf32>
    %200 = vector.shape_cast %196 : vector<4x16xf32> to vector<1x4x16xf32>
    %201 = vector.shape_cast %197 : vector<4x16xf32> to vector<1x4x16xf32>
    %202 = vector.shape_cast %198 : vector<4x16xf32> to vector<1x4x16xf32>
    %203 = tpu.concatenate %199, %200, %201, %202 in 0 : vector<1x4x16xf32>, vector<1x4x16xf32>, vector<1x4x16xf32>, vector<1x4x16xf32> -> vector<4x4x16xf32>
    %204 = vector.extract_strided_slice %193 {offsets = [0, 0], sizes = [4, 16], strides = [1, 1]} : vector<4x64xf32> to vector<4x16xf32>
    %205 = vector.extract_strided_slice %193 {offsets = [0, 16], sizes = [4, 16], strides = [1, 1]} : vector<4x64xf32> to vector<4x16xf32>
    %206 = vector.extract_strided_slice %193 {offsets = [0, 32], sizes = [4, 16], strides = [1, 1]} : vector<4x64xf32> to vector<4x16xf32>
    %207 = vector.extract_strided_slice %193 {offsets = [0, 48], sizes = [4, 16], strides = [1, 1]} : vector<4x64xf32> to vector<4x16xf32>
    %208 = vector.shape_cast %204 : vector<4x16xf32> to vector<1x4x16xf32>
    %209 = vector.shape_cast %205 : vector<4x16xf32> to vector<1x4x16xf32>
    %210 = vector.shape_cast %206 : vector<4x16xf32> to vector<1x4x16xf32>
    %211 = vector.shape_cast %207 : vector<4x16xf32> to vector<1x4x16xf32>
    %212 = tpu.concatenate %208, %209, %210, %211 in 0 : vector<1x4x16xf32>, vector<1x4x16xf32>, vector<1x4x16xf32>, vector<1x4x16xf32> -> vector<4x4x16xf32>
    %213 = vector.extract_strided_slice %194 {offsets = [0, 0], sizes = [4, 16], strides = [1, 1]} : vector<4x64xf32> to vector<4x16xf32>
    %214 = vector.extract_strided_slice %194 {offsets = [0, 16], sizes = [4, 16], strides = [1, 1]} : vector<4x64xf32> to vector<4x16xf32>
    %215 = vector.extract_strided_slice %194 {offsets = [0, 32], sizes = [4, 16], strides = [1, 1]} : vector<4x64xf32> to vector<4x16xf32>
    %216 = vector.extract_strided_slice %194 {offsets = [0, 48], sizes = [4, 16], strides = [1, 1]} : vector<4x64xf32> to vector<4x16xf32>
    %217 = vector.shape_cast %213 : vector<4x16xf32> to vector<1x4x16xf32>
    %218 = vector.shape_cast %214 : vector<4x16xf32> to vector<1x4x16xf32>
    %219 = vector.shape_cast %215 : vector<4x16xf32> to vector<1x4x16xf32>
    %220 = vector.shape_cast %216 : vector<4x16xf32> to vector<1x4x16xf32>
    %221 = tpu.concatenate %217, %218, %219, %220 in 0 : vector<1x4x16xf32>, vector<1x4x16xf32>, vector<1x4x16xf32>, vector<1x4x16xf32> -> vector<4x4x16xf32>
    "tpu.trace_start"() <{level = 10 : i32, message = "hqd,hkd->hqk"}> : () -> ()
    %cst_86 = arith.constant dense<0.000000e+00> : vector<4x4x4xf32>
    %222 = tpu.matmul %203, %212, %cst_86 {dimension_numbers = #tpu.dot_dimension_numbers<[2], [2], [1], [1], [0, 0, 0, 1, 1, 1], [0], [0]>} : vector<4x4x16xf32>, vector<4x4x16xf32>, vector<4x4x4xf32> -> vector<4x4x4xf32>
    "tpu.trace_stop"() : () -> ()
    %cst_87 = arith.constant 2.500000e-01 : f32
    %223 = vector.broadcast %cst_87 : f32 to vector<4x4x4xf32>
    %224 = arith.mulf %222, %223 : vector<4x4x4xf32>
    %cst_88 = arith.constant dense<0xFF800000> : vector<4x4xf32>
    %225 = vector.multi_reduction <maximumf>, %224, %cst_88 [2] : vector<4x4x4xf32> to vector<4x4xf32>
    %226 = vector.shape_cast %225 : vector<4x4xf32> to vector<4x4x1xf32>
    %227 = vector.broadcast %226 : vector<4x4x1xf32> to vector<4x4x4xf32>
    %228 = arith.subf %224, %227 : vector<4x4x4xf32>
    %229 = math.exp %228 : vector<4x4x4xf32>
    %cst_89 = arith.constant dense<0.000000e+00> : vector<4x4xf32>
    %230 = vector.multi_reduction <add>, %229, %cst_89 [2] : vector<4x4x4xf32> to vector<4x4xf32>
    %231 = vector.shape_cast %230 : vector<4x4xf32> to vector<4x4x1xf32>
    %232 = tpu.reciprocal %231 {approx = true} : vector<4x4x1xf32> -> vector<4x4x1xf32>
    %233 = vector.broadcast %232 : vector<4x4x1xf32> to vector<4x4x4xf32>
    %234 = arith.mulf %229, %233 : vector<4x4x4xf32>
    "tpu.trace_start"() <{level = 10 : i32, message = "hqk,hkd->hqd"}> : () -> ()
    %cst_90 = arith.constant dense<0.000000e+00> : vector<4x4x16xf32>
    %235 = tpu.matmul %234, %221, %cst_90 {dimension_numbers = #tpu.dot_dimension_numbers<[2], [1], [1], [2], [0, 0, 0, 1, 1, 2], [0], [0]>} : vector<4x4x4xf32>, vector<4x4x16xf32>, vector<4x4x16xf32> -> vector<4x4x16xf32>
    "tpu.trace_stop"() : () -> ()
    %236 = vector.extract_strided_slice %235 {offsets = [0, 0, 0], sizes = [1, 4, 16], strides = [1, 1, 1]} : vector<4x4x16xf32> to vector<1x4x16xf32>
    %237 = vector.shape_cast %236 : vector<1x4x16xf32> to vector<4x16xf32>
    %238 = vector.extract_strided_slice %235 {offsets = [1, 0, 0], sizes = [1, 4, 16], strides = [1, 1, 1]} : vector<4x4x16xf32> to vector<1x4x16xf32>
    %239 = vector.shape_cast %238 : vector<1x4x16xf32> to vector<4x16xf32>
    %240 = vector.extract_strided_slice %235 {offsets = [2, 0, 0], sizes = [1, 4, 16], strides = [1, 1, 1]} : vector<4x4x16xf32> to vector<1x4x16xf32>
    %241 = vector.shape_cast %240 : vector<1x4x16xf32> to vector<4x16xf32>
    %242 = vector.extract_strided_slice %235 {offsets = [3, 0, 0], sizes = [1, 4, 16], strides = [1, 1, 1]} : vector<4x4x16xf32> to vector<1x4x16xf32>
    %243 = vector.shape_cast %242 : vector<1x4x16xf32> to vector<4x16xf32>
    %244 = tpu.concatenate %237, %239, %241, %243 in 1 : vector<4x16xf32>, vector<4x16xf32>, vector<4x16xf32>, vector<4x16xf32> -> vector<4x64xf32>
    %c1_91 = arith.constant 1 : index
    %c0_92 = arith.constant 0 : index
    %c0_93 = arith.constant 0 : index
    %245 = vector.load %arg10[%c1_91, %c0_92, %c0_93] : memref<2x64x64xf32, #tpu.memory_space<vmem>>, vector<1x64x64xf32>
    %246 = vector.shape_cast %245 : vector<1x64x64xf32> to vector<64x64xf32>
    %cst_94 = arith.constant dense<0.000000e+00> : vector<4x64xf32>
    %247 = tpu.matmul %244, %246, %cst_94 {dimension_numbers = #tpu.dot_dimension_numbers<[1], [0], [0], [1], [0, 0, 1, 1], [], []>} : vector<4x64xf32>, vector<64x64xf32>, vector<4x64xf32> -> vector<4x64xf32>
    %c1_95 = arith.constant 1 : index
    %c0_96 = arith.constant 0 : index
    %c0_97 = arith.constant 0 : index
    %248 = vector.load %arg11[%c1_95, %c0_96, %c0_97] : memref<2x1x64xf32, #tpu.memory_space<vmem>>, vector<1x1x64xf32>
    %249 = vector.shape_cast %248 : vector<1x1x64xf32> to vector<1x64xf32>
    %250 = vector.broadcast %249 : vector<1x64xf32> to vector<4x64xf32>
    %251 = arith.addf %247, %250 : vector<4x64xf32>
    %252 = arith.addf %162, %251 : vector<4x64xf32>
    %c1_98 = arith.constant 1 : index
    %c0_99 = arith.constant 0 : index
    %c0_100 = arith.constant 0 : index
    %253 = vector.load %arg12[%c1_98, %c0_99, %c0_100] : memref<2x1x64xf32, #tpu.memory_space<vmem>>, vector<1x1x64xf32>
    %254 = vector.shape_cast %253 : vector<1x1x64xf32> to vector<1x64xf32>
    %c1_101 = arith.constant 1 : index
    %c0_102 = arith.constant 0 : index
    %c0_103 = arith.constant 0 : index
    %255 = vector.load %arg13[%c1_101, %c0_102, %c0_103] : memref<2x1x64xf32, #tpu.memory_space<vmem>>, vector<1x1x64xf32>
    %256 = vector.shape_cast %255 : vector<1x1x64xf32> to vector<1x64xf32>
    %cst_104 = arith.constant dense<0.000000e+00> : vector<4xf32>
    %257 = vector.multi_reduction <add>, %252, %cst_104 [1] : vector<4x64xf32> to vector<4xf32>
    %258 = vector.shape_cast %257 : vector<4xf32> to vector<4x1xf32>
    %cst_105 = arith.constant 6.400000e+01 : f32
    %259 = vector.broadcast %cst_105 : f32 to vector<4x1xf32>
    %260 = arith.divf %258, %259 : vector<4x1xf32>
    %261 = vector.broadcast %260 : vector<4x1xf32> to vector<4x64xf32>
    %262 = arith.subf %252, %261 : vector<4x64xf32>
    %263 = arith.mulf %262, %262 : vector<4x64xf32>
    %cst_106 = arith.constant dense<0.000000e+00> : vector<4xf32>
    %264 = vector.multi_reduction <add>, %263, %cst_106 [1] : vector<4x64xf32> to vector<4xf32>
    %265 = vector.shape_cast %264 : vector<4xf32> to vector<4x1xf32>
    %cst_107 = arith.constant 6.400000e+01 : f32
    %266 = vector.broadcast %cst_107 : f32 to vector<4x1xf32>
    %267 = arith.divf %265, %266 : vector<4x1xf32>
    %268 = vector.broadcast %260 : vector<4x1xf32> to vector<4x64xf32>
    %269 = arith.subf %252, %268 : vector<4x64xf32>
    %cst_108 = arith.constant 9.99999974E-6 : f32
    %270 = vector.broadcast %cst_108 : f32 to vector<4x1xf32>
    %271 = arith.addf %267, %270 : vector<4x1xf32>
    %272 = math.rsqrt %271 : vector<4x1xf32>
    %273 = vector.broadcast %272 : vector<4x1xf32> to vector<4x64xf32>
    %274 = arith.mulf %269, %273 : vector<4x64xf32>
    %275 = vector.broadcast %254 : vector<1x64xf32> to vector<4x64xf32>
    %276 = arith.mulf %274, %275 : vector<4x64xf32>
    %277 = vector.broadcast %256 : vector<1x64xf32> to vector<4x64xf32>
    %278 = arith.addf %276, %277 : vector<4x64xf32>
    %c1_109 = arith.constant 1 : index
    %c0_110 = arith.constant 0 : index
    %c0_111 = arith.constant 0 : index
    %279 = vector.load %arg14[%c1_109, %c0_110, %c0_111] : memref<2x64x256xf32, #tpu.memory_space<vmem>>, vector<1x64x256xf32>
    %280 = vector.shape_cast %279 : vector<1x64x256xf32> to vector<64x256xf32>
    %cst_112 = arith.constant dense<0.000000e+00> : vector<4x256xf32>
    %281 = tpu.matmul %278, %280, %cst_112 {dimension_numbers = #tpu.dot_dimension_numbers<[1], [0], [0], [1], [0, 0, 1, 1], [], []>} : vector<4x64xf32>, vector<64x256xf32>, vector<4x256xf32> -> vector<4x256xf32>
    %c1_113 = arith.constant 1 : index
    %c0_114 = arith.constant 0 : index
    %c0_115 = arith.constant 0 : index
    %282 = vector.load %arg15[%c1_113, %c0_114, %c0_115] : memref<2x1x256xf32, #tpu.memory_space<vmem>>, vector<1x1x256xf32>
    %283 = vector.shape_cast %282 : vector<1x1x256xf32> to vector<1x256xf32>
    %284 = vector.broadcast %283 : vector<1x256xf32> to vector<4x256xf32>
    %285 = arith.addf %281, %284 : vector<4x256xf32>
    %cst_116 = arith.constant 5.000000e-01 : f32
    %286 = vector.broadcast %cst_116 : f32 to vector<4x256xf32>
    %287 = arith.mulf %286, %285 : vector<4x256xf32>
    %cst_117 = arith.constant 0.707106769 : f32
    %288 = vector.broadcast %cst_117 : f32 to vector<4x256xf32>
    %289 = arith.mulf %285, %288 : vector<4x256xf32>
    %290 = math.erf %289 : vector<4x256xf32>
    %cst_118 = arith.constant 1.000000e+00 : f32
    %291 = vector.broadcast %cst_118 : f32 to vector<4x256xf32>
    %292 = arith.addf %291, %290 : vector<4x256xf32>
    %293 = arith.mulf %287, %292 : vector<4x256xf32>
    %c1_119 = arith.constant 1 : index
    %c0_120 = arith.constant 0 : index
    %c0_121 = arith.constant 0 : index
    %294 = vector.load %arg16[%c1_119, %c0_120, %c0_121] : memref<2x256x64xf32, #tpu.memory_space<vmem>>, vector<1x256x64xf32>
    %295 = vector.shape_cast %294 : vector<1x256x64xf32> to vector<256x64xf32>
    %cst_122 = arith.constant dense<0.000000e+00> : vector<4x64xf32>
    %296 = tpu.matmul %293, %295, %cst_122 {dimension_numbers = #tpu.dot_dimension_numbers<[1], [0], [0], [1], [0, 0, 1, 1], [], []>} : vector<4x256xf32>, vector<256x64xf32>, vector<4x64xf32> -> vector<4x64xf32>
    %c1_123 = arith.constant 1 : index
    %c0_124 = arith.constant 0 : index
    %c0_125 = arith.constant 0 : index
    %297 = vector.load %arg17[%c1_123, %c0_124, %c0_125] : memref<2x1x64xf32, #tpu.memory_space<vmem>>, vector<1x1x64xf32>
    %298 = vector.shape_cast %297 : vector<1x1x64xf32> to vector<1x64xf32>
    %299 = vector.broadcast %298 : vector<1x64xf32> to vector<4x64xf32>
    %300 = arith.addf %296, %299 : vector<4x64xf32>
    %301 = arith.addf %252, %300 : vector<4x64xf32>
    %c0_126 = arith.constant 0 : index
    %c0_127 = arith.constant 0 : index
    %302 = vector.load %arg18[%c0_126, %c0_127] : memref<1x64xf32, #tpu.memory_space<vmem>>, vector<1x64xf32>
    %c0_128 = arith.constant 0 : index
    %c0_129 = arith.constant 0 : index
    %303 = vector.load %arg19[%c0_128, %c0_129] : memref<1x64xf32, #tpu.memory_space<vmem>>, vector<1x64xf32>
    %cst_130 = arith.constant dense<0.000000e+00> : vector<4xf32>
    %304 = vector.multi_reduction <add>, %301, %cst_130 [1] : vector<4x64xf32> to vector<4xf32>
    %305 = vector.shape_cast %304 : vector<4xf32> to vector<4x1xf32>
    %cst_131 = arith.constant 6.400000e+01 : f32
    %306 = vector.broadcast %cst_131 : f32 to vector<4x1xf32>
    %307 = arith.divf %305, %306 : vector<4x1xf32>
    %308 = vector.broadcast %307 : vector<4x1xf32> to vector<4x64xf32>
    %309 = arith.subf %301, %308 : vector<4x64xf32>
    %310 = arith.mulf %309, %309 : vector<4x64xf32>
    %cst_132 = arith.constant dense<0.000000e+00> : vector<4xf32>
    %311 = vector.multi_reduction <add>, %310, %cst_132 [1] : vector<4x64xf32> to vector<4xf32>
    %312 = vector.shape_cast %311 : vector<4xf32> to vector<4x1xf32>
    %cst_133 = arith.constant 6.400000e+01 : f32
    %313 = vector.broadcast %cst_133 : f32 to vector<4x1xf32>
    %314 = arith.divf %312, %313 : vector<4x1xf32>
    %315 = vector.broadcast %307 : vector<4x1xf32> to vector<4x64xf32>
    %316 = arith.subf %301, %315 : vector<4x64xf32>
    %cst_134 = arith.constant 9.99999974E-6 : f32
    %317 = vector.broadcast %cst_134 : f32 to vector<4x1xf32>
    %318 = arith.addf %314, %317 : vector<4x1xf32>
    %319 = math.rsqrt %318 : vector<4x1xf32>
    %320 = vector.broadcast %319 : vector<4x1xf32> to vector<4x64xf32>
    %321 = arith.mulf %316, %320 : vector<4x64xf32>
    %322 = vector.broadcast %302 : vector<1x64xf32> to vector<4x64xf32>
    %323 = arith.mulf %321, %322 : vector<4x64xf32>
    %324 = vector.broadcast %303 : vector<1x64xf32> to vector<4x64xf32>
    %325 = arith.addf %323, %324 : vector<4x64xf32>
    %326 = vector.shape_cast %325 : vector<4x64xf32> to vector<1x4x64xf32>
    %c0_135 = arith.constant 0 : index
    %c0_136 = arith.constant 0 : index
    %c0_137 = arith.constant 0 : index
    %327 = vector.load %arg20[%c0_135, %c0_136, %c0_137] : memref<1x4x64xf32, #tpu.memory_space<vmem>>, vector<1x4x64xf32>
    tpu.vector_store %arg20[%c0_135, %c0_136, %c0_137], %326 {strides = array<i32>} : memref<1x4x64xf32, #tpu.memory_space<vmem>>, vector<1x4x64xf32>,
    return
  }
  func.func @transform_0(%arg0: i32) -> (i32, i32, i32) {
    %c0_i32 = arith.constant 0 : i32
    %c0_i32_0 = arith.constant 0 : i32
    %c0_i32_1 = arith.constant 0 : i32
    return %arg0, %c0_i32, %c0_i32_0 : i32, i32, i32
  }
  func.func @transform_1(%arg0: i32) -> (i32, i32, i32) {
    %c0_i32 = arith.constant 0 : i32
    %c0_i32_0 = arith.constant 0 : i32
    %c0_i32_1 = arith.constant 0 : i32
    return %arg0, %c0_i32, %c0_i32_0 : i32, i32, i32
  }
  func.func @transform_2(%arg0: i32) -> (i32, i32) {
    %c0_i32 = arith.constant 0 : i32
    %c0_i32_0 = arith.constant 0 : i32
    %c0_i32_1 = arith.constant 0 : i32
    return %c0_i32, %c0_i32_0 : i32, i32
  }
  func.func @transform_3(%arg0: i32) -> (i32, i32) {
    %c0_i32 = arith.constant 0 : i32
    %c0_i32_0 = arith.constant 0 : i32
    %c0_i32_1 = arith.constant 0 : i32
    return %c0_i32, %c0_i32_0 : i32, i32
  }
  func.func @transform_4(%arg0: i32) -> (i32, i32) {
    %c0_i32 = arith.constant 0 : i32
    %c0_i32_0 = arith.constant 0 : i32
    %c0_i32_1 = arith.constant 0 : i32
    return %c0_i32, %c0_i32_0 : i32, i32
  }
  func.func @transform_5(%arg0: i32) -> (i32, i32) {
    %c0_i32 = arith.constant 0 : i32
    %c0_i32_0 = arith.constant 0 : i32
    %c0_i32_1 = arith.constant 0 : i32
    return %c0_i32, %c0_i32_0 : i32, i32
  }
  func.func @transform_6(%arg0: i32) -> (i32, i32, i32) {
    %c0_i32 = arith.constant 0 : i32
    %c0_i32_0 = arith.constant 0 : i32
    %c0_i32_1 = arith.constant 0 : i32
    %c0_i32_2 = arith.constant 0 : i32
    return %c0_i32, %c0_i32_0, %c0_i32_1 : i32, i32, i32
  }
  func.func @transform_7(%arg0: i32) -> (i32, i32, i32) {
    %c0_i32 = arith.constant 0 : i32
    %c0_i32_0 = arith.constant 0 : i32
    %c0_i32_1 = arith.constant 0 : i32
    %c0_i32_2 = arith.constant 0 : i32
    return %c0_i32, %c0_i32_0, %c0_i32_1 : i32, i32, i32
  }
  func.func @transform_8(%arg0: i32) -> (i32, i32, i32) {
    %c0_i32 = arith.constant 0 : i32
    %c0_i32_0 = arith.constant 0 : i32
    %c0_i32_1 = arith.constant 0 : i32
    %c0_i32_2 = arith.constant 0 : i32
    return %c0_i32, %c0_i32_0, %c0_i32_1 : i32, i32, i32
  }
  func.func @transform_9(%arg0: i32) -> (i32, i32, i32) {
    %c0_i32 = arith.constant 0 : i32
    %c0_i32_0 = arith.constant 0 : i32
    %c0_i32_1 = arith.constant 0 : i32
    %c0_i32_2 = arith.constant 0 : i32
    return %c0_i32, %c0_i32_0, %c0_i32_1 : i32, i32, i32
  }
  func.func @transform_10(%arg0: i32) -> (i32, i32, i32) {
    %c0_i32 = arith.constant 0 : i32
    %c0_i32_0 = arith.constant 0 : i32
    %c0_i32_1 = arith.constant 0 : i32
    %c0_i32_2 = arith.constant 0 : i32
    return %c0_i32, %c0_i32_0, %c0_i32_1 : i32, i32, i32
  }
  func.func @transform_11(%arg0: i32) -> (i32, i32, i32) {
    %c0_i32 = arith.constant 0 : i32
    %c0_i32_0 = arith.constant 0 : i32
    %c0_i32_1 = arith.constant 0 : i32
    %c0_i32_2 = arith.constant 0 : i32
    return %c0_i32, %c0_i32_0, %c0_i32_1 : i32, i32, i32
  }
  func.func @transform_12(%arg0: i32) -> (i32, i32, i32) {
    %c0_i32 = arith.constant 0 : i32
    %c0_i32_0 = arith.constant 0 : i32
    %c0_i32_1 = arith.constant 0 : i32
    %c0_i32_2 = arith.constant 0 : i32
    return %c0_i32, %c0_i32_0, %c0_i32_1 : i32, i32, i32
  }
  func.func @transform_13(%arg0: i32) -> (i32, i32, i32) {
    %c0_i32 = arith.constant 0 : i32
    %c0_i32_0 = arith.constant 0 : i32
    %c0_i32_1 = arith.constant 0 : i32
    %c0_i32_2 = arith.constant 0 : i32
    return %c0_i32, %c0_i32_0, %c0_i32_1 : i32, i32, i32
  }
  func.func @transform_14(%arg0: i32) -> (i32, i32, i32) {
    %c0_i32 = arith.constant 0 : i32
    %c0_i32_0 = arith.constant 0 : i32
    %c0_i32_1 = arith.constant 0 : i32
    %c0_i32_2 = arith.constant 0 : i32
    return %c0_i32, %c0_i32_0, %c0_i32_1 : i32, i32, i32
  }
  func.func @transform_15(%arg0: i32) -> (i32, i32, i32) {
    %c0_i32 = arith.constant 0 : i32
    %c0_i32_0 = arith.constant 0 : i32
    %c0_i32_1 = arith.constant 0 : i32
    %c0_i32_2 = arith.constant 0 : i32
    return %c0_i32, %c0_i32_0, %c0_i32_1 : i32, i32, i32
  }
  func.func @transform_16(%arg0: i32) -> (i32, i32, i32) {
    %c0_i32 = arith.constant 0 : i32
    %c0_i32_0 = arith.constant 0 : i32
    %c0_i32_1 = arith.constant 0 : i32
    %c0_i32_2 = arith.constant 0 : i32
    return %c0_i32, %c0_i32_0, %c0_i32_1 : i32, i32, i32
  }
  func.func @transform_17(%arg0: i32) -> (i32, i32) {
    %c0_i32 = arith.constant 0 : i32
    %c0_i32_0 = arith.constant 0 : i32
    %c0_i32_1 = arith.constant 0 : i32
    return %c0_i32, %c0_i32_0 : i32, i32
  }
  func.func @transform_18(%arg0: i32) -> (i32, i32) {
    %c0_i32 = arith.constant 0 : i32
    %c0_i32_0 = arith.constant 0 : i32
    %c0_i32_1 = arith.constant 0 : i32
    return %c0_i32, %c0_i32_0 : i32, i32
  }
  func.func @transform_19(%arg0: i32) -> (i32, i32, i32) {
    %c0_i32 = arith.constant 0 : i32
    %c0_i32_0 = arith.constant 0 : i32
    %c0_i32_1 = arith.constant 0 : i32
    return %arg0, %c0_i32, %c0_i32_0 : i32, i32, i32
  }
}

</mosaic_0001>

<llo_original>
// kernel: forward.2
$region0: #{forward.2}
  #allocation0 [shape = 'u32[]', space=smem, size = 0x4, offset = 0x4, fixed_abs, tag = 'smem constant byte address 0x4 - core index']
  #allocation1 [shape = 'u32[72,128]{1,0:T(1,128)}', space=vmem, size = 0x9000, scoped, tag = 'internal scratch']
  %s0 = inlined_call_operand.vmem [shape: f32[2,128,5], index: 0, kind: input, shape index: {}]
  %s1 = inlined_call_operand.vmem [shape: f32[5,128], index: 1, kind: input, shape index: {}]
  %s2 = inlined_call_operand.vmem [shape: f32[1,128], index: 2, kind: input, shape index: {}]
  %s3 = inlined_call_operand.vmem [shape: f32[1,128], index: 3, kind: input, shape index: {}]
  %s4 = inlined_call_operand.vmem [shape: f32[1,128], index: 4, kind: input, shape index: {}]
  %s5 = inlined_call_operand.vmem [shape: f32[128,256], index: 5, kind: input, shape index: {}]
  %s6 = inlined_call_operand.vmem [shape: f32[1,256], index: 6, kind: input, shape index: {}]
  %s7 = inlined_call_operand.hbm [shape: f32[256,512], index: 7, kind: input, shape index: {}]
  %s8 = inlined_call_operand.hbm [shape: f32[256,512], index: 8, kind: input, shape index: {}]
  %s9 = inlined_call_operand.vmem [shape: f32[1,512], index: 9, kind: input, shape index: {}]
  %s10 = inlined_call_operand.vmem [shape: f32[1,512], index: 10, kind: input, shape index: {}]
  %s11 = inlined_call_operand.vmem [shape: f32[1,512], index: 11, kind: input, shape index: {}]
  %s12 = inlined_call_operand.vmem [shape: f32[512,64], index: 12, kind: input, shape index: {}]
  %s13 = inlined_call_operand.vmem [shape: f32[1,64], index: 13, kind: input, shape index: {}]
  %s14 = inlined_call_operand.vmem [shape: f32[2,8,64], index: 14, kind: output, shape index: {}]
  %s15 = sld [smem:[#allocation0]]
  $region97: #{forward.2} parent=0
    _
  %s17 = ssub.s32 1, %s15
  %s18 = scalar_select 0, %s17, %s15
  $region1: #{forward.2} parent=0
    #allocation2 [shape = 'u8[524288]{0}', space=vmem, size = 0x80000, scoped, tag = 'input window, operand 7, single buffered']
    #allocation3 [shape = 's32[2]{0}', space=sflag, size = 0x8, scoped, tag = 'scoped memory for forward.2']
    #allocation4 [shape = 'u8[524288]{0}', space=vmem, size = 0x80000, scoped, tag = 'input window, operand 8, single buffered']
    #allocation5 [shape = 's32[1]{0}', space=sflag, size = 0x4, scoped, tag = 'scoped memory for forward.2']
    %19 = vsyncpa [#allocation3], 0
    %20 = vsyncpa [#allocation5], 0
    loop: start=0, step=1, limit=4
    $region2: #{forward.2} parent=1 // loop_pre_header
      _
    $region3: #{forward.2} parent=1 // loop_header
      %s22 = sphi 0, %s26
      %p23 = scmp.ge.s32.totalorder %s22, 4
      %s32 = sphi 0, %s34
      %s35 = sphi 0, %s32
      %s36 = sphi 0, %s35
      %s52 = sphi 0, %s36
      %s56 = sphi 0, %s56
      %s58 = sphi 0, %s56
      %s59 = sphi 0, %s58
      %s73 = sphi 0, %s59
      %s77 = sphi 0, %s77
      %s79 = sphi 0, %s77
      %s80 = sphi 0, %s79
      %s94 = sphi 0, %s80
      %s98 = sphi 0, %s98
      %s100 = sphi 0, %s98
      %s101 = sphi 0, %s100
      %s115 = sphi 0, %s101
      %s119 = sphi 0, %s119
      %s121 = sphi 0, %s119
      %s122 = sphi 0, %s121
      %s136 = sphi 0, %s122
      %s140 = sphi 0, %s140
      %s142 = sphi 0, %s140
      %s143 = sphi 0, %s142
      %s157 = sphi 0, %s143
      %s161 = sphi 0, %s161
      %s163 = sphi 0, %s161
      %s164 = sphi 0, %s163
      %s178 = sphi 0, %s164
      %s182 = sphi 0, %s182
      %s184 = sphi 0, %s182
      %s185 = sphi 0, %s184
      %s199 = sphi 0, %s185
      %s203 = sphi 0, %s203
      %s205 = sphi 0, %s203
      %s206 = sphi 0, %s205
      %s220 = sphi 0, %s206
      %s224 = sphi 0, %s224
      %s226 = sphi 0, %s224
      %s227 = sphi 0, %s226
      %s241 = sphi 0, %s227
      %s245 = sphi 0, %s245
      %s247 = sphi 0, %s245
      %s248 = sphi 0, %s247
      %s262 = sphi 0, %s248
      %s266 = sphi 0, %s266
      %s268 = sphi 0, %s266
      %s269 = sphi 0, %s268
      %s283 = sphi 0, %s269
      %s287 = sphi 0, %s287
      %s289 = sphi 0, %s287
      %s290 = sphi 0, %s289
      %s304 = sphi 0, %s290
      %s308 = sphi 0, %s308
      %s310 = sphi 0, %s308
      %s311 = sphi 0, %s310
      %s325 = sphi 0, %s311
      %s331 = sphi 0, %s333
      %s334 = sphi 0, %s331
      %s335 = sphi 0, %s334
      %s351 = sphi 0, %s335
    $region4: #{forward.2} parent=1 // loop_header_branch
      %25 = sbr.rel (%p23) target = $region8
    $region5: #{forward.2} parent=1 // loop_body
      %s27 = ssub.s32 %s22, 1
      %s28 = ssub.s32 %s22, 2
      %s29 = sadd.s32 %s22, 1
      %s30 = ssub.s32 %s22, %s29
      %p31 = scmp.eq.s32.totalorder %s30, 0
      %s33 = sadd.s32 %s32, 1
      %s34 = scalar_select %p31, %s32, %s33
      %p37 = pneg %p31
      %p38 = scmp.eq.s32.totalorder %s22, 1
      %p39 = por %p37, %p38
      %p40 = scmp.ne.s32.totalorder %s32, %s35
      %p41 = scmp.eq.s32.totalorder %s22, 0
      %p42 = por %p40, %p41
      %p43 = scmp.ne.s32.totalorder %s32, %s35
      %p44 = scmp.eq.s32.totalorder %s27, 1
      %p45 = por %p43, %p44
      %p46 = scmp.ne.s32.totalorder %s35, %s36
      %p47 = scmp.eq.s32.totalorder %s27, 0
      %p48 = por %p46, %p47
      %p49 = scmp.ne.s32.totalorder %s35, %s36
      %p50 = scmp.eq.s32.totalorder %s28, 1
      %p51 = por %p49, %p50
      %p53 = scmp.ne.s32.totalorder %s36, %s52
      %p54 = scmp.eq.s32.totalorder %s28, 0
      %p55 = por %p53, %p54
      %s57 = sadd.s32 %s56, 1
      %p60 = scmp.eq.s32.totalorder %s22, 1
      %p61 = scmp.ne.s32.totalorder %s56, %s58
      %p62 = scmp.eq.s32.totalorder %s22, 0
      %p63 = por %p61, %p62
      %p64 = scmp.ne.s32.totalorder %s56, %s58
      %p65 = scmp.eq.s32.totalorder %s27, 1
      %p66 = por %p64, %p65
      %p67 = scmp.ne.s32.totalorder %s58, %s59
      %p68 = scmp.eq.s32.totalorder %s27, 0
      %p69 = por %p67, %p68
      %p70 = scmp.ne.s32.totalorder %s58, %s59
      %p71 = scmp.eq.s32.totalorder %s28, 1
      %p72 = por %p70, %p71
      %p74 = scmp.ne.s32.totalorder %s59, %s73
      %p75 = scmp.eq.s32.totalorder %s28, 0
      %p76 = por %p74, %p75
      %s78 = sadd.s32 %s77, 1
      %p81 = scmp.eq.s32.totalorder %s22, 1
      %p82 = scmp.ne.s32.totalorder %s77, %s79
      %p83 = scmp.eq.s32.totalorder %s22, 0
      %p84 = por %p82, %p83
      %p85 = scmp.ne.s32.totalorder %s77, %s79
      %p86 = scmp.eq.s32.totalorder %s27, 1
      %p87 = por %p85, %p86
      %p88 = scmp.ne.s32.totalorder %s79, %s80
      %p89 = scmp.eq.s32.totalorder %s27, 0
      %p90 = por %p88, %p89
      %p91 = scmp.ne.s32.totalorder %s79, %s80
      %p92 = scmp.eq.s32.totalorder %s28, 1
      %p93 = por %p91, %p92
      %p95 = scmp.ne.s32.totalorder %s80, %s94
      %p96 = scmp.eq.s32.totalorder %s28, 0
      %p97 = por %p95, %p96
      %s99 = sadd.s32 %s98, 1
      %p102 = scmp.eq.s32.totalorder %s22, 1
      %p103 = scmp.ne.s32.totalorder %s98, %s100
      %p104 = scmp.eq.s32.totalorder %s22, 0
      %p105 = por %p103, %p104
      %p106 = scmp.ne.s32.totalorder %s98, %s100
      %p107 = scmp.eq.s32.totalorder %s27, 1
      %p108 = por %p106, %p107
      %p109 = scmp.ne.s32.totalorder %s100, %s101
      %p110 = scmp.eq.s32.totalorder %s27, 0
      %p111 = por %p109, %p110
      %p112 = scmp.ne.s32.totalorder %s100, %s101
      %p113 = scmp.eq.s32.totalorder %s28, 1
      %p114 = por %p112, %p113
      %p116 = scmp.ne.s32.totalorder %s101, %s115
      %p117 = scmp.eq.s32.totalorder %s28, 0
      %p118 = por %p116, %p117
      %s120 = sadd.s32 %s119, 1
      %p123 = scmp.eq.s32.totalorder %s22, 1
      %p124 = scmp.ne.s32.totalorder %s119, %s121
      %p125 = scmp.eq.s32.totalorder %s22, 0
      %p126 = por %p124, %p125
      %p127 = scmp.ne.s32.totalorder %s119, %s121
      %p128 = scmp.eq.s32.totalorder %s27, 1
      %p129 = por %p127, %p128
      %p130 = scmp.ne.s32.totalorder %s121, %s122
      %p131 = scmp.eq.s32.totalorder %s27, 0
      %p132 = por %p130, %p131
      %p133 = scmp.ne.s32.totalorder %s121, %s122
      %p134 = scmp.eq.s32.totalorder %s28, 1
      %p135 = por %p133, %p134
      %p137 = scmp.ne.s32.totalorder %s122, %s136
      %p138 = scmp.eq.s32.totalorder %s28, 0
      %p139 = por %p137, %p138
      %s141 = sadd.s32 %s140, 1
      %p144 = scmp.eq.s32.totalorder %s22, 1
      %p145 = scmp.ne.s32.totalorder %s140, %s142
      %p146 = scmp.eq.s32.totalorder %s22, 0
      %p147 = por %p145, %p146
      %p148 = scmp.ne.s32.totalorder %s140, %s142
      %p149 = scmp.eq.s32.totalorder %s27, 1
      %p150 = por %p148, %p149
      %p151 = scmp.ne.s32.totalorder %s142, %s143
      %p152 = scmp.eq.s32.totalorder %s27, 0
      %p153 = por %p151, %p152
      %p154 = scmp.ne.s32.totalorder %s142, %s143
      %p155 = scmp.eq.s32.totalorder %s28, 1
      %p156 = por %p154, %p155
      %p158 = scmp.ne.s32.totalorder %s143, %s157
      %p159 = scmp.eq.s32.totalorder %s28, 0
      %p160 = por %p158, %p159
      %s162 = sadd.s32 %s161, 1
      %p165 = scmp.eq.s32.totalorder %s22, 1
      %p166 = scmp.ne.s32.totalorder %s161, %s163
      %p167 = scmp.eq.s32.totalorder %s22, 0
      %p168 = por %p166, %p167
      %p169 = scmp.ne.s32.totalorder %s161, %s163
      %p170 = scmp.eq.s32.totalorder %s27, 1
      %p171 = por %p169, %p170
      %p172 = scmp.ne.s32.totalorder %s163, %s164
      %p173 = scmp.eq.s32.totalorder %s27, 0
      %p174 = por %p172, %p173
      %p175 = scmp.ne.s32.totalorder %s163, %s164
      %p176 = scmp.eq.s32.totalorder %s28, 1
      %p177 = por %p175, %p176
      %p179 = scmp.ne.s32.totalorder %s164, %s178
      %p180 = scmp.eq.s32.totalorder %s28, 0
      %p181 = por %p179, %p180
      %s183 = sadd.s32 %s182, 1
      %p186 = scmp.eq.s32.totalorder %s22, 1
      %p187 = scmp.ne.s32.totalorder %s182, %s184
      %p188 = scmp.eq.s32.totalorder %s22, 0
      %p189 = por %p187, %p188
      %p190 = scmp.ne.s32.totalorder %s182, %s184
      %p191 = scmp.eq.s32.totalorder %s27, 1
      %p192 = por %p190, %p191
      %p193 = scmp.ne.s32.totalorder %s184, %s185
      %p194 = scmp.eq.s32.totalorder %s27, 0
      %p195 = por %p193, %p194
      %p196 = scmp.ne.s32.totalorder %s184, %s185
      %p197 = scmp.eq.s32.totalorder %s28, 1
      %p198 = por %p196, %p197
      %p200 = scmp.ne.s32.totalorder %s185, %s199
      %p201 = scmp.eq.s32.totalorder %s28, 0
      %p202 = por %p200, %p201
      %s204 = sadd.s32 %s203, 1
      %p207 = scmp.eq.s32.totalorder %s22, 1
      %p208 = scmp.ne.s32.totalorder %s203, %s205
      %p209 = scmp.eq.s32.totalorder %s22, 0
      %p210 = por %p208, %p209
      %p211 = scmp.ne.s32.totalorder %s203, %s205
      %p212 = scmp.eq.s32.totalorder %s27, 1
      %p213 = por %p211, %p212
      %p214 = scmp.ne.s32.totalorder %s205, %s206
      %p215 = scmp.eq.s32.totalorder %s27, 0
      %p216 = por %p214, %p215
      %p217 = scmp.ne.s32.totalorder %s205, %s206
      %p218 = scmp.eq.s32.totalorder %s28, 1
      %p219 = por %p217, %p218
      %p221 = scmp.ne.s32.totalorder %s206, %s220
      %p222 = scmp.eq.s32.totalorder %s28, 0
      %p223 = por %p221, %p222
      %s225 = sadd.s32 %s224, 1
      %p228 = scmp.eq.s32.totalorder %s22, 1
      %p229 = scmp.ne.s32.totalorder %s224, %s226
      %p230 = scmp.eq.s32.totalorder %s22, 0
      %p231 = por %p229, %p230
      %p232 = scmp.ne.s32.totalorder %s224, %s226
      %p233 = scmp.eq.s32.totalorder %s27, 1
      %p234 = por %p232, %p233
      %p235 = scmp.ne.s32.totalorder %s226, %s227
      %p236 = scmp.eq.s32.totalorder %s27, 0
      %p237 = por %p235, %p236
      %p238 = scmp.ne.s32.totalorder %s226, %s227
      %p239 = scmp.eq.s32.totalorder %s28, 1
      %p240 = por %p238, %p239
      %p242 = scmp.ne.s32.totalorder %s227, %s241
      %p243 = scmp.eq.s32.totalorder %s28, 0
      %p244 = por %p242, %p243
      %s246 = sadd.s32 %s245, 1
      %p249 = scmp.eq.s32.totalorder %s22, 1
      %p250 = scmp.ne.s32.totalorder %s245, %s247
      %p251 = scmp.eq.s32.totalorder %s22, 0
      %p252 = por %p250, %p251
      %p253 = scmp.ne.s32.totalorder %s245, %s247
      %p254 = scmp.eq.s32.totalorder %s27, 1
      %p255 = por %p253, %p254
      %p256 = scmp.ne.s32.totalorder %s247, %s248
      %p257 = scmp.eq.s32.totalorder %s27, 0
      %p258 = por %p256, %p257
      %p259 = scmp.ne.s32.totalorder %s247, %s248
      %p260 = scmp.eq.s32.totalorder %s28, 1
      %p261 = por %p259, %p260
      %p263 = scmp.ne.s32.totalorder %s248, %s262
      %p264 = scmp.eq.s32.totalorder %s28, 0
      %p265 = por %p263, %p264
      %s267 = sadd.s32 %s266, 1
      %p270 = scmp.eq.s32.totalorder %s22, 1
      %p271 = scmp.ne.s32.totalorder %s266, %s268
      %p272 = scmp.eq.s32.totalorder %s22, 0
      %p273 = por %p271, %p272
      %p274 = scmp.ne.s32.totalorder %s266, %s268
      %p275 = scmp.eq.s32.totalorder %s27, 1
      %p276 = por %p274, %p275
      %p277 = scmp.ne.s32.totalorder %s268, %s269
      %p278 = scmp.eq.s32.totalorder %s27, 0
      %p279 = por %p277, %p278
      %p280 = scmp.ne.s32.totalorder %s268, %s269
      %p281 = scmp.eq.s32.totalorder %s28, 1
      %p282 = por %p280, %p281
      %p284 = scmp.ne.s32.totalorder %s269, %s283
      %p285 = scmp.eq.s32.totalorder %s28, 0
      %p286 = por %p284, %p285
      %s288 = sadd.s32 %s287, 1
      %p291 = scmp.eq.s32.totalorder %s22, 1
      %p292 = scmp.ne.s32.totalorder %s287, %s289
      %p293 = scmp.eq.s32.totalorder %s22, 0
      %p294 = por %p292, %p293
      %p295 = scmp.ne.s32.totalorder %s287, %s289
      %p296 = scmp.eq.s32.totalorder %s27, 1
      %p297 = por %p295, %p296
      %p298 = scmp.ne.s32.totalorder %s289, %s290
      %p299 = scmp.eq.s32.totalorder %s27, 0
      %p300 = por %p298, %p299
      %p301 = scmp.ne.s32.totalorder %s289, %s290
      %p302 = scmp.eq.s32.totalorder %s28, 1
      %p303 = por %p301, %p302
      %p305 = scmp.ne.s32.totalorder %s290, %s304
      %p306 = scmp.eq.s32.totalorder %s28, 0
      %p307 = por %p305, %p306
      %s309 = sadd.s32 %s308, 1
      %p312 = scmp.eq.s32.totalorder %s22, 1
      %p313 = scmp.ne.s32.totalorder %s308, %s310
      %p314 = scmp.eq.s32.totalorder %s22, 0
      %p315 = por %p313, %p314
      %p316 = scmp.ne.s32.totalorder %s308, %s310
      %p317 = scmp.eq.s32.totalorder %s27, 1
      %p318 = por %p316, %p317
      %p319 = scmp.ne.s32.totalorder %s310, %s311
      %p320 = scmp.eq.s32.totalorder %s27, 0
      %p321 = por %p319, %p320
      %p322 = scmp.ne.s32.totalorder %s310, %s311
      %p323 = scmp.eq.s32.totalorder %s28, 1
      %p324 = por %p322, %p323
      %p326 = scmp.ne.s32.totalorder %s311, %s325
      %p327 = scmp.eq.s32.totalorder %s28, 0
      %p328 = por %p326, %p327
      %s329 = ssub.s32 %s22, %s29
      %p330 = scmp.eq.s32.totalorder %s329, 0
      %s332 = sadd.s32 %s331, 1
      %s333 = scalar_select %p330, %s331, %s332
      %p336 = pneg %p330
      %p337 = scmp.eq.s32.totalorder %s22, 1
      %p338 = por %p336, %p337
      %p339 = scmp.ne.s32.totalorder %s331, %s334
      %p340 = scmp.eq.s32.totalorder %s22, 0
      %p341 = por %p339, %p340
      %p342 = scmp.ne.s32.totalorder %s331, %s334
      %p343 = scmp.eq.s32.totalorder %s27, 1
      %p344 = por %p342, %p343
      %p345 = scmp.ne.s32.totalorder %s334, %s335
      %p346 = scmp.eq.s32.totalorder %s27, 0
      %p347 = por %p345, %p346
      %p348 = scmp.ne.s32.totalorder %s334, %s335
      %p349 = scmp.eq.s32.totalorder %s28, 1
      %p350 = por %p348, %p349
      %p352 = scmp.ne.s32.totalorder %s335, %s351
      %p353 = scmp.eq.s32.totalorder %s28, 0
      %p354 = por %p352, %p353
      %p355 = scmp.le.s32.totalorder 1, %s22
      %p356 = scmp.lt.s32.totalorder %s22, 3
      %p357 = pnand %p355, %p356
      %p358 = pneg %p357
      // Predicated region
      $region9: #{forward.2} parent=5 // pred_check
        _
      $region10: #{forward.2} parent=5 // pred_check_branch
        %360 = sbr.rel (%p357) target = $region12
      $region11: #{forward.2} parent=5 // pred_region
        %s361 = ssub.s32 %s22, 1
        // Predicated region
        $region13: #{forward.2} parent=11 // pred_check
          %p362 = pneg %p69
        $region14: #{forward.2} parent=11 // pred_check_branch
          %364 = sbr.rel (%p362) target = $region16
        $region15: #{forward.2} parent=11 // pred_region
          _
        $region16: #{forward.2} parent=11 // pred_fallthru
          _
        // Predicated region
        $region17: #{forward.2} parent=11 // pred_check
          %p365 = pneg %p90
        $region18: #{forward.2} parent=11 // pred_check_branch
          %367 = sbr.rel (%p365) target = $region20
        $region19: #{forward.2} parent=11 // pred_region
          _
        $region20: #{forward.2} parent=11 // pred_fallthru
          _
        // Predicated region
        $region21: #{forward.2} parent=11 // pred_check
          %p368 = pneg %p111
        $region22: #{forward.2} parent=11 // pred_check_branch
          %370 = sbr.rel (%p368) target = $region24
        $region23: #{forward.2} parent=11 // pred_region
          _
        $region24: #{forward.2} parent=11 // pred_fallthru
          _
        // Predicated region
        $region25: #{forward.2} parent=11 // pred_check
          %p371 = pneg %p132
        $region26: #{forward.2} parent=11 // pred_check_branch
          %373 = sbr.rel (%p371) target = $region28
        $region27: #{forward.2} parent=11 // pred_region
          _
        $region28: #{forward.2} parent=11 // pred_fallthru
          _
        // Predicated region
        $region29: #{forward.2} parent=11 // pred_check
          %p374 = pneg %p153
        $region30: #{forward.2} parent=11 // pred_check_branch
          %376 = sbr.rel (%p374) target = $region32
        $region31: #{forward.2} parent=11 // pred_region
          _
        $region32: #{forward.2} parent=11 // pred_fallthru
          _
        // Predicated region
        $region33: #{forward.2} parent=11 // pred_check
          %p377 = pneg %p174
        $region34: #{forward.2} parent=11 // pred_check_branch
          %379 = sbr.rel (%p377) target = $region36
        $region35: #{forward.2} parent=11 // pred_region
          _
        $region36: #{forward.2} parent=11 // pred_fallthru
          _
        // Predicated region
        $region37: #{forward.2} parent=11 // pred_check
          %p380 = pneg %p195
        $region38: #{forward.2} parent=11 // pred_check_branch
          %382 = sbr.rel (%p380) target = $region40
        $region39: #{forward.2} parent=11 // pred_region
          %384 = vsyncadd [#allocation3], 0
          %s385 = sshll.u32 %s7, 4
          %s386 = int_to_ptr.hbm [resolvable:$true] %s385
          %s387 = sshll.u32 [#allocation2], 4
          %s388 = int_to_ptr.vmem [resolvable:$true] %s387
          %393 = dma.hbm_to_vmem [thread:$0]  %s386, 16384, %s388, [#allocation3], 512, 512, 32
        $region40: #{forward.2} parent=11 // pred_fallthru
          _
        // Predicated region
        $region41: #{forward.2} parent=11 // pred_check
          %p394 = pneg %p216
        $region42: #{forward.2} parent=11 // pred_check_branch
          %396 = sbr.rel (%p394) target = $region44
        $region43: #{forward.2} parent=11 // pred_region
          %398 = vsyncadd [#allocation5], 0
          %s399 = sshll.u32 %s8, 4
          %s400 = int_to_ptr.hbm [resolvable:$true] %s399
          %s401 = sshll.u32 [#allocation4], 4
          %s402 = int_to_ptr.vmem [resolvable:$true] %s401
          %407 = dma.hbm_to_vmem [thread:$0]  %s400, 16384, %s402, [#allocation5], 512, 512, 32
        $region44: #{forward.2} parent=11 // pred_fallthru
          _
        // Predicated region
        $region45: #{forward.2} parent=11 // pred_check
          %p408 = pneg %p237
        $region46: #{forward.2} parent=11 // pred_check_branch
          %410 = sbr.rel (%p408) target = $region48
        $region47: #{forward.2} parent=11 // pred_region
          _
        $region48: #{forward.2} parent=11 // pred_fallthru
          _
        // Predicated region
        $region49: #{forward.2} parent=11 // pred_check
          %p411 = pneg %p258
        $region50: #{forward.2} parent=11 // pred_check_branch
          %413 = sbr.rel (%p411) target = $region52
        $region51: #{forward.2} parent=11 // pred_region
          _
        $region52: #{forward.2} parent=11 // pred_fallthru
          _
        // Predicated region
        $region53: #{forward.2} parent=11 // pred_check
          %p414 = pneg %p279
        $region54: #{forward.2} parent=11 // pred_check_branch
          %416 = sbr.rel (%p414) target = $region56
        $region55: #{forward.2} parent=11 // pred_region
          _
        $region56: #{forward.2} parent=11 // pred_fallthru
          _
        // Predicated region
        $region57: #{forward.2} parent=11 // pred_check
          %p417 = pneg %p300
        $region58: #{forward.2} parent=11 // pred_check_branch
          %419 = sbr.rel (%p417) target = $region60
        $region59: #{forward.2} parent=11 // pred_region
          _
        $region60: #{forward.2} parent=11 // pred_fallthru
          _
        // Predicated region
        $region61: #{forward.2} parent=11 // pred_check
          %p420 = pneg %p321
        $region62: #{forward.2} parent=11 // pred_check_branch
          %422 = sbr.rel (%p420) target = $region64
        $region63: #{forward.2} parent=11 // pred_region
          _
        $region64: #{forward.2} parent=11 // pred_fallthru
          _
      $region12: #{forward.2} parent=5 // pred_fallthru
        _
      %p423 = scmp.lt.s32.totalorder %s22, 2
      // Predicated region
      $region65: #{forward.2} parent=5 // pred_check
        %p424 = pneg %p423
      $region66: #{forward.2} parent=5 // pred_check_branch
        %426 = sbr.rel (%p424) target = $region68
      $region67: #{forward.2} parent=5 // pred_region
        // Predicated region
        $region69: #{forward.2} parent=67 // pred_check
          %p427 = pneg %p42
        $region70: #{forward.2} parent=67 // pred_check_branch
          %429 = sbr.rel (%p427) target = $region72
        $region71: #{forward.2} parent=67 // pred_region
          %p430 = scmp.lt.s32.totalorder %s22, 1
          %s431 = scalar_select %p430, %s22, 1
          %s432 = smul.addr %s431, 16
          %s433 = smul.addr %s432, 8
          %s434 = scalar_lea.vmem %s0, %s433
        $region72: #{forward.2} parent=67 // pred_fallthru
          _
      $region68: #{forward.2} parent=5 // pred_fallthru
        _
      %p435 = scmp.le.s32.totalorder 1, %s22
      %p436 = scmp.lt.s32.totalorder %s22, 3
      %p437 = pnand %p435, %p436
      %p438 = pneg %p437
      // Predicated region
      $region73: #{forward.2} parent=5 // pred_check
        _
      $region74: #{forward.2} parent=5 // pred_check_branch
        %440 = sbr.rel (%p437) target = $region76
      $region75: #{forward.2} parent=5 // pred_region
        %s441 = ssub.s32 %s22, 1
        // Predicated region
        $region77: #{forward.2} parent=75 // pred_check
          %p442 = pneg %p195
        $region78: #{forward.2} parent=75 // pred_check_branch
          %444 = sbr.rel (%p442) target = $region80
        $region79: #{forward.2} parent=75 // pred_region
          %446 = dma.done [#allocation3], 16384
        $region80: #{forward.2} parent=75 // pred_fallthru
          _
        // Predicated region
        $region81: #{forward.2} parent=75 // pred_check
          %p447 = pneg %p216
        $region82: #{forward.2} parent=75 // pred_check_branch
          %449 = sbr.rel (%p447) target = $region84
        $region83: #{forward.2} parent=75 // pred_region
          %451 = dma.done [#allocation5], 16384
        $region84: #{forward.2} parent=75 // pred_fallthru
          _
        %p452 = scmp.lt.s32.totalorder %s27, 1
        %s453 = scalar_select %p452, %s27, 1
        %s454 = smul.addr %s453, 16
        %s455 = smul.addr %s454, 8
        %s456 = scalar_lea.vmem %s0, %s455
        %p457 = pneg %p48
        %p458 = pneg %p45
        %p459 = pneg %p69
        %p460 = pneg %p66
        %p461 = pneg %p90
        %p462 = pneg %p87
        %p463 = pneg %p111
        %p464 = pneg %p108
        %p465 = pneg %p132
        %p466 = pneg %p129
        %p467 = pneg %p153
        %p468 = pneg %p150
        %p469 = pneg %p174
        %p470 = pneg %p171
        %p471 = pneg %p195
        %p472 = pneg %p192
        %p473 = pneg %p216
        %p474 = pneg %p213
        %p475 = pneg %p237
        %p476 = pneg %p234
        %p477 = pneg %p258
        %p478 = pneg %p255
        %p479 = pneg %p279
        %p480 = pneg %p276
        %p481 = pneg %p300
        %p482 = pneg %p297
        %p483 = pneg %p321
        %p484 = pneg %p318
        %p485 = pneg %p347
        %p486 = pneg %p344
        %p487 = scmp.lt.s32.totalorder %s27, 1
        %s488 = scalar_select %p487, %s27, 1
        %s489 = smul.addr %s488, 8
        %s490 = scalar_lea.vmem %s14, %s489
        %p491 = scmp.lt.s32.totalorder %s27, 1
        %s492 = scalar_select %p491, %s27, 1
        %s493 = smul.addr %s492, 16
        %s494 = smul.addr %s493, 8
        %s495 = scalar_lea.vmem %s0, %s494
        %p496 = scmp.lt.s32.totalorder %s27, 1
        %s497 = scalar_select %p496, %s27, 1
        %s498 = smul.addr %s497, 8
        %s499 = scalar_lea.vmem %s14, %s498
        %v500 = vld [vmem:[%s495] sm:$0xff]
        %v501 = vld [vmem:[%s495 + $0x8] sm:$0xff]
        %v502 = vld [vmem:[%s495 + $0x10] sm:$0xff]
        %v503 = vld [vmem:[%s495 + $0x18] sm:$0xff]
        %v504 = vld [vmem:[%s495 + $0x20] sm:$0xff]
        %v505 = vld [vmem:[%s495 + $0x28] sm:$0xff]
        %v506 = vld [vmem:[%s495 + $0x30] sm:$0xff]
        %v507 = vld [vmem:[%s495 + $0x38] sm:$0xff]
        %v508 = vld [vmem:[%s495 + $0x40] sm:$0xff]
        %v509 = vld [vmem:[%s495 + $0x48] sm:$0xff]
        %v510 = vld [vmem:[%s495 + $0x50] sm:$0xff]
        %v511 = vld [vmem:[%s495 + $0x58] sm:$0xff]
        %v512 = vld [vmem:[%s495 + $0x60] sm:$0xff]
        %v513 = vld [vmem:[%s495 + $0x68] sm:$0xff]
        %v514 = vld [vmem:[%s495 + $0x70] sm:$0xff]
        %v515 = vld [vmem:[%s495 + $0x78] sm:$0xff]
        %v516 = vld [vmem:[%s1] sm:$0x1f]
        %v517 = vld [vmem:[%s2] sm:$0x1]
        %v519 = vperm.slane %v517, 0
        %vm521 = vcmask 39936
        %v523 = vsel %vm521, %v500, 0
        %v526 = vsel %vm521, %v501, 0
        %v529 = vsel %vm521, %v502, 0
        %v532 = vsel %vm521, %v503, 0
        %v535 = vsel %vm521, %v504, 0
        %v538 = vsel %vm521, %v505, 0
        %v541 = vsel %vm521, %v506, 0
        %v544 = vsel %vm521, %v507, 0
        %v547 = vsel %vm521, %v508, 0
        %v550 = vsel %vm521, %v509, 0
        %v553 = vsel %vm521, %v510, 0
        %v556 = vsel %vm521, %v511, 0
        %v559 = vsel %vm521, %v512, 0
        %v562 = vsel %vm521, %v513, 0
        %v565 = vsel %vm521, %v514, 0
        %v568 = vsel %vm521, %v515, 0
        %vm570 = vcmask 1044480
        %v572 = vsel %vm570, %v516, 0
        %574 = vmatpush.msra.mxu0 0.0
        %575 = vmatpush.msra.mxu0 0.0
        %576 = vmatpush.msra.mxu0 0.0
        %577 = vmatpush.msra.mxu0 0.0
        %578 = vmatpush.msra.mxu0 0.0
        %579 = vmatpush.msra.mxu0 0.0
        %580 = vmatpush.msra.mxu0 0.0
        %581 = vmatpush.msra.mxu0 0.0
        %582 = vmatpush.msra.mxu0 0.0
        %583 = vmatpush.msra.mxu0 0.0
        %584 = vmatpush.msra.mxu0 0.0
        %585 = vmatpush.msra.mxu0 0.0
        %586 = vmatpush.msra.mxu0 0.0
        %587 = vmatpush.msra.mxu0 0.0
        %588 = vmatpush.msra.mxu0 0.0
        %589 = vmatpush.msra.mxu0 %v572
        %590 = vmatmul.f32.gmra.mxu0 %v523
        %v591 = vpop.f32.mrf.mxu0
        %v592 = vadd.f32 %v519, %v591
        %593 = vmatmul.f32.gmra.mxu0 %v526
        %v594 = vpop.f32.mrf.mxu0
        %v595 = vadd.f32 %v519, %v594
        %596 = vmatmul.f32.gmra.mxu0 %v529
        %v597 = vpop.f32.mrf.mxu0
        %v598 = vadd.f32 %v519, %v597
        %599 = vmatmul.f32.gmra.mxu0 %v532
        %v600 = vpop.f32.mrf.mxu0
        %v601 = vadd.f32 %v519, %v600
        %602 = vmatmul.f32.gmra.mxu0 %v535
        %v603 = vpop.f32.mrf.mxu0
        %v604 = vadd.f32 %v519, %v603
        %605 = vmatmul.f32.gmra.mxu0 %v538
        %v606 = vpop.f32.mrf.mxu0
        %v607 = vadd.f32 %v519, %v606
        %608 = vmatmul.f32.gmra.mxu0 %v541
        %v609 = vpop.f32.mrf.mxu0
        %v610 = vadd.f32 %v519, %v609
        %611 = vmatmul.f32.gmra.mxu0 %v544
        %v612 = vpop.f32.mrf.mxu0
        %v613 = vadd.f32 %v519, %v612
        %614 = vmatmul.f32.gmra.mxu0 %v547
        %v615 = vpop.f32.mrf.mxu0
        %v616 = vadd.f32 %v519, %v615
        %617 = vmatmul.f32.gmra.mxu0 %v550
        %v618 = vpop.f32.mrf.mxu0
        %v619 = vadd.f32 %v519, %v618
        %620 = vmatmul.f32.gmra.mxu0 %v553
        %v621 = vpop.f32.mrf.mxu0
        %v622 = vadd.f32 %v519, %v621
        %623 = vmatmul.f32.gmra.mxu0 %v556
        %v624 = vpop.f32.mrf.mxu0
        %v625 = vadd.f32 %v519, %v624
        %626 = vmatmul.f32.gmra.mxu0 %v559
        %v627 = vpop.f32.mrf.mxu0
        %v628 = vadd.f32 %v519, %v627
        %629 = vmatmul.f32.gmra.mxu0 %v562
        %v630 = vpop.f32.mrf.mxu0
        %v631 = vadd.f32 %v519, %v630
        %632 = vmatmul.f32.gmra.mxu0 %v565
        %v633 = vpop.f32.mrf.mxu0
        %v634 = vadd.f32 %v519, %v633
        %635 = vmatmul.f32.gmra.mxu0 %v568
        %v636 = vpop.f32.mrf.mxu0
        %v637 = vadd.f32 %v519, %v636
        %638 = vdwg.mxu0
        %v639 = vld [vmem:[%s3] sm:$0x1]
        %v641 = vperm.slane %v639, 0
        %v643 = vmul.f32 %v592, %v641
        %v644 = vmul.f32 %v595, %v641
        %v645 = vmul.f32 %v598, %v641
        %v646 = vmul.f32 %v601, %v641
        %v647 = vmul.f32 %v604, %v641
        %v648 = vmul.f32 %v607, %v641
        %v649 = vmul.f32 %v610, %v641
        %v650 = vmul.f32 %v613, %v641
        %v651 = vmul.f32 %v616, %v641
        %v652 = vmul.f32 %v619, %v641
        %v653 = vmul.f32 %v622, %v641
        %v654 = vmul.f32 %v625, %v641
        %v655 = vmul.f32 %v628, %v641
        %v656 = vmul.f32 %v631, %v641
        %v657 = vmul.f32 %v634, %v641
        %v658 = vmul.f32 %v637, %v641
        %v659 = vld [vmem:[%s4] sm:$0x1]
        %v661 = vperm.slane %v659, 0
        %v663 = vadd.f32 %v643, %v661
        %v664 = vadd.f32 %v644, %v661
        %v665 = vadd.f32 %v645, %v661
        %v666 = vadd.f32 %v646, %v661
        %v667 = vadd.f32 %v647, %v661
        %v668 = vadd.f32 %v648, %v661
        %v669 = vadd.f32 %v649, %v661
        %v670 = vadd.f32 %v650, %v661
        %v671 = vadd.f32 %v651, %v661
        %v672 = vadd.f32 %v652, %v661
        %v673 = vadd.f32 %v653, %v661
        %v674 = vadd.f32 %v654, %v661
        %v675 = vadd.f32 %v655, %v661
        %v676 = vadd.f32 %v656, %v661
        %v677 = vadd.f32 %v657, %v661
        %v678 = vadd.f32 %v658, %v661
        %v679 = vmax.f32 %v663, 0.0
        %v680 = vmax.f32 %v664, 0.0
        %v681 = vmax.f32 %v665, 0.0
        %v682 = vmax.f32 %v666, 0.0
        %v683 = vmax.f32 %v667, 0.0
        %v684 = vmax.f32 %v668, 0.0
        %v685 = vmax.f32 %v669, 0.0
        %v686 = vmax.f32 %v670, 0.0
        %v687 = vmax.f32 %v671, 0.0
        %v688 = vmax.f32 %v672, 0.0
        %v689 = vmax.f32 %v673, 0.0
        %v690 = vmax.f32 %v674, 0.0
        %v691 = vmax.f32 %v675, 0.0
        %v692 = vmax.f32 %v676, 0.0
        %v693 = vmax.f32 %v677, 0.0
        %v694 = vmax.f32 %v678, 0.0
        %v695 = vld [vmem:[%s5] sm:$0xff]
        %v696 = vld [vmem:[%s5 + $0x8] sm:$0xff]
        %v697 = vld [vmem:[%s5 + $0x10] sm:$0xff]
        %v698 = vld [vmem:[%s5 + $0x18] sm:$0xff]
        %v699 = vld [vmem:[%s5 + $0x20] sm:$0xff]
        %v700 = vld [vmem:[%s5 + $0x28] sm:$0xff]
        %v701 = vld [vmem:[%s5 + $0x30] sm:$0xff]
        %v702 = vld [vmem:[%s5 + $0x38] sm:$0xff]
        %v703 = vld [vmem:[%s5 + $0x40] sm:$0xff]
        %v704 = vld [vmem:[%s5 + $0x48] sm:$0xff]
        %v705 = vld [vmem:[%s5 + $0x50] sm:$0xff]
        %v706 = vld [vmem:[%s5 + $0x58] sm:$0xff]
        %v707 = vld [vmem:[%s5 + $0x60] sm:$0xff]
        %v708 = vld [vmem:[%s5 + $0x68] sm:$0xff]
        %v709 = vld [vmem:[%s5 + $0x70] sm:$0xff]
        %v710 = vld [vmem:[%s5 + $0x78] sm:$0xff]
        %v711 = vld [vmem:[%s5 + $0x80] sm:$0xff]
        %v712 = vld [vmem:[%s5 + $0x88] sm:$0xff]
        %v713 = vld [vmem:[%s5 + $0x90] sm:$0xff]
        %v714 = vld [vmem:[%s5 + $0x98] sm:$0xff]
        %v715 = vld [vmem:[%s5 + $0xa0] sm:$0xff]
        %v716 = vld [vmem:[%s5 + $0xa8] sm:$0xff]
        %v717 = vld [vmem:[%s5 + $0xb0] sm:$0xff]
        %v718 = vld [vmem:[%s5 + $0xb8] sm:$0xff]
        %v719 = vld [vmem:[%s5 + $0xc0] sm:$0xff]
        %v720 = vld [vmem:[%s5 + $0xc8] sm:$0xff]
        %v721 = vld [vmem:[%s5 + $0xd0] sm:$0xff]
        %v722 = vld [vmem:[%s5 + $0xd8] sm:$0xff]
        %v723 = vld [vmem:[%s5 + $0xe0] sm:$0xff]
        %v724 = vld [vmem:[%s5 + $0xe8] sm:$0xff]
        %v725 = vld [vmem:[%s5 + $0xf0] sm:$0xff]
        %v726 = vld [vmem:[%s5 + $0xf8] sm:$0xff]
        %v727 = vld [vmem:[%s6] sm:$0x3]
        %v729 = vperm.slane %v727, 0
        %v730 = vperm.slane %v727, 1
        %733 = vmatpush.msra.mxu0 %v725
        %734 = vmatpush.msra.mxu0 %v723
        %735 = vmatpush.msra.mxu0 %v721
        %736 = vmatpush.msra.mxu0 %v719
        %737 = vmatpush.msra.mxu0 %v717
        %738 = vmatpush.msra.mxu0 %v715
        %739 = vmatpush.msra.mxu0 %v713
        %740 = vmatpush.msra.mxu0 %v711
        %741 = vmatpush.msra.mxu0 %v709
        %742 = vmatpush.msra.mxu0 %v707
        %743 = vmatpush.msra.mxu0 %v705
        %744 = vmatpush.msra.mxu0 %v703
        %745 = vmatpush.msra.mxu0 %v701
        %746 = vmatpush.msra.mxu0 %v699
        %747 = vmatpush.msra.mxu0 %v697
        %748 = vmatpush.msra.mxu0 %v695
        %749 = vmatmul.f32.gmra.mxu0 %v679
        %v750 = vpop.f32.mrf.mxu0
        %v751 = vadd.f32 %v729, %v750
        %752 = vmatmul.f32.gmra.mxu0 %v680
        %v753 = vpop.f32.mrf.mxu0
        %v754 = vadd.f32 %v729, %v753
        %755 = vmatmul.f32.gmra.mxu0 %v681
        %v756 = vpop.f32.mrf.mxu0
        %v757 = vadd.f32 %v729, %v756
        %758 = vmatmul.f32.gmra.mxu0 %v682
        %v759 = vpop.f32.mrf.mxu0
        %v760 = vadd.f32 %v729, %v759
        %761 = vmatmul.f32.gmra.mxu0 %v683
        %v762 = vpop.f32.mrf.mxu0
        %v763 = vadd.f32 %v729, %v762
        %764 = vmatmul.f32.gmra.mxu0 %v684
        %v765 = vpop.f32.mrf.mxu0
        %v766 = vadd.f32 %v729, %v765
        %767 = vmatmul.f32.gmra.mxu0 %v685
        %v768 = vpop.f32.mrf.mxu0
        %v769 = vadd.f32 %v729, %v768
        %770 = vmatmul.f32.gmra.mxu0 %v686
        %v771 = vpop.f32.mrf.mxu0
        %v772 = vadd.f32 %v729, %v771
        %773 = vmatmul.f32.gmra.mxu0 %v687
        %v774 = vpop.f32.mrf.mxu0
        %v775 = vadd.f32 %v729, %v774
        %776 = vmatmul.f32.gmra.mxu0 %v688
        %v777 = vpop.f32.mrf.mxu0
        %v778 = vadd.f32 %v729, %v777
        %779 = vmatmul.f32.gmra.mxu0 %v689
        %v780 = vpop.f32.mrf.mxu0
        %v781 = vadd.f32 %v729, %v780
        %782 = vmatmul.f32.gmra.mxu0 %v690
        %v783 = vpop.f32.mrf.mxu0
        %v784 = vadd.f32 %v729, %v783
        %785 = vmatmul.f32.gmra.mxu0 %v691
        %v786 = vpop.f32.mrf.mxu0
        %v787 = vadd.f32 %v729, %v786
        %788 = vmatmul.f32.gmra.mxu0 %v692
        %v789 = vpop.f32.mrf.mxu0
        %v790 = vadd.f32 %v729, %v789
        %791 = vmatmul.f32.gmra.mxu0 %v693
        %v792 = vpop.f32.mrf.mxu0
        %v793 = vadd.f32 %v729, %v792
        %794 = vmatmul.f32.gmra.mxu0 %v694
        %v795 = vpop.f32.mrf.mxu0
        %v796 = vadd.f32 %v729, %v795
        %797 = vdwg.mxu0
        %798 = vmatpush.msra.mxu0 %v726
        %799 = vmatpush.msra.mxu0 %v724
        %800 = vmatpush.msra.mxu0 %v722
        %801 = vmatpush.msra.mxu0 %v720
        %802 = vmatpush.msra.mxu0 %v718
        %803 = vmatpush.msra.mxu0 %v716
        %804 = vmatpush.msra.mxu0 %v714
        %805 = vmatpush.msra.mxu0 %v712
        %806 = vmatpush.msra.mxu0 %v710
        %807 = vmatpush.msra.mxu0 %v708
        %808 = vmatpush.msra.mxu0 %v706
        %809 = vmatpush.msra.mxu0 %v704
        %810 = vmatpush.msra.mxu0 %v702
        %811 = vmatpush.msra.mxu0 %v700
        %812 = vmatpush.msra.mxu0 %v698
        %813 = vmatpush.msra.mxu0 %v696
        %814 = vmatmul.f32.gmra.mxu0 %v679
        %v815 = vpop.f32.mrf.mxu0
        %v816 = vadd.f32 %v730, %v815
        %817 = vmatmul.f32.gmra.mxu0 %v680
        %v818 = vpop.f32.mrf.mxu0
        %v819 = vadd.f32 %v730, %v818
        %820 = vmatmul.f32.gmra.mxu0 %v681
        %v821 = vpop.f32.mrf.mxu0
        %v822 = vadd.f32 %v730, %v821
        %823 = vmatmul.f32.gmra.mxu0 %v682
        %v824 = vpop.f32.mrf.mxu0
        %v825 = vadd.f32 %v730, %v824
        %826 = vmatmul.f32.gmra.mxu0 %v683
        %v827 = vpop.f32.mrf.mxu0
        %v828 = vadd.f32 %v730, %v827
        %829 = vmatmul.f32.gmra.mxu0 %v684
        %v830 = vpop.f32.mrf.mxu0
        %v831 = vadd.f32 %v730, %v830
        %832 = vmatmul.f32.gmra.mxu0 %v685
        %v833 = vpop.f32.mrf.mxu0
        %v834 = vadd.f32 %v730, %v833
        %835 = vmatmul.f32.gmra.mxu0 %v686
        %v836 = vpop.f32.mrf.mxu0
        %v837 = vadd.f32 %v730, %v836
        %838 = vmatmul.f32.gmra.mxu0 %v687
        %v839 = vpop.f32.mrf.mxu0
        %v840 = vadd.f32 %v730, %v839
        %841 = vmatmul.f32.gmra.mxu0 %v688
        %v842 = vpop.f32.mrf.mxu0
        %v843 = vadd.f32 %v730, %v842
        %844 = vmatmul.f32.gmra.mxu0 %v689
        %v845 = vpop.f32.mrf.mxu0
        %v846 = vadd.f32 %v730, %v845
        %847 = vmatmul.f32.gmra.mxu0 %v690
        %v848 = vpop.f32.mrf.mxu0
        %v849 = vadd.f32 %v730, %v848
        %850 = vmatmul.f32.gmra.mxu0 %v691
        %v851 = vpop.f32.mrf.mxu0
        %v852 = vadd.f32 %v730, %v851
        %853 = vmatmul.f32.gmra.mxu0 %v692
        %v854 = vpop.f32.mrf.mxu0
        %v855 = vadd.f32 %v730, %v854
        %856 = vmatmul.f32.gmra.mxu0 %v693
        %v857 = vpop.f32.mrf.mxu0
        %v858 = vadd.f32 %v730, %v857
        %859 = vmatmul.f32.gmra.mxu0 %v694
        %v860 = vpop.f32.mrf.mxu0
        %v861 = vadd.f32 %v730, %v860
        %862 = vdwg.mxu0
        %v863 = vmax.f32 %v751, %v754
        %v864 = vrot.slane %v863, 4
        %v865 = vmax.f32 %v863, %v864
        %v866 = vrot.slane %v865, 2
        %v867 = vmax.f32 %v865, %v866
        %v868 = vrot.slane %v867, 1
        %v869 = vmax.f32 %v867, %v868
        %v870 = vmax.f32 %v816, %v819
        %v871 = vrot.slane %v870, 4
        %v872 = vmax.f32 %v870, %v871
        %v873 = vrot.slane %v872, 2
        %v874 = vmax.f32 %v872, %v873
        %v875 = vrot.slane %v874, 1
        %v876 = vmax.f32 %v874, %v875
        %v877 = vmax.f32 %v757, %v760
        %v878 = vrot.slane %v877, 4
        %v879 = vmax.f32 %v877, %v878
        %v880 = vrot.slane %v879, 2
        %v881 = vmax.f32 %v879, %v880
        %v882 = vrot.slane %v881, 1
        %v883 = vmax.f32 %v881, %v882
        %v884 = vmax.f32 %v822, %v825
        %v885 = vrot.slane %v884, 4
        %v886 = vmax.f32 %v884, %v885
        %v887 = vrot.slane %v886, 2
        %v888 = vmax.f32 %v886, %v887
        %v889 = vrot.slane %v888, 1
        %v890 = vmax.f32 %v888, %v889
        %v891 = vmax.f32 %v763, %v766
        %v892 = vrot.slane %v891, 4
        %v893 = vmax.f32 %v891, %v892
        %v894 = vrot.slane %v893, 2
        %v895 = vmax.f32 %v893, %v894
        %v896 = vrot.slane %v895, 1
        %v897 = vmax.f32 %v895, %v896
        %v898 = vmax.f32 %v828, %v831
        %v899 = vrot.slane %v898, 4
        %v900 = vmax.f32 %v898, %v899
        %v901 = vrot.slane %v900, 2
        %v902 = vmax.f32 %v900, %v901
        %v903 = vrot.slane %v902, 1
        %v904 = vmax.f32 %v902, %v903
        %v905 = vmax.f32 %v769, %v772
        %v906 = vrot.slane %v905, 4
        %v907 = vmax.f32 %v905, %v906
        %v908 = vrot.slane %v907, 2
        %v909 = vmax.f32 %v907, %v908
        %v910 = vrot.slane %v909, 1
        %v911 = vmax.f32 %v909, %v910
        %v912 = vmax.f32 %v834, %v837
        %v913 = vrot.slane %v912, 4
        %v914 = vmax.f32 %v912, %v913
        %v915 = vrot.slane %v914, 2
        %v916 = vmax.f32 %v914, %v915
        %v917 = vrot.slane %v916, 1
        %v918 = vmax.f32 %v916, %v917
        %v919 = vmax.f32 %v775, %v778
        %v920 = vrot.slane %v919, 4
        %v921 = vmax.f32 %v919, %v920
        %v922 = vrot.slane %v921, 2
        %v923 = vmax.f32 %v921, %v922
        %v924 = vrot.slane %v923, 1
        %v925 = vmax.f32 %v923, %v924
        %v926 = vmax.f32 %v840, %v843
        %v927 = vrot.slane %v926, 4
        %v928 = vmax.f32 %v926, %v927
        %v929 = vrot.slane %v928, 2
        %v930 = vmax.f32 %v928, %v929
        %v931 = vrot.slane %v930, 1
        %v932 = vmax.f32 %v930, %v931
        %v933 = vmax.f32 %v781, %v784
        %v934 = vrot.slane %v933, 4
        %v935 = vmax.f32 %v933, %v934
        %v936 = vrot.slane %v935, 2
        %v937 = vmax.f32 %v935, %v936
        %v938 = vrot.slane %v937, 1
        %v939 = vmax.f32 %v937, %v938
        %v940 = vmax.f32 %v846, %v849
        %v941 = vrot.slane %v940, 4
        %v942 = vmax.f32 %v940, %v941
        %v943 = vrot.slane %v942, 2
        %v944 = vmax.f32 %v942, %v943
        %v945 = vrot.slane %v944, 1
        %v946 = vmax.f32 %v944, %v945
        %v947 = vmax.f32 %v787, %v790
        %v948 = vrot.slane %v947, 4
        %v949 = vmax.f32 %v947, %v948
        %v950 = vrot.slane %v949, 2
        %v951 = vmax.f32 %v949, %v950
        %v952 = vrot.slane %v951, 1
        %v953 = vmax.f32 %v951, %v952
        %v954 = vmax.f32 %v852, %v855
        %v955 = vrot.slane %v954, 4
        %v956 = vmax.f32 %v954, %v955
        %v957 = vrot.slane %v956, 2
        %v958 = vmax.f32 %v956, %v957
        %v959 = vrot.slane %v958, 1
        %v960 = vmax.f32 %v958, %v959
        %v961 = vmax.f32 %v793, %v796
        %v962 = vrot.slane %v961, 4
        %v963 = vmax.f32 %v961, %v962
        %v964 = vrot.slane %v963, 2
        %v965 = vmax.f32 %v963, %v964
        %v966 = vrot.slane %v965, 1
        %v967 = vmax.f32 %v965, %v966
        %v968 = vmax.f32 %v858, %v861
        %v969 = vrot.slane %v968, 4
        %v970 = vmax.f32 %v968, %v969
        %v971 = vrot.slane %v970, 2
        %v972 = vmax.f32 %v970, %v971
        %v973 = vrot.slane %v972, 1
        %v974 = vmax.f32 %v972, %v973
        %v975 = vld [vmem:[#allocation2] sm:$0xff]
        %v976 = vld [vmem:[#allocation2 + $0x8] sm:$0xff]
        %v977 = vld [vmem:[#allocation2 + $0x10] sm:$0xff]
        %v978 = vld [vmem:[#allocation2 + $0x18] sm:$0xff]
        %v979 = vld [vmem:[#allocation2 + $0x20] sm:$0xff]
        %v980 = vld [vmem:[#allocation2 + $0x28] sm:$0xff]
        %v981 = vld [vmem:[#allocation2 + $0x30] sm:$0xff]
        %v982 = vld [vmem:[#allocation2 + $0x38] sm:$0xff]
        %v983 = vld [vmem:[#allocation2 + $0x40] sm:$0xff]
        %v984 = vld [vmem:[#allocation2 + $0x48] sm:$0xff]
        %v985 = vld [vmem:[#allocation2 + $0x50] sm:$0xff]
        %v986 = vld [vmem:[#allocation2 + $0x58] sm:$0xff]
        %v987 = vld [vmem:[#allocation2 + $0x60] sm:$0xff]
        %v988 = vld [vmem:[#allocation2 + $0x68] sm:$0xff]
        %v989 = vld [vmem:[#allocation2 + $0x70] sm:$0xff]
        %v990 = vld [vmem:[#allocation2 + $0x78] sm:$0xff]
        %v991 = vld [vmem:[#allocation2 + $0x80] sm:$0xff]
        %v992 = vld [vmem:[#allocation2 + $0x88] sm:$0xff]
        %v993 = vld [vmem:[#allocation2 + $0x90] sm:$0xff]
        %v994 = vld [vmem:[#allocation2 + $0x98] sm:$0xff]
        %v995 = vld [vmem:[#allocation2 + $0xa0] sm:$0xff]
        %v996 = vld [vmem:[#allocation2 + $0xa8] sm:$0xff]
        %v997 = vld [vmem:[#allocation2 + $0xb0] sm:$0xff]
        %v998 = vld [vmem:[#allocation2 + $0xb8] sm:$0xff]
        %v999 = vld [vmem:[#allocation2 + $0xc0] sm:$0xff]
        %v1000 = vld [vmem:[#allocation2 + $0xc8] sm:$0xff]
        %v1001 = vld [vmem:[#allocation2 + $0xd0] sm:$0xff]
        %v1002 = vld [vmem:[#allocation2 + $0xd8] sm:$0xff]
        %v1003 = vld [vmem:[#allocation2 + $0xe0] sm:$0xff]
        %v1004 = vld [vmem:[#allocation2 + $0xe8] sm:$0xff]
        %v1005 = vld [vmem:[#allocation2 + $0xf0] sm:$0xff]
        %v1006 = vld [vmem:[#allocation2 + $0xf8] sm:$0xff]
        %v1007 = vld [vmem:[#allocation2 + $0x100] sm:$0xff]
        %v1008 = vld [vmem:[#allocation2 + $0x108] sm:$0xff]
        %v1009 = vld [vmem:[#allocation2 + $0x110] sm:$0xff]
        %v1010 = vld [vmem:[#allocation2 + $0x118] sm:$0xff]
        %v1011 = vld [vmem:[#allocation2 + $0x120] sm:$0xff]
        %v1012 = vld [vmem:[#allocation2 + $0x128] sm:$0xff]
        %v1013 = vld [vmem:[#allocation2 + $0x130] sm:$0xff]
        %v1014 = vld [vmem:[#allocation2 + $0x138] sm:$0xff]
        %v1015 = vld [vmem:[#allocation2 + $0x140] sm:$0xff]
        %v1016 = vld [vmem:[#allocation2 + $0x148] sm:$0xff]
        %v1017 = vld [vmem:[#allocation2 + $0x150] sm:$0xff]
        %v1018 = vld [vmem:[#allocation2 + $0x158] sm:$0xff]
        %v1019 = vld [vmem:[#allocation2 + $0x160] sm:$0xff]
        %v1020 = vld [vmem:[#allocation2 + $0x168] sm:$0xff]
        %v1021 = vld [vmem:[#allocation2 + $0x170] sm:$0xff]
        %v1022 = vld [vmem:[#allocation2 + $0x178] sm:$0xff]
        %v1023 = vld [vmem:[#allocation2 + $0x180] sm:$0xff]
        %v1024 = vld [vmem:[#allocation2 + $0x188] sm:$0xff]
        %v1025 = vld [vmem:[#allocation2 + $0x190] sm:$0xff]
        %v1026 = vld [vmem:[#allocation2 + $0x198] sm:$0xff]
        %v1027 = vld [vmem:[#allocation2 + $0x1a0] sm:$0xff]
        %v1028 = vld [vmem:[#allocation2 + $0x1a8] sm:$0xff]
        %v1029 = vld [vmem:[#allocation2 + $0x1b0] sm:$0xff]
        %v1030 = vld [vmem:[#allocation2 + $0x1b8] sm:$0xff]
        %v1031 = vld [vmem:[#allocation2 + $0x1c0] sm:$0xff]
        %v1032 = vld [vmem:[#allocation2 + $0x1c8] sm:$0xff]
        %v1033 = vld [vmem:[#allocation2 + $0x1d0] sm:$0xff]
        %v1034 = vld [vmem:[#allocation2 + $0x1d8] sm:$0xff]
        %v1035 = vld [vmem:[#allocation2 + $0x1e0] sm:$0xff]
        %v1036 = vld [vmem:[#allocation2 + $0x1e8] sm:$0xff]
        %v1037 = vld [vmem:[#allocation2 + $0x1f0] sm:$0xff]
        %v1038 = vld [vmem:[#allocation2 + $0x1f8] sm:$0xff]
        %v1039 = vld [vmem:[#allocation2 + $0x200] sm:$0xff]
        %v1040 = vld [vmem:[#allocation2 + $0x208] sm:$0xff]
        %v1041 = vld [vmem:[#allocation2 + $0x210] sm:$0xff]
        %v1042 = vld [vmem:[#allocation2 + $0x218] sm:$0xff]
        %v1043 = vld [vmem:[#allocation2 + $0x220] sm:$0xff]
        %v1044 = vld [vmem:[#allocation2 + $0x228] sm:$0xff]
        %v1045 = vld [vmem:[#allocation2 + $0x230] sm:$0xff]
        %v1046 = vld [vmem:[#allocation2 + $0x238] sm:$0xff]
        %v1047 = vld [vmem:[#allocation2 + $0x240] sm:$0xff]
        %v1048 = vld [vmem:[#allocation2 + $0x248] sm:$0xff]
        %v1049 = vld [vmem:[#allocation2 + $0x250] sm:$0xff]
        %v1050 = vld [vmem:[#allocation2 + $0x258] sm:$0xff]
        %v1051 = vld [vmem:[#allocation2 + $0x260] sm:$0xff]
        %v1052 = vld [vmem:[#allocation2 + $0x268] sm:$0xff]
        %v1053 = vld [vmem:[#allocation2 + $0x270] sm:$0xff]
        %v1054 = vld [vmem:[#allocation2 + $0x278] sm:$0xff]
        %v1055 = vld [vmem:[#allocation2 + $0x280] sm:$0xff]
        %v1056 = vld [vmem:[#allocation2 + $0x288] sm:$0xff]
        %v1057 = vld [vmem:[#allocation2 + $0x290] sm:$0xff]
        %v1058 = vld [vmem:[#allocation2 + $0x298] sm:$0xff]
        %v1059 = vld [vmem:[#allocation2 + $0x2a0] sm:$0xff]
        %v1060 = vld [vmem:[#allocation2 + $0x2a8] sm:$0xff]
        %v1061 = vld [vmem:[#allocation2 + $0x2b0] sm:$0xff]
        %v1062 = vld [vmem:[#allocation2 + $0x2b8] sm:$0xff]
        %v1063 = vld [vmem:[#allocation2 + $0x2c0] sm:$0xff]
        %v1064 = vld [vmem:[#allocation2 + $0x2c8] sm:$0xff]
        %v1065 = vld [vmem:[#allocation2 + $0x2d0] sm:$0xff]
        %v1066 = vld [vmem:[#allocation2 + $0x2d8] sm:$0xff]
        %v1067 = vld [vmem:[#allocation2 + $0x2e0] sm:$0xff]
        %v1068 = vld [vmem:[#allocation2 + $0x2e8] sm:$0xff]
        %v1069 = vld [vmem:[#allocation2 + $0x2f0] sm:$0xff]
        %v1070 = vld [vmem:[#allocation2 + $0x2f8] sm:$0xff]
        %v1071 = vld [vmem:[#allocation2 + $0x300] sm:$0xff]
        %v1072 = vld [vmem:[#allocation2 + $0x308] sm:$0xff]
        %v1073 = vld [vmem:[#allocation2 + $0x310] sm:$0xff]
        %v1074 = vld [vmem:[#allocation2 + $0x318] sm:$0xff]
        %v1075 = vld [vmem:[#allocation2 + $0x320] sm:$0xff]
        %v1076 = vld [vmem:[#allocation2 + $0x328] sm:$0xff]
        %v1077 = vld [vmem:[#allocation2 + $0x330] sm:$0xff]
        %v1078 = vld [vmem:[#allocation2 + $0x338] sm:$0xff]
        %v1079 = vld [vmem:[#allocation2 + $0x340] sm:$0xff]
        %v1080 = vld [vmem:[#allocation2 + $0x348] sm:$0xff]
        %v1081 = vld [vmem:[#allocation2 + $0x350] sm:$0xff]
        %v1082 = vld [vmem:[#allocation2 + $0x358] sm:$0xff]
        %v1083 = vld [vmem:[#allocation2 + $0x360] sm:$0xff]
        %v1084 = vld [vmem:[#allocation2 + $0x368] sm:$0xff]
        %v1085 = vld [vmem:[#allocation2 + $0x370] sm:$0xff]
        %v1086 = vld [vmem:[#allocation2 + $0x378] sm:$0xff]
        %v1087 = vld [vmem:[#allocation2 + $0x380] sm:$0xff]
        %v1088 = vld [vmem:[#allocation2 + $0x388] sm:$0xff]
        %v1089 = vld [vmem:[#allocation2 + $0x390] sm:$0xff]
        %v1090 = vld [vmem:[#allocation2 + $0x398] sm:$0xff]
        %v1091 = vld [vmem:[#allocation2 + $0x3a0] sm:$0xff]
        %v1092 = vld [vmem:[#allocation2 + $0x3a8] sm:$0xff]
        %v1093 = vld [vmem:[#allocation2 + $0x3b0] sm:$0xff]
        %v1094 = vld [vmem:[#allocation2 + $0x3b8] sm:$0xff]
        %v1095 = vld [vmem:[#allocation2 + $0x3c0] sm:$0xff]
        %v1096 = vld [vmem:[#allocation2 + $0x3c8] sm:$0xff]
        %v1097 = vld [vmem:[#allocation2 + $0x3d0] sm:$0xff]
        %v1098 = vld [vmem:[#allocation2 + $0x3d8] sm:$0xff]
        %v1099 = vld [vmem:[#allocation2 + $0x3e0] sm:$0xff]
        %v1100 = vld [vmem:[#allocation2 + $0x3e8] sm:$0xff]
        %v1101 = vld [vmem:[#allocation2 + $0x3f0] sm:$0xff]
        %v1102 = vld [vmem:[#allocation2 + $0x3f8] sm:$0xff]
        %vm1119 = vcmask 1041409
        %v1120 = vsel %vm1119, %v883, %v869
        %vm1121 = vcmask 1042434
        %v1122 = vsel %vm1121, %v897, %v1120
        %vm1123 = vcmask 1043459
        %v1124 = vsel %vm1123, %v911, %v1122
        %vm1125 = vcmask 1044484
        %v1126 = vsel %vm1125, %v925, %v1124
        %vm1127 = vcmask 1045509
        %v1128 = vsel %vm1127, %v939, %v1126
        %vm1129 = vcmask 1046534
        %v1130 = vsel %vm1129, %v953, %v1128
        %vm1131 = vcmask 1047559
        %v1132 = vsel %vm1131, %v967, %v1130
        %v1133 = vsel %vm1119, %v890, %v876
        %v1134 = vsel %vm1121, %v904, %v1133
        %v1135 = vsel %vm1123, %v918, %v1134
        %v1136 = vsel %vm1125, %v932, %v1135
        %v1137 = vsel %vm1127, %v946, %v1136
        %v1138 = vsel %vm1129, %v960, %v1137
        %v1139 = vsel %vm1131, %v974, %v1138
        %1142 = vmatpush.msra.mxu0 %v1035
        %1143 = vmatpush.msra.mxu0 %v1031
        %1144 = vmatpush.msra.mxu0 %v1027
        %1145 = vmatpush.msra.mxu0 %v1023
        %1146 = vmatpush.msra.mxu0 %v1019
        %1147 = vmatpush.msra.mxu0 %v1015
        %1148 = vmatpush.msra.mxu0 %v1011
        %1149 = vmatpush.msra.mxu0 %v1007
        %1150 = vmatpush.msra.mxu0 %v1003
        %1151 = vmatpush.msra.mxu0 %v999
        %1152 = vmatpush.msra.mxu0 %v995
        %1153 = vmatpush.msra.mxu0 %v991
        %1154 = vmatpush.msra.mxu0 %v987
        %1155 = vmatpush.msra.mxu0 %v983
        %1156 = vmatpush.msra.mxu0 %v979
        %1157 = vmatpush.msra.mxu0 %v975
        %1158 = vmatmul.f32.gmra.mxu0 %v1132
        %v1159 = vpop.f32.mrf.mxu0
        %v1160 = vadd.f32 0.0, %v1159
        %1161 = vdwg.mxu0
        %1162 = vmatpush.msra.mxu0 %v1099
        %1163 = vmatpush.msra.mxu0 %v1095
        %1164 = vmatpush.msra.mxu0 %v1091
        %1165 = vmatpush.msra.mxu0 %v1087
        %1166 = vmatpush.msra.mxu0 %v1083
        %1167 = vmatpush.msra.mxu0 %v1079
        %1168 = vmatpush.msra.mxu0 %v1075
        %1169 = vmatpush.msra.mxu0 %v1071
        %1170 = vmatpush.msra.mxu0 %v1067
        %1171 = vmatpush.msra.mxu0 %v1063
        %1172 = vmatpush.msra.mxu0 %v1059
        %1173 = vmatpush.msra.mxu0 %v1055
        %1174 = vmatpush.msra.mxu0 %v1051
        %1175 = vmatpush.msra.mxu0 %v1047
        %1176 = vmatpush.msra.mxu0 %v1043
        %1177 = vmatpush.msra.mxu0 %v1039
        %1178 = vmatmul.f32.gmra.mxu0 %v1139
        %v1179 = vpop.f32.mrf.mxu0
        %v1180 = vadd.f32 %v1160, %v1179
        %1181 = vdwg.mxu0
        %1182 = vmatpush.msra.mxu0 %v1036
        %1183 = vmatpush.msra.mxu0 %v1032
        %1184 = vmatpush.msra.mxu0 %v1028
        %1185 = vmatpush.msra.mxu0 %v1024
        %1186 = vmatpush.msra.mxu0 %v1020
        %1187 = vmatpush.msra.mxu0 %v1016
        %1188 = vmatpush.msra.mxu0 %v1012
        %1189 = vmatpush.msra.mxu0 %v1008
        %1190 = vmatpush.msra.mxu0 %v1004
        %1191 = vmatpush.msra.mxu0 %v1000
        %1192 = vmatpush.msra.mxu0 %v996
        %1193 = vmatpush.msra.mxu0 %v992
        %1194 = vmatpush.msra.mxu0 %v988
        %1195 = vmatpush.msra.mxu0 %v984
        %1196 = vmatpush.msra.mxu0 %v980
        %1197 = vmatpush.msra.mxu0 %v976
        %1198 = vmatmul.f32.gmra.mxu0 %v1132
        %v1199 = vpop.f32.mrf.mxu0
        %v1200 = vadd.f32 0.0, %v1199
        %1201 = vdwg.mxu0
        %1202 = vmatpush.msra.mxu0 %v1100
        %1203 = vmatpush.msra.mxu0 %v1096
        %1204 = vmatpush.msra.mxu0 %v1092
        %1205 = vmatpush.msra.mxu0 %v1088
        %1206 = vmatpush.msra.mxu0 %v1084
        %1207 = vmatpush.msra.mxu0 %v1080
        %1208 = vmatpush.msra.mxu0 %v1076
        %1209 = vmatpush.msra.mxu0 %v1072
        %1210 = vmatpush.msra.mxu0 %v1068
        %1211 = vmatpush.msra.mxu0 %v1064
        %1212 = vmatpush.msra.mxu0 %v1060
        %1213 = vmatpush.msra.mxu0 %v1056
        %1214 = vmatpush.msra.mxu0 %v1052
        %1215 = vmatpush.msra.mxu0 %v1048
        %1216 = vmatpush.msra.mxu0 %v1044
        %1217 = vmatpush.msra.mxu0 %v1040
        %1218 = vmatmul.f32.gmra.mxu0 %v1139
        %v1219 = vpop.f32.mrf.mxu0
        %v1220 = vadd.f32 %v1200, %v1219
        %1221 = vdwg.mxu0
        %1222 = vmatpush.msra.mxu0 %v1037
        %1223 = vmatpush.msra.mxu0 %v1033
        %1224 = vmatpush.msra.mxu0 %v1029
        %1225 = vmatpush.msra.mxu0 %v1025
        %1226 = vmatpush.msra.mxu0 %v1021
        %1227 = vmatpush.msra.mxu0 %v1017
        %1228 = vmatpush.msra.mxu0 %v1013
        %1229 = vmatpush.msra.mxu0 %v1009
        %1230 = vmatpush.msra.mxu0 %v1005
        %1231 = vmatpush.msra.mxu0 %v1001
        %1232 = vmatpush.msra.mxu0 %v997
        %1233 = vmatpush.msra.mxu0 %v993
        %1234 = vmatpush.msra.mxu0 %v989
        %1235 = vmatpush.msra.mxu0 %v985
        %1236 = vmatpush.msra.mxu0 %v981
        %1237 = vmatpush.msra.mxu0 %v977
        %1238 = vmatmul.f32.gmra.mxu0 %v1132
        %v1239 = vpop.f32.mrf.mxu0
        %v1240 = vadd.f32 0.0, %v1239
        %1241 = vdwg.mxu0
        %1242 = vmatpush.msra.mxu0 %v1101
        %1243 = vmatpush.msra.mxu0 %v1097
        %1244 = vmatpush.msra.mxu0 %v1093
        %1245 = vmatpush.msra.mxu0 %v1089
        %1246 = vmatpush.msra.mxu0 %v1085
        %1247 = vmatpush.msra.mxu0 %v1081
        %1248 = vmatpush.msra.mxu0 %v1077
        %1249 = vmatpush.msra.mxu0 %v1073
        %1250 = vmatpush.msra.mxu0 %v1069
        %1251 = vmatpush.msra.mxu0 %v1065
        %1252 = vmatpush.msra.mxu0 %v1061
        %1253 = vmatpush.msra.mxu0 %v1057
        %1254 = vmatpush.msra.mxu0 %v1053
        %1255 = vmatpush.msra.mxu0 %v1049
        %1256 = vmatpush.msra.mxu0 %v1045
        %1257 = vmatpush.msra.mxu0 %v1041
        %1258 = vmatmul.f32.gmra.mxu0 %v1139
        %v1259 = vpop.f32.mrf.mxu0
        %v1260 = vadd.f32 %v1240, %v1259
        %1261 = vdwg.mxu0
        %1262 = vmatpush.msra.mxu0 %v1038
        %1263 = vmatpush.msra.mxu0 %v1034
        %1264 = vmatpush.msra.mxu0 %v1030
        %1265 = vmatpush.msra.mxu0 %v1026
        %1266 = vmatpush.msra.mxu0 %v1022
        %1267 = vmatpush.msra.mxu0 %v1018
        %1268 = vmatpush.msra.mxu0 %v1014
        %1269 = vmatpush.msra.mxu0 %v1010
        %1270 = vmatpush.msra.mxu0 %v1006
        %1271 = vmatpush.msra.mxu0 %v1002
        %1272 = vmatpush.msra.mxu0 %v998
        %1273 = vmatpush.msra.mxu0 %v994
        %1274 = vmatpush.msra.mxu0 %v990
        %1275 = vmatpush.msra.mxu0 %v986
        %1276 = vmatpush.msra.mxu0 %v982
        %1277 = vmatpush.msra.mxu0 %v978
        %1278 = vmatmul.f32.gmra.mxu0 %v1132
        %v1279 = vpop.f32.mrf.mxu0
        %v1280 = vadd.f32 0.0, %v1279
        %1281 = vdwg.mxu0
        %1282 = vmatpush.msra.mxu0 %v1102
        %1283 = vmatpush.msra.mxu0 %v1098
        %1284 = vmatpush.msra.mxu0 %v1094
        %1285 = vmatpush.msra.mxu0 %v1090
        %1286 = vmatpush.msra.mxu0 %v1086
        %1287 = vmatpush.msra.mxu0 %v1082
        %1288 = vmatpush.msra.mxu0 %v1078
        %1289 = vmatpush.msra.mxu0 %v1074
        %1290 = vmatpush.msra.mxu0 %v1070
        %1291 = vmatpush.msra.mxu0 %v1066
        %1292 = vmatpush.msra.mxu0 %v1062
        %1293 = vmatpush.msra.mxu0 %v1058
        %1294 = vmatpush.msra.mxu0 %v1054
        %1295 = vmatpush.msra.mxu0 %v1050
        %1296 = vmatpush.msra.mxu0 %v1046
        %1297 = vmatpush.msra.mxu0 %v1042
        %1298 = vmatmul.f32.gmra.mxu0 %v1139
        %v1299 = vpop.f32.mrf.mxu0
        %v1300 = vadd.f32 %v1280, %v1299
        %1301 = vdwg.mxu0
        %v1302 = vld [vmem:[#allocation4] sm:$0xff]
        %v1303 = vld [vmem:[#allocation4 + $0x8] sm:$0xff]
        %v1304 = vld [vmem:[#allocation4 + $0x10] sm:$0xff]
        %v1305 = vld [vmem:[#allocation4 + $0x18] sm:$0xff]
        %v1306 = vld [vmem:[#allocation4 + $0x20] sm:$0xff]
        %v1307 = vld [vmem:[#allocation4 + $0x28] sm:$0xff]
        %v1308 = vld [vmem:[#allocation4 + $0x30] sm:$0xff]
        %v1309 = vld [vmem:[#allocation4 + $0x38] sm:$0xff]
        %v1310 = vld [vmem:[#allocation4 + $0x40] sm:$0xff]
        %v1311 = vld [vmem:[#allocation4 + $0x48] sm:$0xff]
        %v1312 = vld [vmem:[#allocation4 + $0x50] sm:$0xff]
        %v1313 = vld [vmem:[#allocation4 + $0x58] sm:$0xff]
        %v1314 = vld [vmem:[#allocation4 + $0x60] sm:$0xff]
        %v1315 = vld [vmem:[#allocation4 + $0x68] sm:$0xff]
        %v1316 = vld [vmem:[#allocation4 + $0x70] sm:$0xff]
        %v1317 = vld [vmem:[#allocation4 + $0x78] sm:$0xff]
        %v1318 = vld [vmem:[#allocation4 + $0x80] sm:$0xff]
        %v1319 = vld [vmem:[#allocation4 + $0x88] sm:$0xff]
        %v1320 = vld [vmem:[#allocation4 + $0x90] sm:$0xff]
        %v1321 = vld [vmem:[#allocation4 + $0x98] sm:$0xff]
        %v1322 = vld [vmem:[#allocation4 + $0xa0] sm:$0xff]
        %v1323 = vld [vmem:[#allocation4 + $0xa8] sm:$0xff]
        %v1324 = vld [vmem:[#allocation4 + $0xb0] sm:$0xff]
        %v1325 = vld [vmem:[#allocation4 + $0xb8] sm:$0xff]
        %v1326 = vld [vmem:[#allocation4 + $0xc0] sm:$0xff]
        %v1327 = vld [vmem:[#allocation4 + $0xc8] sm:$0xff]
        %v1328 = vld [vmem:[#allocation4 + $0xd0] sm:$0xff]
        %v1329 = vld [vmem:[#allocation4 + $0xd8] sm:$0xff]
        %v1330 = vld [vmem:[#allocation4 + $0xe0] sm:$0xff]
        %v1331 = vld [vmem:[#allocation4 + $0xe8] sm:$0xff]
        %v1332 = vld [vmem:[#allocation4 + $0xf0] sm:$0xff]
        %v1333 = vld [vmem:[#allocation4 + $0xf8] sm:$0xff]
        %v1334 = vld [vmem:[#allocation4 + $0x100] sm:$0xff]
        %v1335 = vld [vmem:[#allocation4 + $0x108] sm:$0xff]
        %v1336 = vld [vmem:[#allocation4 + $0x110] sm:$0xff]
        %v1337 = vld [vmem:[#allocation4 + $0x118] sm:$0xff]
        %v1338 = vld [vmem:[#allocation4 + $0x120] sm:$0xff]
        %v1339 = vld [vmem:[#allocation4 + $0x128] sm:$0xff]
        %v1340 = vld [vmem:[#allocation4 + $0x130] sm:$0xff]
        %v1341 = vld [vmem:[#allocation4 + $0x138] sm:$0xff]
        %v1342 = vld [vmem:[#allocation4 + $0x140] sm:$0xff]
        %v1343 = vld [vmem:[#allocation4 + $0x148] sm:$0xff]
        %v1344 = vld [vmem:[#allocation4 + $0x150] sm:$0xff]
        %v1345 = vld [vmem:[#allocation4 + $0x158] sm:$0xff]
        %v1346 = vld [vmem:[#allocation4 + $0x160] sm:$0xff]
        %v1347 = vld [vmem:[#allocation4 + $0x168] sm:$0xff]
        %v1348 = vld [vmem:[#allocation4 + $0x170] sm:$0xff]
        %v1349 = vld [vmem:[#allocation4 + $0x178] sm:$0xff]
        %v1350 = vld [vmem:[#allocation4 + $0x180] sm:$0xff]
        %v1351 = vld [vmem:[#allocation4 + $0x188] sm:$0xff]
        %v1352 = vld [vmem:[#allocation4 + $0x190] sm:$0xff]
        %v1353 = vld [vmem:[#allocation4 + $0x198] sm:$0xff]
        %v1354 = vld [vmem:[#allocation4 + $0x1a0] sm:$0xff]
        %v1355 = vld [vmem:[#allocation4 + $0x1a8] sm:$0xff]
        %v1356 = vld [vmem:[#allocation4 + $0x1b0] sm:$0xff]
        %v1357 = vld [vmem:[#allocation4 + $0x1b8] sm:$0xff]
        %v1358 = vld [vmem:[#allocation4 + $0x1c0] sm:$0xff]
        %v1359 = vld [vmem:[#allocation4 + $0x1c8] sm:$0xff]
        %v1360 = vld [vmem:[#allocation4 + $0x1d0] sm:$0xff]
        %v1361 = vld [vmem:[#allocation4 + $0x1d8] sm:$0xff]
        %v1362 = vld [vmem:[#allocation4 + $0x1e0] sm:$0xff]
        %v1363 = vld [vmem:[#allocation4 + $0x1e8] sm:$0xff]
        %v1364 = vld [vmem:[#allocation4 + $0x1f0] sm:$0xff]
        %v1365 = vld [vmem:[#allocation4 + $0x1f8] sm:$0xff]
        %v1366 = vld [vmem:[#allocation4 + $0x200] sm:$0xff]
        %v1367 = vld [vmem:[#allocation4 + $0x208] sm:$0xff]
        %v1368 = vld [vmem:[#allocation4 + $0x210] sm:$0xff]
        %v1369 = vld [vmem:[#allocation4 + $0x218] sm:$0xff]
        %v1370 = vld [vmem:[#allocation4 + $0x220] sm:$0xff]
        %v1371 = vld [vmem:[#allocation4 + $0x228] sm:$0xff]
        %v1372 = vld [vmem:[#allocation4 + $0x230] sm:$0xff]
        %v1373 = vld [vmem:[#allocation4 + $0x238] sm:$0xff]
        %v1374 = vld [vmem:[#allocation4 + $0x240] sm:$0xff]
        %v1375 = vld [vmem:[#allocation4 + $0x248] sm:$0xff]
        %v1376 = vld [vmem:[#allocation4 + $0x250] sm:$0xff]
        %v1377 = vld [vmem:[#allocation4 + $0x258] sm:$0xff]
        %v1378 = vld [vmem:[#allocation4 + $0x260] sm:$0xff]
        %v1379 = vld [vmem:[#allocation4 + $0x268] sm:$0xff]
        %v1380 = vld [vmem:[#allocation4 + $0x270] sm:$0xff]
        %v1381 = vld [vmem:[#allocation4 + $0x278] sm:$0xff]
        %v1382 = vld [vmem:[#allocation4 + $0x280] sm:$0xff]
        %v1383 = vld [vmem:[#allocation4 + $0x288] sm:$0xff]
        %v1384 = vld [vmem:[#allocation4 + $0x290] sm:$0xff]
        %v1385 = vld [vmem:[#allocation4 + $0x298] sm:$0xff]
        %v1386 = vld [vmem:[#allocation4 + $0x2a0] sm:$0xff]
        %v1387 = vld [vmem:[#allocation4 + $0x2a8] sm:$0xff]
        %v1388 = vld [vmem:[#allocation4 + $0x2b0] sm:$0xff]
        %v1389 = vld [vmem:[#allocation4 + $0x2b8] sm:$0xff]
        %v1390 = vld [vmem:[#allocation4 + $0x2c0] sm:$0xff]
        %v1391 = vld [vmem:[#allocation4 + $0x2c8] sm:$0xff]
        %v1392 = vld [vmem:[#allocation4 + $0x2d0] sm:$0xff]
        %v1393 = vld [vmem:[#allocation4 + $0x2d8] sm:$0xff]
        %v1394 = vld [vmem:[#allocation4 + $0x2e0] sm:$0xff]
        %v1395 = vld [vmem:[#allocation4 + $0x2e8] sm:$0xff]
        %v1396 = vld [vmem:[#allocation4 + $0x2f0] sm:$0xff]
        %v1397 = vld [vmem:[#allocation4 + $0x2f8] sm:$0xff]
        %v1398 = vld [vmem:[#allocation4 + $0x300] sm:$0xff]
        %v1399 = vld [vmem:[#allocation4 + $0x308] sm:$0xff]
        %v1400 = vld [vmem:[#allocation4 + $0x310] sm:$0xff]
        %v1401 = vld [vmem:[#allocation4 + $0x318] sm:$0xff]
        %v1402 = vld [vmem:[#allocation4 + $0x320] sm:$0xff]
        %v1403 = vld [vmem:[#allocation4 + $0x328] sm:$0xff]
        %v1404 = vld [vmem:[#allocation4 + $0x330] sm:$0xff]
        %v1405 = vld [vmem:[#allocation4 + $0x338] sm:$0xff]
        %v1406 = vld [vmem:[#allocation4 + $0x340] sm:$0xff]
        %v1407 = vld [vmem:[#allocation4 + $0x348] sm:$0xff]
        %v1408 = vld [vmem:[#allocation4 + $0x350] sm:$0xff]
        %v1409 = vld [vmem:[#allocation4 + $0x358] sm:$0xff]
        %v1410 = vld [vmem:[#allocation4 + $0x360] sm:$0xff]
        %v1411 = vld [vmem:[#allocation4 + $0x368] sm:$0xff]
        %v1412 = vld [vmem:[#allocation4 + $0x370] sm:$0xff]
        %v1413 = vld [vmem:[#allocation4 + $0x378] sm:$0xff]
        %v1414 = vld [vmem:[#allocation4 + $0x380] sm:$0xff]
        %v1415 = vld [vmem:[#allocation4 + $0x388] sm:$0xff]
        %v1416 = vld [vmem:[#allocation4 + $0x390] sm:$0xff]
        %v1417 = vld [vmem:[#allocation4 + $0x398] sm:$0xff]
        %v1418 = vld [vmem:[#allocation4 + $0x3a0] sm:$0xff]
        %v1419 = vld [vmem:[#allocation4 + $0x3a8] sm:$0xff]
        %v1420 = vld [vmem:[#allocation4 + $0x3b0] sm:$0xff]
        %v1421 = vld [vmem:[#allocation4 + $0x3b8] sm:$0xff]
        %v1422 = vld [vmem:[#allocation4 + $0x3c0] sm:$0xff]
        %v1423 = vld [vmem:[#allocation4 + $0x3c8] sm:$0xff]
        %v1424 = vld [vmem:[#allocation4 + $0x3d0] sm:$0xff]
        %v1425 = vld [vmem:[#allocation4 + $0x3d8] sm:$0xff]
        %v1426 = vld [vmem:[#allocation4 + $0x3e0] sm:$0xff]
        %v1427 = vld [vmem:[#allocation4 + $0x3e8] sm:$0xff]
        %v1428 = vld [vmem:[#allocation4 + $0x3f0] sm:$0xff]
        %v1429 = vld [vmem:[#allocation4 + $0x3f8] sm:$0xff]
        %1430 = vmatpush.msra.mxu0 %v1362
        %1431 = vmatpush.msra.mxu0 %v1358
        %1432 = vmatpush.msra.mxu0 %v1354
        %1433 = vmatpush.msra.mxu0 %v1350
        %1434 = vmatpush.msra.mxu0 %v1346
        %1435 = vmatpush.msra.mxu0 %v1342
        %1436 = vmatpush.msra.mxu0 %v1338
        %1437 = vmatpush.msra.mxu0 %v1334
        %1438 = vmatpush.msra.mxu0 %v1330
        %1439 = vmatpush.msra.mxu0 %v1326
        %1440 = vmatpush.msra.mxu0 %v1322
        %1441 = vmatpush.msra.mxu0 %v1318
        %1442 = vmatpush.msra.mxu0 %v1314
        %1443 = vmatpush.msra.mxu0 %v1310
        %1444 = vmatpush.msra.mxu0 %v1306
        %1445 = vmatpush.msra.mxu0 %v1302
        %1446 = vmatmul.f32.gmra.mxu0 %v751
        %v1447 = vpop.f32.mrf.mxu0
        %v1448 = vadd.f32 0.0, %v1447
        %1449 = vmatmul.f32.gmra.mxu0 %v754
        %v1450 = vpop.f32.mrf.mxu0
        %v1451 = vadd.f32 0.0, %v1450
        %1452 = vmatmul.f32.gmra.mxu0 %v757
        %v1453 = vpop.f32.mrf.mxu0
        %v1454 = vadd.f32 0.0, %v1453
        %1455 = vmatmul.f32.gmra.mxu0 %v760
        %v1456 = vpop.f32.mrf.mxu0
        %v1457 = vadd.f32 0.0, %v1456
        %1458 = vmatmul.f32.gmra.mxu0 %v763
        %v1459 = vpop.f32.mrf.mxu0
        %v1460 = vadd.f32 0.0, %v1459
        %1461 = vmatmul.f32.gmra.mxu0 %v766
        %v1462 = vpop.f32.mrf.mxu0
        %v1463 = vadd.f32 0.0, %v1462
        %1464 = vmatmul.f32.gmra.mxu0 %v769
        %v1465 = vpop.f32.mrf.mxu0
        %v1466 = vadd.f32 0.0, %v1465
        %1467 = vmatmul.f32.gmra.mxu0 %v772
        %v1468 = vpop.f32.mrf.mxu0
        %v1469 = vadd.f32 0.0, %v1468
        %1470 = vmatmul.f32.gmra.mxu0 %v775
        %v1471 = vpop.f32.mrf.mxu0
        %v1472 = vadd.f32 0.0, %v1471
        %1473 = vmatmul.f32.gmra.mxu0 %v778
        %v1474 = vpop.f32.mrf.mxu0
        %v1475 = vadd.f32 0.0, %v1474
        %1476 = vmatmul.f32.gmra.mxu0 %v781
        %v1477 = vpop.f32.mrf.mxu0
        %v1478 = vadd.f32 0.0, %v1477
        %1479 = vmatmul.f32.gmra.mxu0 %v784
        %v1480 = vpop.f32.mrf.mxu0
        %v1481 = vadd.f32 0.0, %v1480
        %1482 = vmatmul.f32.gmra.mxu0 %v787
        %v1483 = vpop.f32.mrf.mxu0
        %v1484 = vadd.f32 0.0, %v1483
        %1485 = vmatmul.f32.gmra.mxu0 %v790
        %v1486 = vpop.f32.mrf.mxu0
        %v1487 = vadd.f32 0.0, %v1486
        %1488 = vmatmul.f32.gmra.mxu0 %v793
        %v1489 = vpop.f32.mrf.mxu0
        %v1490 = vadd.f32 0.0, %v1489
        %1491 = vmatmul.f32.gmra.mxu0 %v796
        %v1492 = vpop.f32.mrf.mxu0
        %v1493 = vadd.f32 0.0, %v1492
        %1494 = vdwg.mxu0
        %1495 = vmatpush.msra.mxu0 %v1426
        %1496 = vmatpush.msra.mxu0 %v1422
        %1497 = vmatpush.msra.mxu0 %v1418
        %1498 = vmatpush.msra.mxu0 %v1414
        %1499 = vmatpush.msra.mxu0 %v1410
        %1500 = vmatpush.msra.mxu0 %v1406
        %1501 = vmatpush.msra.mxu0 %v1402
        %1502 = vmatpush.msra.mxu0 %v1398
        %1503 = vmatpush.msra.mxu0 %v1394
        %1504 = vmatpush.msra.mxu0 %v1390
        %1505 = vmatpush.msra.mxu0 %v1386
        %1506 = vmatpush.msra.mxu0 %v1382
        %1507 = vmatpush.msra.mxu0 %v1378
        %1508 = vmatpush.msra.mxu0 %v1374
        %1509 = vmatpush.msra.mxu0 %v1370
        %1510 = vmatpush.msra.mxu0 %v1366
        %1511 = vmatmul.f32.gmra.mxu0 %v816
        %v1512 = vpop.f32.mrf.mxu0
        %v1513 = vadd.f32 %v1448, %v1512
        %1514 = vmatmul.f32.gmra.mxu0 %v819
        %v1515 = vpop.f32.mrf.mxu0
        %v1516 = vadd.f32 %v1451, %v1515
        %1517 = vmatmul.f32.gmra.mxu0 %v822
        %v1518 = vpop.f32.mrf.mxu0
        %v1519 = vadd.f32 %v1454, %v1518
        %1520 = vmatmul.f32.gmra.mxu0 %v825
        %v1521 = vpop.f32.mrf.mxu0
        %v1522 = vadd.f32 %v1457, %v1521
        %1523 = vmatmul.f32.gmra.mxu0 %v828
        %v1524 = vpop.f32.mrf.mxu0
        %v1525 = vadd.f32 %v1460, %v1524
        %1526 = vmatmul.f32.gmra.mxu0 %v831
        %v1527 = vpop.f32.mrf.mxu0
        %v1528 = vadd.f32 %v1463, %v1527
        %1529 = vmatmul.f32.gmra.mxu0 %v834
        %v1530 = vpop.f32.mrf.mxu0
        %v1531 = vadd.f32 %v1466, %v1530
        %1532 = vmatmul.f32.gmra.mxu0 %v837
        %v1533 = vpop.f32.mrf.mxu0
        %v1534 = vadd.f32 %v1469, %v1533
        %1535 = vmatmul.f32.gmra.mxu0 %v840
        %v1536 = vpop.f32.mrf.mxu0
        %v1537 = vadd.f32 %v1472, %v1536
        %1538 = vmatmul.f32.gmra.mxu0 %v843
        %v1539 = vpop.f32.mrf.mxu0
        %v1540 = vadd.f32 %v1475, %v1539
        %1541 = vmatmul.f32.gmra.mxu0 %v846
        %v1542 = vpop.f32.mrf.mxu0
        %v1543 = vadd.f32 %v1478, %v1542
        %1544 = vmatmul.f32.gmra.mxu0 %v849
        %v1545 = vpop.f32.mrf.mxu0
        %v1546 = vadd.f32 %v1481, %v1545
        %1547 = vmatmul.f32.gmra.mxu0 %v852
        %v1548 = vpop.f32.mrf.mxu0
        %v1549 = vadd.f32 %v1484, %v1548
        %1550 = vmatmul.f32.gmra.mxu0 %v855
        %v1551 = vpop.f32.mrf.mxu0
        %v1552 = vadd.f32 %v1487, %v1551
        %1553 = vmatmul.f32.gmra.mxu0 %v858
        %v1554 = vpop.f32.mrf.mxu0
        %v1555 = vadd.f32 %v1490, %v1554
        %1556 = vmatmul.f32.gmra.mxu0 %v861
        %v1557 = vpop.f32.mrf.mxu0
        %v1558 = vadd.f32 %v1493, %v1557
        %1559 = vdwg.mxu0
        %1560 = vmatpush.msra.mxu0 %v1363
        %1561 = vmatpush.msra.mxu0 %v1359
        %1562 = vmatpush.msra.mxu0 %v1355
        %1563 = vmatpush.msra.mxu0 %v1351
        %1564 = vmatpush.msra.mxu0 %v1347
        %1565 = vmatpush.msra.mxu0 %v1343
        %1566 = vmatpush.msra.mxu0 %v1339
        %1567 = vmatpush.msra.mxu0 %v1335
        %1568 = vmatpush.msra.mxu0 %v1331
        %1569 = vmatpush.msra.mxu0 %v1327
        %1570 = vmatpush.msra.mxu0 %v1323
        %1571 = vmatpush.msra.mxu0 %v1319
        %1572 = vmatpush.msra.mxu0 %v1315
        %1573 = vmatpush.msra.mxu0 %v1311
        %1574 = vmatpush.msra.mxu0 %v1307
        %1575 = vmatpush.msra.mxu0 %v1303
        %1576 = vmatmul.f32.gmra.mxu0 %v751
        %v1577 = vpop.f32.mrf.mxu0
        %v1578 = vadd.f32 0.0, %v1577
        %1579 = vmatmul.f32.gmra.mxu0 %v754
        %v1580 = vpop.f32.mrf.mxu0
        %v1581 = vadd.f32 0.0, %v1580
        %1582 = vmatmul.f32.gmra.mxu0 %v757
        %v1583 = vpop.f32.mrf.mxu0
        %v1584 = vadd.f32 0.0, %v1583
        %1585 = vmatmul.f32.gmra.mxu0 %v760
        %v1586 = vpop.f32.mrf.mxu0
        %v1587 = vadd.f32 0.0, %v1586
        %1588 = vmatmul.f32.gmra.mxu0 %v763
        %v1589 = vpop.f32.mrf.mxu0
        %v1590 = vadd.f32 0.0, %v1589
        %1591 = vmatmul.f32.gmra.mxu0 %v766
        %v1592 = vpop.f32.mrf.mxu0
        %v1593 = vadd.f32 0.0, %v1592
        %1594 = vmatmul.f32.gmra.mxu0 %v769
        %v1595 = vpop.f32.mrf.mxu0
        %v1596 = vadd.f32 0.0, %v1595
        %1597 = vmatmul.f32.gmra.mxu0 %v772
        %v1598 = vpop.f32.mrf.mxu0
        %v1599 = vadd.f32 0.0, %v1598
        %1600 = vmatmul.f32.gmra.mxu0 %v775
        %v1601 = vpop.f32.mrf.mxu0
        %v1602 = vadd.f32 0.0, %v1601
        %1603 = vmatmul.f32.gmra.mxu0 %v778
        %v1604 = vpop.f32.mrf.mxu0
        %v1605 = vadd.f32 0.0, %v1604
        %1606 = vmatmul.f32.gmra.mxu0 %v781
        %v1607 = vpop.f32.mrf.mxu0
        %v1608 = vadd.f32 0.0, %v1607
        %1609 = vmatmul.f32.gmra.mxu0 %v784
        %v1610 = vpop.f32.mrf.mxu0
        %v1611 = vadd.f32 0.0, %v1610
        %1612 = vmatmul.f32.gmra.mxu0 %v787
        %v1613 = vpop.f32.mrf.mxu0
        %v1614 = vadd.f32 0.0, %v1613
        %1615 = vmatmul.f32.gmra.mxu0 %v790
        %v1616 = vpop.f32.mrf.mxu0
        %v1617 = vadd.f32 0.0, %v1616
        %1618 = vmatmul.f32.gmra.mxu0 %v793
        %v1619 = vpop.f32.mrf.mxu0
        %v1620 = vadd.f32 0.0, %v1619
        %1621 = vmatmul.f32.gmra.mxu0 %v796
        %v1622 = vpop.f32.mrf.mxu0
        %v1623 = vadd.f32 0.0, %v1622
        %1624 = vdwg.mxu0
        %1625 = vmatpush.msra.mxu0 %v1427
        %1626 = vmatpush.msra.mxu0 %v1423
        %1627 = vmatpush.msra.mxu0 %v1419
        %1628 = vmatpush.msra.mxu0 %v1415
        %1629 = vmatpush.msra.mxu0 %v1411
        %1630 = vmatpush.msra.mxu0 %v1407
        %1631 = vmatpush.msra.mxu0 %v1403
        %1632 = vmatpush.msra.mxu0 %v1399
        %1633 = vmatpush.msra.mxu0 %v1395
        %1634 = vmatpush.msra.mxu0 %v1391
        %1635 = vmatpush.msra.mxu0 %v1387
        %1636 = vmatpush.msra.mxu0 %v1383
        %1637 = vmatpush.msra.mxu0 %v1379
        %1638 = vmatpush.msra.mxu0 %v1375
        %1639 = vmatpush.msra.mxu0 %v1371
        %1640 = vmatpush.msra.mxu0 %v1367
        %1641 = vmatmul.f32.gmra.mxu0 %v816
        %v1642 = vpop.f32.mrf.mxu0
        %v1643 = vadd.f32 %v1578, %v1642
        %1644 = vmatmul.f32.gmra.mxu0 %v819
        %v1645 = vpop.f32.mrf.mxu0
        %v1646 = vadd.f32 %v1581, %v1645
        %1647 = vmatmul.f32.gmra.mxu0 %v822
        %v1648 = vpop.f32.mrf.mxu0
        %v1649 = vadd.f32 %v1584, %v1648
        %1650 = vmatmul.f32.gmra.mxu0 %v825
        %v1651 = vpop.f32.mrf.mxu0
        %v1652 = vadd.f32 %v1587, %v1651
        %1653 = vmatmul.f32.gmra.mxu0 %v828
        %v1654 = vpop.f32.mrf.mxu0
        %v1655 = vadd.f32 %v1590, %v1654
        %1656 = vmatmul.f32.gmra.mxu0 %v831
        %v1657 = vpop.f32.mrf.mxu0
        %v1658 = vadd.f32 %v1593, %v1657
        %1659 = vmatmul.f32.gmra.mxu0 %v834
        %v1660 = vpop.f32.mrf.mxu0
        %v1661 = vadd.f32 %v1596, %v1660
        %1662 = vmatmul.f32.gmra.mxu0 %v837
        %v1663 = vpop.f32.mrf.mxu0
        %v1664 = vadd.f32 %v1599, %v1663
        %1665 = vmatmul.f32.gmra.mxu0 %v840
        %v1666 = vpop.f32.mrf.mxu0
        %v1667 = vadd.f32 %v1602, %v1666
        %1668 = vmatmul.f32.gmra.mxu0 %v843
        %v1669 = vpop.f32.mrf.mxu0
        %v1670 = vadd.f32 %v1605, %v1669
        %1671 = vmatmul.f32.gmra.mxu0 %v846
        %v1672 = vpop.f32.mrf.mxu0
        %v1673 = vadd.f32 %v1608, %v1672
        %1674 = vmatmul.f32.gmra.mxu0 %v849
        %v1675 = vpop.f32.mrf.mxu0
        %v1676 = vadd.f32 %v1611, %v1675
        %1677 = vmatmul.f32.gmra.mxu0 %v852
        %v1678 = vpop.f32.mrf.mxu0
        %v1679 = vadd.f32 %v1614, %v1678
        %1680 = vmatmul.f32.gmra.mxu0 %v855
        %v1681 = vpop.f32.mrf.mxu0
        %v1682 = vadd.f32 %v1617, %v1681
        %1683 = vmatmul.f32.gmra.mxu0 %v858
        %v1684 = vpop.f32.mrf.mxu0
        %v1685 = vadd.f32 %v1620, %v1684
        %1686 = vmatmul.f32.gmra.mxu0 %v861
        %v1687 = vpop.f32.mrf.mxu0
        %v1688 = vadd.f32 %v1623, %v1687
        %1689 = vdwg.mxu0
        %1690 = vmatpush.msra.mxu0 %v1364
        %1691 = vmatpush.msra.mxu0 %v1360
        %1692 = vmatpush.msra.mxu0 %v1356
        %1693 = vmatpush.msra.mxu0 %v1352
        %1694 = vmatpush.msra.mxu0 %v1348
        %1695 = vmatpush.msra.mxu0 %v1344
        %1696 = vmatpush.msra.mxu0 %v1340
        %1697 = vmatpush.msra.mxu0 %v1336
        %1698 = vmatpush.msra.mxu0 %v1332
        %1699 = vmatpush.msra.mxu0 %v1328
        %1700 = vmatpush.msra.mxu0 %v1324
        %1701 = vmatpush.msra.mxu0 %v1320
        %1702 = vmatpush.msra.mxu0 %v1316
        %1703 = vmatpush.msra.mxu0 %v1312
        %1704 = vmatpush.msra.mxu0 %v1308
        %1705 = vmatpush.msra.mxu0 %v1304
        %1706 = vmatmul.f32.gmra.mxu0 %v751
        %v1707 = vpop.f32.mrf.mxu0
        %v1708 = vadd.f32 0.0, %v1707
        %1709 = vmatmul.f32.gmra.mxu0 %v754
        %v1710 = vpop.f32.mrf.mxu0
        %v1711 = vadd.f32 0.0, %v1710
        %1712 = vmatmul.f32.gmra.mxu0 %v757
        %v1713 = vpop.f32.mrf.mxu0
        %v1714 = vadd.f32 0.0, %v1713
        %1715 = vmatmul.f32.gmra.mxu0 %v760
        %v1716 = vpop.f32.mrf.mxu0
        %v1717 = vadd.f32 0.0, %v1716
        %1718 = vmatmul.f32.gmra.mxu0 %v763
        %v1719 = vpop.f32.mrf.mxu0
        %v1720 = vadd.f32 0.0, %v1719
        %1721 = vmatmul.f32.gmra.mxu0 %v766
        %v1722 = vpop.f32.mrf.mxu0
        %v1723 = vadd.f32 0.0, %v1722
        %1724 = vmatmul.f32.gmra.mxu0 %v769
        %v1725 = vpop.f32.mrf.mxu0
        %v1726 = vadd.f32 0.0, %v1725
        %1727 = vmatmul.f32.gmra.mxu0 %v772
        %v1728 = vpop.f32.mrf.mxu0
        %v1729 = vadd.f32 0.0, %v1728
        %1730 = vmatmul.f32.gmra.mxu0 %v775
        %v1731 = vpop.f32.mrf.mxu0
        %v1732 = vadd.f32 0.0, %v1731
        %1733 = vmatmul.f32.gmra.mxu0 %v778
        %v1734 = vpop.f32.mrf.mxu0
        %v1735 = vadd.f32 0.0, %v1734
        %1736 = vmatmul.f32.gmra.mxu0 %v781
        %v1737 = vpop.f32.mrf.mxu0
        %v1738 = vadd.f32 0.0, %v1737
        %1739 = vmatmul.f32.gmra.mxu0 %v784
        %v1740 = vpop.f32.mrf.mxu0
        %v1741 = vadd.f32 0.0, %v1740
        %1742 = vmatmul.f32.gmra.mxu0 %v787
        %v1743 = vpop.f32.mrf.mxu0
        %v1744 = vadd.f32 0.0, %v1743
        %1745 = vmatmul.f32.gmra.mxu0 %v790
        %v1746 = vpop.f32.mrf.mxu0
        %v1747 = vadd.f32 0.0, %v1746
        %1748 = vmatmul.f32.gmra.mxu0 %v793
        %v1749 = vpop.f32.mrf.mxu0
        %v1750 = vadd.f32 0.0, %v1749
        %1751 = vmatmul.f32.gmra.mxu0 %v796
        %v1752 = vpop.f32.mrf.mxu0
        %v1753 = vadd.f32 0.0, %v1752
        %1754 = vdwg.mxu0
        %1755 = vmatpush.msra.mxu0 %v1428
        %1756 = vmatpush.msra.mxu0 %v1424
        %1757 = vmatpush.msra.mxu0 %v1420
        %1758 = vmatpush.msra.mxu0 %v1416
        %1759 = vmatpush.msra.mxu0 %v1412
        %1760 = vmatpush.msra.mxu0 %v1408
        %1761 = vmatpush.msra.mxu0 %v1404
        %1762 = vmatpush.msra.mxu0 %v1400
        %1763 = vmatpush.msra.mxu0 %v1396
        %1764 = vmatpush.msra.mxu0 %v1392
        %1765 = vmatpush.msra.mxu0 %v1388
        %1766 = vmatpush.msra.mxu0 %v1384
        %1767 = vmatpush.msra.mxu0 %v1380
        %1768 = vmatpush.msra.mxu0 %v1376
        %1769 = vmatpush.msra.mxu0 %v1372
        %1770 = vmatpush.msra.mxu0 %v1368
        %1771 = vmatmul.f32.gmra.mxu0 %v816
        %v1772 = vpop.f32.mrf.mxu0
        %v1773 = vadd.f32 %v1708, %v1772
        %1774 = vmatmul.f32.gmra.mxu0 %v819
        %v1775 = vpop.f32.mrf.mxu0
        %v1776 = vadd.f32 %v1711, %v1775
        %1777 = vmatmul.f32.gmra.mxu0 %v822
        %v1778 = vpop.f32.mrf.mxu0
        %v1779 = vadd.f32 %v1714, %v1778
        %1780 = vmatmul.f32.gmra.mxu0 %v825
        %v1781 = vpop.f32.mrf.mxu0
        %v1782 = vadd.f32 %v1717, %v1781
        %1783 = vmatmul.f32.gmra.mxu0 %v828
        %v1784 = vpop.f32.mrf.mxu0
        %v1785 = vadd.f32 %v1720, %v1784
        %1786 = vmatmul.f32.gmra.mxu0 %v831
        %v1787 = vpop.f32.mrf.mxu0
        %v1788 = vadd.f32 %v1723, %v1787
        %1789 = vmatmul.f32.gmra.mxu0 %v834
        %v1790 = vpop.f32.mrf.mxu0
        %v1791 = vadd.f32 %v1726, %v1790
        %1792 = vmatmul.f32.gmra.mxu0 %v837
        %v1793 = vpop.f32.mrf.mxu0
        %v1794 = vadd.f32 %v1729, %v1793
        %1795 = vmatmul.f32.gmra.mxu0 %v840
        %v1796 = vpop.f32.mrf.mxu0
        %v1797 = vadd.f32 %v1732, %v1796
        %1798 = vmatmul.f32.gmra.mxu0 %v843
        %v1799 = vpop.f32.mrf.mxu0
        %v1800 = vadd.f32 %v1735, %v1799
        %1801 = vmatmul.f32.gmra.mxu0 %v846
        %v1802 = vpop.f32.mrf.mxu0
        %v1803 = vadd.f32 %v1738, %v1802
        %1804 = vmatmul.f32.gmra.mxu0 %v849
        %v1805 = vpop.f32.mrf.mxu0
        %v1806 = vadd.f32 %v1741, %v1805
        %1807 = vmatmul.f32.gmra.mxu0 %v852
        %v1808 = vpop.f32.mrf.mxu0
        %v1809 = vadd.f32 %v1744, %v1808
        %1810 = vmatmul.f32.gmra.mxu0 %v855
        %v1811 = vpop.f32.mrf.mxu0
        %v1812 = vadd.f32 %v1747, %v1811
        %1813 = vmatmul.f32.gmra.mxu0 %v858
        %v1814 = vpop.f32.mrf.mxu0
        %v1815 = vadd.f32 %v1750, %v1814
        %1816 = vmatmul.f32.gmra.mxu0 %v861
        %v1817 = vpop.f32.mrf.mxu0
        %v1818 = vadd.f32 %v1753, %v1817
        %1819 = vdwg.mxu0
        %1820 = vmatpush.msra.mxu0 %v1365
        %1821 = vmatpush.msra.mxu0 %v1361
        %1822 = vmatpush.msra.mxu0 %v1357
        %1823 = vmatpush.msra.mxu0 %v1353
        %1824 = vmatpush.msra.mxu0 %v1349
        %1825 = vmatpush.msra.mxu0 %v1345
        %1826 = vmatpush.msra.mxu0 %v1341
        %1827 = vmatpush.msra.mxu0 %v1337
        %1828 = vmatpush.msra.mxu0 %v1333
        %1829 = vmatpush.msra.mxu0 %v1329
        %1830 = vmatpush.msra.mxu0 %v1325
        %1831 = vmatpush.msra.mxu0 %v1321
        %1832 = vmatpush.msra.mxu0 %v1317
        %1833 = vmatpush.msra.mxu0 %v1313
        %1834 = vmatpush.msra.mxu0 %v1309
        %1835 = vmatpush.msra.mxu0 %v1305
        %1836 = vmatmul.f32.gmra.mxu0 %v751
        %v1837 = vpop.f32.mrf.mxu0
        %v1838 = vadd.f32 0.0, %v1837
        %1839 = vmatmul.f32.gmra.mxu0 %v754
        %v1840 = vpop.f32.mrf.mxu0
        %v1841 = vadd.f32 0.0, %v1840
        %1842 = vmatmul.f32.gmra.mxu0 %v757
        %v1843 = vpop.f32.mrf.mxu0
        %v1844 = vadd.f32 0.0, %v1843
        %1845 = vmatmul.f32.gmra.mxu0 %v760
        %v1846 = vpop.f32.mrf.mxu0
        %v1847 = vadd.f32 0.0, %v1846
        %1848 = vmatmul.f32.gmra.mxu0 %v763
        %v1849 = vpop.f32.mrf.mxu0
        %v1850 = vadd.f32 0.0, %v1849
        %1851 = vmatmul.f32.gmra.mxu0 %v766
        %v1852 = vpop.f32.mrf.mxu0
        %v1853 = vadd.f32 0.0, %v1852
        %1854 = vmatmul.f32.gmra.mxu0 %v769
        %v1855 = vpop.f32.mrf.mxu0
        %v1856 = vadd.f32 0.0, %v1855
        %1857 = vmatmul.f32.gmra.mxu0 %v772
        %v1858 = vpop.f32.mrf.mxu0
        %v1859 = vadd.f32 0.0, %v1858
        %1860 = vmatmul.f32.gmra.mxu0 %v775
        %v1861 = vpop.f32.mrf.mxu0
        %v1862 = vadd.f32 0.0, %v1861
        %1863 = vmatmul.f32.gmra.mxu0 %v778
        %v1864 = vpop.f32.mrf.mxu0
        %v1865 = vadd.f32 0.0, %v1864
        %1866 = vmatmul.f32.gmra.mxu0 %v781
        %v1867 = vpop.f32.mrf.mxu0
        %v1868 = vadd.f32 0.0, %v1867
        %1869 = vmatmul.f32.gmra.mxu0 %v784
        %v1870 = vpop.f32.mrf.mxu0
        %v1871 = vadd.f32 0.0, %v1870
        %1872 = vmatmul.f32.gmra.mxu0 %v787
        %v1873 = vpop.f32.mrf.mxu0
        %v1874 = vadd.f32 0.0, %v1873
        %1875 = vmatmul.f32.gmra.mxu0 %v790
        %v1876 = vpop.f32.mrf.mxu0
        %v1877 = vadd.f32 0.0, %v1876
        %1878 = vmatmul.f32.gmra.mxu0 %v793
        %v1879 = vpop.f32.mrf.mxu0
        %v1880 = vadd.f32 0.0, %v1879
        %1881 = vmatmul.f32.gmra.mxu0 %v796
        %v1882 = vpop.f32.mrf.mxu0
        %v1883 = vadd.f32 0.0, %v1882
        %1884 = vdwg.mxu0
        %1885 = vmatpush.msra.mxu0 %v1429
        %1886 = vmatpush.msra.mxu0 %v1425
        %1887 = vmatpush.msra.mxu0 %v1421
        %1888 = vmatpush.msra.mxu0 %v1417
        %1889 = vmatpush.msra.mxu0 %v1413
        %1890 = vmatpush.msra.mxu0 %v1409
        %1891 = vmatpush.msra.mxu0 %v1405
        %1892 = vmatpush.msra.mxu0 %v1401
        %1893 = vmatpush.msra.mxu0 %v1397
        %1894 = vmatpush.msra.mxu0 %v1393
        %1895 = vmatpush.msra.mxu0 %v1389
        %1896 = vmatpush.msra.mxu0 %v1385
        %1897 = vmatpush.msra.mxu0 %v1381
        %1898 = vmatpush.msra.mxu0 %v1377
        %1899 = vmatpush.msra.mxu0 %v1373
        %1900 = vmatpush.msra.mxu0 %v1369
        %1901 = vmatmul.f32.gmra.mxu0 %v816
        %v1902 = vpop.f32.mrf.mxu0
        %v1903 = vadd.f32 %v1838, %v1902
        %1904 = vmatmul.f32.gmra.mxu0 %v819
        %v1905 = vpop.f32.mrf.mxu0
        %v1906 = vadd.f32 %v1841, %v1905
        %1907 = vmatmul.f32.gmra.mxu0 %v822
        %v1908 = vpop.f32.mrf.mxu0
        %v1909 = vadd.f32 %v1844, %v1908
        %1910 = vmatmul.f32.gmra.mxu0 %v825
        %v1911 = vpop.f32.mrf.mxu0
        %v1912 = vadd.f32 %v1847, %v1911
        %1913 = vmatmul.f32.gmra.mxu0 %v828
        %v1914 = vpop.f32.mrf.mxu0
        %v1915 = vadd.f32 %v1850, %v1914
        %1916 = vmatmul.f32.gmra.mxu0 %v831
        %v1917 = vpop.f32.mrf.mxu0
        %v1918 = vadd.f32 %v1853, %v1917
        %1919 = vmatmul.f32.gmra.mxu0 %v834
        %v1920 = vpop.f32.mrf.mxu0
        %v1921 = vadd.f32 %v1856, %v1920
        %1922 = vmatmul.f32.gmra.mxu0 %v837
        %v1923 = vpop.f32.mrf.mxu0
        %v1924 = vadd.f32 %v1859, %v1923
        %1925 = vmatmul.f32.gmra.mxu0 %v840
        %v1926 = vpop.f32.mrf.mxu0
        %v1927 = vadd.f32 %v1862, %v1926
        %1928 = vmatmul.f32.gmra.mxu0 %v843
        %v1929 = vpop.f32.mrf.mxu0
        %v1930 = vadd.f32 %v1865, %v1929
        %1931 = vmatmul.f32.gmra.mxu0 %v846
        %v1932 = vpop.f32.mrf.mxu0
        %v1933 = vadd.f32 %v1868, %v1932
        %1934 = vmatmul.f32.gmra.mxu0 %v849
        %v1935 = vpop.f32.mrf.mxu0
        %v1936 = vadd.f32 %v1871, %v1935
        %1937 = vmatmul.f32.gmra.mxu0 %v852
        %v1938 = vpop.f32.mrf.mxu0
        %v1939 = vadd.f32 %v1874, %v1938
        %1940 = vmatmul.f32.gmra.mxu0 %v855
        %v1941 = vpop.f32.mrf.mxu0
        %v1942 = vadd.f32 %v1877, %v1941
        %1943 = vmatmul.f32.gmra.mxu0 %v858
        %v1944 = vpop.f32.mrf.mxu0
        %v1945 = vadd.f32 %v1880, %v1944
        %1946 = vmatmul.f32.gmra.mxu0 %v861
        %v1947 = vpop.f32.mrf.mxu0
        %v1948 = vadd.f32 %v1883, %v1947
        %1949 = vdwg.mxu0
        %v1954 = vrot.slane %v1220, 7
        %v1955 = vrot.slane %v1260, 6
        %v1956 = vrot.slane %v1300, 5
        %vm1957 = vcmask 1040384
        %v1958 = vsel %vm1957, %v1180, %v1954
        %v1959 = vsel %vm1121, %v1955, %v1956
        %vm1960 = vcmask 1041408
        %v1961 = vsel %vm1960, %v1958, %v1959
        %v1962 = vsel %vm1119, %v1180, %v1954
        %v1963 = vsel %vm1123, %v1955, %v1956
        %vm1964 = vcmask 1042433
        %v1965 = vsel %vm1964, %v1962, %v1963
        %v1966 = vrot.slane %v1965, 1
        %v1967 = vsel %vm1121, %v1180, %v1954
        %v1968 = vsel %vm1125, %v1955, %v1956
        %vm1969 = vcmask 1043458
        %v1970 = vsel %vm1969, %v1967, %v1968
        %v1971 = vrot.slane %v1970, 2
        %v1972 = vsel %vm1123, %v1180, %v1954
        %v1973 = vsel %vm1127, %v1955, %v1956
        %vm1974 = vcmask 1044483
        %v1975 = vsel %vm1974, %v1972, %v1973
        %v1976 = vrot.slane %v1975, 3
        %v1977 = vsel %vm1125, %v1180, %v1954
        %v1978 = vsel %vm1129, %v1955, %v1956
        %vm1979 = vcmask 1045508
        %v1980 = vsel %vm1979, %v1977, %v1978
        %v1981 = vrot.slane %v1980, 4
        %v1982 = vsel %vm1127, %v1180, %v1954
        %vm1983 = vcmask 1046528
        %v1984 = vsel %vm1983, %v1956, %v1955
        %vm1985 = vcmask 1046533
        %v1986 = vsel %vm1985, %v1982, %v1984
        %v1987 = vrot.slane %v1986, 5
        %v1988 = vsel %vm1129, %v1180, %v1954
        %v1989 = vsel %vm1957, %v1955, %v1956
        %vm1990 = vcmask 1045504
        %v1991 = vsel %vm1990, %v1989, %v1988
        %v1992 = vrot.slane %v1991, 6
        %v1993 = vsel %vm1983, %v1954, %v1180
        %v1994 = vsel %vm1119, %v1955, %v1956
        %vm1995 = vcmask 1046529
        %v1996 = vsel %vm1995, %v1994, %v1993
        %v1997 = vrot.slane %v1996, 7
        %v1998 = vperm.slane %v1961, 0
        %v1999 = vperm.slane %v1961, 1
        %v2000 = vperm.slane %v1961, 2
        %v2001 = vperm.slane %v1961, 3
        %v2002 = vperm.slane %v1966, 0
        %v2003 = vperm.slane %v1966, 1
        %v2004 = vperm.slane %v1966, 2
        %v2005 = vperm.slane %v1966, 3
        %v2006 = vperm.slane %v1971, 0
        %v2007 = vperm.slane %v1971, 1
        %v2008 = vperm.slane %v1971, 2
        %v2009 = vperm.slane %v1971, 3
        %v2010 = vperm.slane %v1976, 0
        %v2011 = vperm.slane %v1976, 1
        %v2012 = vperm.slane %v1976, 2
        %v2013 = vperm.slane %v1976, 3
        %v2014 = vperm.slane %v1981, 0
        %v2015 = vperm.slane %v1981, 1
        %v2016 = vperm.slane %v1981, 2
        %v2017 = vperm.slane %v1981, 3
        %v2018 = vperm.slane %v1987, 0
        %v2019 = vperm.slane %v1987, 1
        %v2020 = vperm.slane %v1987, 2
        %v2021 = vperm.slane %v1987, 3
        %v2022 = vperm.slane %v1992, 0
        %v2023 = vperm.slane %v1992, 1
        %v2024 = vperm.slane %v1992, 2
        %v2025 = vperm.slane %v1992, 3
        %v2026 = vperm.slane %v1997, 0
        %v2027 = vperm.slane %v1997, 1
        %v2028 = vperm.slane %v1997, 2
        %v2029 = vperm.slane %v1997, 3
        %v2062 = vadd.f32 %v1513, %v1998
        %v2063 = vadd.f32 %v1643, %v1999
        %v2064 = vadd.f32 %v1773, %v2000
        %v2065 = vadd.f32 %v1903, %v2001
        %v2066 = vadd.f32 %v1516, %v1998
        %v2067 = vadd.f32 %v1646, %v1999
        %v2068 = vadd.f32 %v1776, %v2000
        %v2069 = vadd.f32 %v1906, %v2001
        %v2070 = vadd.f32 %v1519, %v2002
        %v2071 = vadd.f32 %v1649, %v2003
        %v2072 = vadd.f32 %v1779, %v2004
        %v2073 = vadd.f32 %v1909, %v2005
        %v2074 = vadd.f32 %v1522, %v2002
        %v2075 = vadd.f32 %v1652, %v2003
        %v2076 = vadd.f32 %v1782, %v2004
        %v2077 = vadd.f32 %v1912, %v2005
        %v2078 = vadd.f32 %v1525, %v2006
        %v2079 = vadd.f32 %v1655, %v2007
        %v2080 = vadd.f32 %v1785, %v2008
        %v2081 = vadd.f32 %v1915, %v2009
        %v2082 = vadd.f32 %v1528, %v2006
        %v2083 = vadd.f32 %v1658, %v2007
        %v2084 = vadd.f32 %v1788, %v2008
        %v2085 = vadd.f32 %v1918, %v2009
        %v2086 = vadd.f32 %v1531, %v2010
        %v2087 = vadd.f32 %v1661, %v2011
        %v2088 = vadd.f32 %v1791, %v2012
        %v2089 = vadd.f32 %v1921, %v2013
        %v2090 = vadd.f32 %v1534, %v2010
        %v2091 = vadd.f32 %v1664, %v2011
        %v2092 = vadd.f32 %v1794, %v2012
        %v2093 = vadd.f32 %v1924, %v2013
        %v2094 = vadd.f32 %v1537, %v2014
        %v2095 = vadd.f32 %v1667, %v2015
        %v2096 = vadd.f32 %v1797, %v2016
        %v2097 = vadd.f32 %v1927, %v2017
        %v2098 = vadd.f32 %v1540, %v2014
        %v2099 = vadd.f32 %v1670, %v2015
        %v2100 = vadd.f32 %v1800, %v2016
        %v2101 = vadd.f32 %v1930, %v2017
        %v2102 = vadd.f32 %v1543, %v2018
        %v2103 = vadd.f32 %v1673, %v2019
        %v2104 = vadd.f32 %v1803, %v2020
        %v2105 = vadd.f32 %v1933, %v2021
        %v2106 = vadd.f32 %v1546, %v2018
        %v2107 = vadd.f32 %v1676, %v2019
        %v2108 = vadd.f32 %v1806, %v2020
        %v2109 = vadd.f32 %v1936, %v2021
        %v2110 = vadd.f32 %v1549, %v2022
        %v2111 = vadd.f32 %v1679, %v2023
        %v2112 = vadd.f32 %v1809, %v2024
        %v2113 = vadd.f32 %v1939, %v2025
        %v2114 = vadd.f32 %v1552, %v2022
        %v2115 = vadd.f32 %v1682, %v2023
        %v2116 = vadd.f32 %v1812, %v2024
        %v2117 = vadd.f32 %v1942, %v2025
        %v2118 = vadd.f32 %v1555, %v2026
        %v2119 = vadd.f32 %v1685, %v2027
        %v2120 = vadd.f32 %v1815, %v2028
        %v2121 = vadd.f32 %v1945, %v2029
        %v2122 = vadd.f32 %v1558, %v2026
        %v2123 = vadd.f32 %v1688, %v2027
        %v2124 = vadd.f32 %v1818, %v2028
        %v2125 = vadd.f32 %v1948, %v2029
        %v2126 = vld [vmem:[%s9] sm:$0xf]
        %v2128 = vperm.slane %v2126, 0
        %v2129 = vperm.slane %v2126, 1
        %v2130 = vperm.slane %v2126, 2
        %v2131 = vperm.slane %v2126, 3
        %v2136 = vadd.f32 %v2062, %v2128
        %v2137 = vadd.f32 %v2063, %v2129
        %v2138 = vadd.f32 %v2064, %v2130
        %v2139 = vadd.f32 %v2065, %v2131
        %v2140 = vadd.f32 %v2066, %v2128
        %v2141 = vadd.f32 %v2067, %v2129
        %v2142 = vadd.f32 %v2068, %v2130
        %v2143 = vadd.f32 %v2069, %v2131
        %v2144 = vadd.f32 %v2070, %v2128
        %v2145 = vadd.f32 %v2071, %v2129
        %v2146 = vadd.f32 %v2072, %v2130
        %v2147 = vadd.f32 %v2073, %v2131
        %v2148 = vadd.f32 %v2074, %v2128
        %v2149 = vadd.f32 %v2075, %v2129
        %v2150 = vadd.f32 %v2076, %v2130
        %v2151 = vadd.f32 %v2077, %v2131
        %v2152 = vadd.f32 %v2078, %v2128
        %v2153 = vadd.f32 %v2079, %v2129
        %v2154 = vadd.f32 %v2080, %v2130
        %v2155 = vadd.f32 %v2081, %v2131
        %v2156 = vadd.f32 %v2082, %v2128
        %v2157 = vadd.f32 %v2083, %v2129
        %v2158 = vadd.f32 %v2084, %v2130
        %v2159 = vadd.f32 %v2085, %v2131
        %v2160 = vadd.f32 %v2086, %v2128
        %v2161 = vadd.f32 %v2087, %v2129
        %v2162 = vadd.f32 %v2088, %v2130
        %v2163 = vadd.f32 %v2089, %v2131
        %v2164 = vadd.f32 %v2090, %v2128
        %v2165 = vadd.f32 %v2091, %v2129
        %v2166 = vadd.f32 %v2092, %v2130
        %v2167 = vadd.f32 %v2093, %v2131
        %v2168 = vadd.f32 %v2094, %v2128
        %v2169 = vadd.f32 %v2095, %v2129
        %v2170 = vadd.f32 %v2096, %v2130
        %v2171 = vadd.f32 %v2097, %v2131
        %v2172 = vadd.f32 %v2098, %v2128
        %v2173 = vadd.f32 %v2099, %v2129
        %v2174 = vadd.f32 %v2100, %v2130
        %v2175 = vadd.f32 %v2101, %v2131
        %v2176 = vadd.f32 %v2102, %v2128
        %v2177 = vadd.f32 %v2103, %v2129
        %v2178 = vadd.f32 %v2104, %v2130
        %v2179 = vadd.f32 %v2105, %v2131
        %v2180 = vadd.f32 %v2106, %v2128
        %v2181 = vadd.f32 %v2107, %v2129
        %v2182 = vadd.f32 %v2108, %v2130
        %v2183 = vadd.f32 %v2109, %v2131
        %v2184 = vadd.f32 %v2110, %v2128
        %v2185 = vadd.f32 %v2111, %v2129
        %v2186 = vadd.f32 %v2112, %v2130
        %v2187 = vadd.f32 %v2113, %v2131
        %v2188 = vadd.f32 %v2114, %v2128
        %v2189 = vadd.f32 %v2115, %v2129
        %v2190 = vadd.f32 %v2116, %v2130
        %v2191 = vadd.f32 %v2117, %v2131
        %v2192 = vadd.f32 %v2118, %v2128
        %v2193 = vadd.f32 %v2119, %v2129
        %v2194 = vadd.f32 %v2120, %v2130
        %v2195 = vadd.f32 %v2121, %v2131
        %v2196 = vadd.f32 %v2122, %v2128
        %v2197 = vadd.f32 %v2123, %v2129
        %v2198 = vadd.f32 %v2124, %v2130
        %v2199 = vadd.f32 %v2125, %v2131
        %v2200 = vld [vmem:[%s10] sm:$0xf]
        %v2202 = vperm.slane %v2200, 0
        %v2203 = vperm.slane %v2200, 1
        %v2204 = vperm.slane %v2200, 2
        %v2205 = vperm.slane %v2200, 3
        %v2210 = vmul.f32 %v2136, %v2202
        %v2211 = vmul.f32 %v2137, %v2203
        %v2212 = vmul.f32 %v2138, %v2204
        %v2213 = vmul.f32 %v2139, %v2205
        %v2214 = vmul.f32 %v2140, %v2202
        %v2215 = vmul.f32 %v2141, %v2203
        %v2216 = vmul.f32 %v2142, %v2204
        %v2217 = vmul.f32 %v2143, %v2205
        %v2218 = vmul.f32 %v2144, %v2202
        %v2219 = vmul.f32 %v2145, %v2203
        %v2220 = vmul.f32 %v2146, %v2204
        %v2221 = vmul.f32 %v2147, %v2205
        %v2222 = vmul.f32 %v2148, %v2202
        %v2223 = vmul.f32 %v2149, %v2203
        %v2224 = vmul.f32 %v2150, %v2204
        %v2225 = vmul.f32 %v2151, %v2205
        %v2226 = vmul.f32 %v2152, %v2202
        %v2227 = vmul.f32 %v2153, %v2203
        %v2228 = vmul.f32 %v2154, %v2204
        %v2229 = vmul.f32 %v2155, %v2205
        %v2230 = vmul.f32 %v2156, %v2202
        %v2231 = vmul.f32 %v2157, %v2203
        %v2232 = vmul.f32 %v2158, %v2204
        %v2233 = vmul.f32 %v2159, %v2205
        %v2234 = vmul.f32 %v2160, %v2202
        %v2235 = vmul.f32 %v2161, %v2203
        %v2236 = vmul.f32 %v2162, %v2204
        %v2237 = vmul.f32 %v2163, %v2205
        %v2238 = vmul.f32 %v2164, %v2202
        %v2239 = vmul.f32 %v2165, %v2203
        %v2240 = vmul.f32 %v2166, %v2204
        %v2241 = vmul.f32 %v2167, %v2205
        %v2242 = vmul.f32 %v2168, %v2202
        %v2243 = vmul.f32 %v2169, %v2203
        %v2244 = vmul.f32 %v2170, %v2204
        %v2245 = vmul.f32 %v2171, %v2205
        %v2246 = vmul.f32 %v2172, %v2202
        %v2247 = vmul.f32 %v2173, %v2203
        %v2248 = vmul.f32 %v2174, %v2204
        %v2249 = vmul.f32 %v2175, %v2205
        %v2250 = vmul.f32 %v2176, %v2202
        %v2251 = vmul.f32 %v2177, %v2203
        %v2252 = vmul.f32 %v2178, %v2204
        %v2253 = vmul.f32 %v2179, %v2205
        %v2254 = vmul.f32 %v2180, %v2202
        %v2255 = vmul.f32 %v2181, %v2203
        %v2256 = vmul.f32 %v2182, %v2204
        %v2257 = vmul.f32 %v2183, %v2205
        %v2258 = vmul.f32 %v2184, %v2202
        %v2259 = vmul.f32 %v2185, %v2203
        %v2260 = vmul.f32 %v2186, %v2204
        %v2261 = vmul.f32 %v2187, %v2205
        %v2262 = vmul.f32 %v2188, %v2202
        %v2263 = vmul.f32 %v2189, %v2203
        %v2264 = vmul.f32 %v2190, %v2204
        %v2265 = vmul.f32 %v2191, %v2205
        %v2266 = vmul.f32 %v2192, %v2202
        %v2267 = vmul.f32 %v2193, %v2203
        %v2268 = vmul.f32 %v2194, %v2204
        %v2269 = vmul.f32 %v2195, %v2205
        %v2270 = vmul.f32 %v2196, %v2202
        %v2271 = vmul.f32 %v2197, %v2203
        %v2272 = vmul.f32 %v2198, %v2204
        %v2273 = vmul.f32 %v2199, %v2205
        %v2274 = vld [vmem:[%s11] sm:$0xf]
        %v2276 = vperm.slane %v2274, 0
        %v2277 = vperm.slane %v2274, 1
        %v2278 = vperm.slane %v2274, 2
        %v2279 = vperm.slane %v2274, 3
        %v2284 = vadd.f32 %v2210, %v2276
        %v2285 = vadd.f32 %v2211, %v2277
        %v2286 = vadd.f32 %v2212, %v2278
        %v2287 = vadd.f32 %v2213, %v2279
        %v2288 = vadd.f32 %v2214, %v2276
        %v2289 = vadd.f32 %v2215, %v2277
        %v2290 = vadd.f32 %v2216, %v2278
        %v2291 = vadd.f32 %v2217, %v2279
        %v2292 = vadd.f32 %v2218, %v2276
        %v2293 = vadd.f32 %v2219, %v2277
        %v2294 = vadd.f32 %v2220, %v2278
        %v2295 = vadd.f32 %v2221, %v2279
        %v2296 = vadd.f32 %v2222, %v2276
        %v2297 = vadd.f32 %v2223, %v2277
        %v2298 = vadd.f32 %v2224, %v2278
        %v2299 = vadd.f32 %v2225, %v2279
        %v2300 = vadd.f32 %v2226, %v2276
        %v2301 = vadd.f32 %v2227, %v2277
        %v2302 = vadd.f32 %v2228, %v2278
        %v2303 = vadd.f32 %v2229, %v2279
        %v2304 = vadd.f32 %v2230, %v2276
        %v2305 = vadd.f32 %v2231, %v2277
        %v2306 = vadd.f32 %v2232, %v2278
        %v2307 = vadd.f32 %v2233, %v2279
        %v2308 = vadd.f32 %v2234, %v2276
        %v2309 = vadd.f32 %v2235, %v2277
        %v2310 = vadd.f32 %v2236, %v2278
        %v2311 = vadd.f32 %v2237, %v2279
        %v2312 = vadd.f32 %v2238, %v2276
        %v2313 = vadd.f32 %v2239, %v2277
        %v2314 = vadd.f32 %v2240, %v2278
        %v2315 = vadd.f32 %v2241, %v2279
        %v2316 = vadd.f32 %v2242, %v2276
        %v2317 = vadd.f32 %v2243, %v2277
        %v2318 = vadd.f32 %v2244, %v2278
        %v2319 = vadd.f32 %v2245, %v2279
        %v2320 = vadd.f32 %v2246, %v2276
        %v2321 = vadd.f32 %v2247, %v2277
        %v2322 = vadd.f32 %v2248, %v2278
        %v2323 = vadd.f32 %v2249, %v2279
        %v2324 = vadd.f32 %v2250, %v2276
        %v2325 = vadd.f32 %v2251, %v2277
        %v2326 = vadd.f32 %v2252, %v2278
        %v2327 = vadd.f32 %v2253, %v2279
        %v2328 = vadd.f32 %v2254, %v2276
        %v2329 = vadd.f32 %v2255, %v2277
        %v2330 = vadd.f32 %v2256, %v2278
        %v2331 = vadd.f32 %v2257, %v2279
        %v2332 = vadd.f32 %v2258, %v2276
        %v2333 = vadd.f32 %v2259, %v2277
        %v2334 = vadd.f32 %v2260, %v2278
        %v2335 = vadd.f32 %v2261, %v2279
        %v2336 = vadd.f32 %v2262, %v2276
        %v2337 = vadd.f32 %v2263, %v2277
        %v2338 = vadd.f32 %v2264, %v2278
        %v2339 = vadd.f32 %v2265, %v2279
        %v2340 = vadd.f32 %v2266, %v2276
        %v2341 = vadd.f32 %v2267, %v2277
        %v2342 = vadd.f32 %v2268, %v2278
        %v2343 = vadd.f32 %v2269, %v2279
        %v2344 = vadd.f32 %v2270, %v2276
        %v2345 = vadd.f32 %v2271, %v2277
        %v2346 = vadd.f32 %v2272, %v2278
        %v2347 = vadd.f32 %v2273, %v2279
        %v2348 = vmax.f32 %v2284, 0.0
        %v2349 = vmax.f32 %v2285, 0.0
        %v2350 = vmax.f32 %v2286, 0.0
        %v2351 = vmax.f32 %v2287, 0.0
        %v2352 = vmax.f32 %v2288, 0.0
        %v2353 = vmax.f32 %v2289, 0.0
        %v2354 = vmax.f32 %v2290, 0.0
        %v2355 = vmax.f32 %v2291, 0.0
        %v2356 = vmax.f32 %v2292, 0.0
        %v2357 = vmax.f32 %v2293, 0.0
        %v2358 = vmax.f32 %v2294, 0.0
        %v2359 = vmax.f32 %v2295, 0.0
        %v2360 = vmax.f32 %v2296, 0.0
        %v2361 = vmax.f32 %v2297, 0.0
        %v2362 = vmax.f32 %v2298, 0.0
        %v2363 = vmax.f32 %v2299, 0.0
        %v2364 = vmax.f32 %v2300, 0.0
        %v2365 = vmax.f32 %v2301, 0.0
        %v2366 = vmax.f32 %v2302, 0.0
        %v2367 = vmax.f32 %v2303, 0.0
        %v2368 = vmax.f32 %v2304, 0.0
        %v2369 = vmax.f32 %v2305, 0.0
        %v2370 = vmax.f32 %v2306, 0.0
        %v2371 = vmax.f32 %v2307, 0.0
        %v2372 = vmax.f32 %v2308, 0.0
        %v2373 = vmax.f32 %v2309, 0.0
        %v2374 = vmax.f32 %v2310, 0.0
        %v2375 = vmax.f32 %v2311, 0.0
        %v2376 = vmax.f32 %v2312, 0.0
        %v2377 = vmax.f32 %v2313, 0.0
        %v2378 = vmax.f32 %v2314, 0.0
        %v2379 = vmax.f32 %v2315, 0.0
        %v2380 = vmax.f32 %v2316, 0.0
        %v2381 = vmax.f32 %v2317, 0.0
        %v2382 = vmax.f32 %v2318, 0.0
        %v2383 = vmax.f32 %v2319, 0.0
        %v2384 = vmax.f32 %v2320, 0.0
        %v2385 = vmax.f32 %v2321, 0.0
        %v2386 = vmax.f32 %v2322, 0.0
        %v2387 = vmax.f32 %v2323, 0.0
        %v2388 = vmax.f32 %v2324, 0.0
        %v2389 = vmax.f32 %v2325, 0.0
        %v2390 = vmax.f32 %v2326, 0.0
        %v2391 = vmax.f32 %v2327, 0.0
        %v2392 = vmax.f32 %v2328, 0.0
        %v2393 = vmax.f32 %v2329, 0.0
        %v2394 = vmax.f32 %v2330, 0.0
        %v2395 = vmax.f32 %v2331, 0.0
        %v2396 = vmax.f32 %v2332, 0.0
        %v2397 = vmax.f32 %v2333, 0.0
        %v2398 = vmax.f32 %v2334, 0.0
        %v2399 = vmax.f32 %v2335, 0.0
        %v2400 = vmax.f32 %v2336, 0.0
        %v2401 = vmax.f32 %v2337, 0.0
        %v2402 = vmax.f32 %v2338, 0.0
        %v2403 = vmax.f32 %v2339, 0.0
        %v2404 = vmax.f32 %v2340, 0.0
        %v2405 = vmax.f32 %v2341, 0.0
        %v2406 = vmax.f32 %v2342, 0.0
        %v2407 = vmax.f32 %v2343, 0.0
        %v2408 = vmax.f32 %v2344, 0.0
        %v2409 = vmax.f32 %v2345, 0.0
        %v2410 = vmax.f32 %v2346, 0.0
        %v2411 = vmax.f32 %v2347, 0.0
        %v2412 = vld [vmem:[%s12] sm:$0xff]
        %v2413 = vld [vmem:[%s12 + $0x8] sm:$0xff]
        %v2414 = vld [vmem:[%s12 + $0x10] sm:$0xff]
        %v2415 = vld [vmem:[%s12 + $0x18] sm:$0xff]
        %v2416 = vld [vmem:[%s12 + $0x20] sm:$0xff]
        %v2417 = vld [vmem:[%s12 + $0x28] sm:$0xff]
        %v2418 = vld [vmem:[%s12 + $0x30] sm:$0xff]
        %v2419 = vld [vmem:[%s12 + $0x38] sm:$0xff]
        %v2420 = vld [vmem:[%s12 + $0x40] sm:$0xff]
        %v2421 = vld [vmem:[%s12 + $0x48] sm:$0xff]
        %v2422 = vld [vmem:[%s12 + $0x50] sm:$0xff]
        %v2423 = vld [vmem:[%s12 + $0x58] sm:$0xff]
        %v2424 = vld [vmem:[%s12 + $0x60] sm:$0xff]
        %v2425 = vld [vmem:[%s12 + $0x68] sm:$0xff]
        %v2426 = vld [vmem:[%s12 + $0x70] sm:$0xff]
        %v2427 = vld [vmem:[%s12 + $0x78] sm:$0xff]
        %v2428 = vld [vmem:[%s12 + $0x80] sm:$0xff]
        %v2429 = vld [vmem:[%s12 + $0x88] sm:$0xff]
        %v2430 = vld [vmem:[%s12 + $0x90] sm:$0xff]
        %v2431 = vld [vmem:[%s12 + $0x98] sm:$0xff]
        %v2432 = vld [vmem:[%s12 + $0xa0] sm:$0xff]
        %v2433 = vld [vmem:[%s12 + $0xa8] sm:$0xff]
        %v2434 = vld [vmem:[%s12 + $0xb0] sm:$0xff]
        %v2435 = vld [vmem:[%s12 + $0xb8] sm:$0xff]
        %v2436 = vld [vmem:[%s12 + $0xc0] sm:$0xff]
        %v2437 = vld [vmem:[%s12 + $0xc8] sm:$0xff]
        %v2438 = vld [vmem:[%s12 + $0xd0] sm:$0xff]
        %v2439 = vld [vmem:[%s12 + $0xd8] sm:$0xff]
        %v2440 = vld [vmem:[%s12 + $0xe0] sm:$0xff]
        %v2441 = vld [vmem:[%s12 + $0xe8] sm:$0xff]
        %v2442 = vld [vmem:[%s12 + $0xf0] sm:$0xff]
        %v2443 = vld [vmem:[%s12 + $0xf8] sm:$0xff]
        %v2444 = vld [vmem:[%s12 + $0x100] sm:$0xff]
        %v2445 = vld [vmem:[%s12 + $0x108] sm:$0xff]
        %v2446 = vld [vmem:[%s12 + $0x110] sm:$0xff]
        %v2447 = vld [vmem:[%s12 + $0x118] sm:$0xff]
        %v2448 = vld [vmem:[%s12 + $0x120] sm:$0xff]
        %v2449 = vld [vmem:[%s12 + $0x128] sm:$0xff]
        %v2450 = vld [vmem:[%s12 + $0x130] sm:$0xff]
        %v2451 = vld [vmem:[%s12 + $0x138] sm:$0xff]
        %v2452 = vld [vmem:[%s12 + $0x140] sm:$0xff]
        %v2453 = vld [vmem:[%s12 + $0x148] sm:$0xff]
        %v2454 = vld [vmem:[%s12 + $0x150] sm:$0xff]
        %v2455 = vld [vmem:[%s12 + $0x158] sm:$0xff]
        %v2456 = vld [vmem:[%s12 + $0x160] sm:$0xff]
        %v2457 = vld [vmem:[%s12 + $0x168] sm:$0xff]
        %v2458 = vld [vmem:[%s12 + $0x170] sm:$0xff]
        %v2459 = vld [vmem:[%s12 + $0x178] sm:$0xff]
        %v2460 = vld [vmem:[%s12 + $0x180] sm:$0xff]
        %v2461 = vld [vmem:[%s12 + $0x188] sm:$0xff]
        %v2462 = vld [vmem:[%s12 + $0x190] sm:$0xff]
        %v2463 = vld [vmem:[%s12 + $0x198] sm:$0xff]
        %v2464 = vld [vmem:[%s12 + $0x1a0] sm:$0xff]
        %v2465 = vld [vmem:[%s12 + $0x1a8] sm:$0xff]
        %v2466 = vld [vmem:[%s12 + $0x1b0] sm:$0xff]
        %v2467 = vld [vmem:[%s12 + $0x1b8] sm:$0xff]
        %v2468 = vld [vmem:[%s12 + $0x1c0] sm:$0xff]
        %v2469 = vld [vmem:[%s12 + $0x1c8] sm:$0xff]
        %v2470 = vld [vmem:[%s12 + $0x1d0] sm:$0xff]
        %v2471 = vld [vmem:[%s12 + $0x1d8] sm:$0xff]
        %v2472 = vld [vmem:[%s12 + $0x1e0] sm:$0xff]
        %v2473 = vld [vmem:[%s12 + $0x1e8] sm:$0xff]
        %v2474 = vld [vmem:[%s12 + $0x1f0] sm:$0xff]
        %v2475 = vld [vmem:[%s12 + $0x1f8] sm:$0xff]
        %v2476 = vld [vmem:[%s13] sm:$0x1]
        %v2478 = vperm.slane %v2476, 0
        %2480 = vmatpush.msra.mxu0 %v2427
        %2481 = vmatpush.msra.mxu0 %v2426
        %2482 = vmatpush.msra.mxu0 %v2425
        %2483 = vmatpush.msra.mxu0 %v2424
        %2484 = vmatpush.msra.mxu0 %v2423
        %2485 = vmatpush.msra.mxu0 %v2422
        %2486 = vmatpush.msra.mxu0 %v2421
        %2487 = vmatpush.msra.mxu0 %v2420
        %2488 = vmatpush.msra.mxu0 %v2419
        %2489 = vmatpush.msra.mxu0 %v2418
        %2490 = vmatpush.msra.mxu0 %v2417
        %2491 = vmatpush.msra.mxu0 %v2416
        %2492 = vmatpush.msra.mxu0 %v2415
        %2493 = vmatpush.msra.mxu0 %v2414
        %2494 = vmatpush.msra.mxu0 %v2413
        %2495 = vmatpush.msra.mxu0 %v2412
        %2496 = vmatmul.f32.gmra.mxu0 %v2348
        %v2497 = vpop.f32.mrf.mxu0
        %v2498 = vadd.f32 %v2478, %v2497
        %2499 = vmatmul.f32.gmra.mxu0 %v2352
        %v2500 = vpop.f32.mrf.mxu0
        %v2501 = vadd.f32 %v2478, %v2500
        %2502 = vmatmul.f32.gmra.mxu0 %v2356
        %v2503 = vpop.f32.mrf.mxu0
        %v2504 = vadd.f32 %v2478, %v2503
        %2505 = vmatmul.f32.gmra.mxu0 %v2360
        %v2506 = vpop.f32.mrf.mxu0
        %v2507 = vadd.f32 %v2478, %v2506
        %2508 = vmatmul.f32.gmra.mxu0 %v2364
        %v2509 = vpop.f32.mrf.mxu0
        %v2510 = vadd.f32 %v2478, %v2509
        %2511 = vmatmul.f32.gmra.mxu0 %v2368
        %v2512 = vpop.f32.mrf.mxu0
        %v2513 = vadd.f32 %v2478, %v2512
        %2514 = vmatmul.f32.gmra.mxu0 %v2372
        %v2515 = vpop.f32.mrf.mxu0
        %v2516 = vadd.f32 %v2478, %v2515
        %2517 = vmatmul.f32.gmra.mxu0 %v2376
        %v2518 = vpop.f32.mrf.mxu0
        %v2519 = vadd.f32 %v2478, %v2518
        %2520 = vmatmul.f32.gmra.mxu0 %v2380
        %v2521 = vpop.f32.mrf.mxu0
        %v2522 = vadd.f32 %v2478, %v2521
        %2523 = vmatmul.f32.gmra.mxu0 %v2384
        %v2524 = vpop.f32.mrf.mxu0
        %v2525 = vadd.f32 %v2478, %v2524
        %2526 = vmatmul.f32.gmra.mxu0 %v2388
        %v2527 = vpop.f32.mrf.mxu0
        %v2528 = vadd.f32 %v2478, %v2527
        %2529 = vmatmul.f32.gmra.mxu0 %v2392
        %v2530 = vpop.f32.mrf.mxu0
        %v2531 = vadd.f32 %v2478, %v2530
        %2532 = vmatmul.f32.gmra.mxu0 %v2396
        %v2533 = vpop.f32.mrf.mxu0
        %v2534 = vadd.f32 %v2478, %v2533
        %2535 = vmatmul.f32.gmra.mxu0 %v2400
        %v2536 = vpop.f32.mrf.mxu0
        %v2537 = vadd.f32 %v2478, %v2536
        %2538 = vmatmul.f32.gmra.mxu0 %v2404
        %v2539 = vpop.f32.mrf.mxu0
        %v2540 = vadd.f32 %v2478, %v2539
        %2541 = vmatmul.f32.gmra.mxu0 %v2408
        %v2542 = vpop.f32.mrf.mxu0
        %v2543 = vadd.f32 %v2478, %v2542
        %2544 = vdwg.mxu0
        %2545 = vmatpush.msra.mxu0 %v2443
        %2546 = vmatpush.msra.mxu0 %v2442
        %2547 = vmatpush.msra.mxu0 %v2441
        %2548 = vmatpush.msra.mxu0 %v2440
        %2549 = vmatpush.msra.mxu0 %v2439
        %2550 = vmatpush.msra.mxu0 %v2438
        %2551 = vmatpush.msra.mxu0 %v2437
        %2552 = vmatpush.msra.mxu0 %v2436
        %2553 = vmatpush.msra.mxu0 %v2435
        %2554 = vmatpush.msra.mxu0 %v2434
        %2555 = vmatpush.msra.mxu0 %v2433
        %2556 = vmatpush.msra.mxu0 %v2432
        %2557 = vmatpush.msra.mxu0 %v2431
        %2558 = vmatpush.msra.mxu0 %v2430
        %2559 = vmatpush.msra.mxu0 %v2429
        %2560 = vmatpush.msra.mxu0 %v2428
        %2561 = vmatmul.f32.gmra.mxu0 %v2349
        %v2562 = vpop.f32.mrf.mxu0
        %v2563 = vadd.f32 %v2498, %v2562
        %2564 = vmatmul.f32.gmra.mxu0 %v2353
        %v2565 = vpop.f32.mrf.mxu0
        %v2566 = vadd.f32 %v2501, %v2565
        %2567 = vmatmul.f32.gmra.mxu0 %v2357
        %v2568 = vpop.f32.mrf.mxu0
        %v2569 = vadd.f32 %v2504, %v2568
        %2570 = vmatmul.f32.gmra.mxu0 %v2361
        %v2571 = vpop.f32.mrf.mxu0
        %v2572 = vadd.f32 %v2507, %v2571
        %2573 = vmatmul.f32.gmra.mxu0 %v2365
        %v2574 = vpop.f32.mrf.mxu0
        %v2575 = vadd.f32 %v2510, %v2574
        %2576 = vmatmul.f32.gmra.mxu0 %v2369
        %v2577 = vpop.f32.mrf.mxu0
        %v2578 = vadd.f32 %v2513, %v2577
        %2579 = vmatmul.f32.gmra.mxu0 %v2373
        %v2580 = vpop.f32.mrf.mxu0
        %v2581 = vadd.f32 %v2516, %v2580
        %2582 = vmatmul.f32.gmra.mxu0 %v2377
        %v2583 = vpop.f32.mrf.mxu0
        %v2584 = vadd.f32 %v2519, %v2583
        %2585 = vmatmul.f32.gmra.mxu0 %v2381
        %v2586 = vpop.f32.mrf.mxu0
        %v2587 = vadd.f32 %v2522, %v2586
        %2588 = vmatmul.f32.gmra.mxu0 %v2385
        %v2589 = vpop.f32.mrf.mxu0
        %v2590 = vadd.f32 %v2525, %v2589
        %2591 = vmatmul.f32.gmra.mxu0 %v2389
        %v2592 = vpop.f32.mrf.mxu0
        %v2593 = vadd.f32 %v2528, %v2592
        %2594 = vmatmul.f32.gmra.mxu0 %v2393
        %v2595 = vpop.f32.mrf.mxu0
        %v2596 = vadd.f32 %v2531, %v2595
        %2597 = vmatmul.f32.gmra.mxu0 %v2397
        %v2598 = vpop.f32.mrf.mxu0
        %v2599 = vadd.f32 %v2534, %v2598
        %2600 = vmatmul.f32.gmra.mxu0 %v2401
        %v2601 = vpop.f32.mrf.mxu0
        %v2602 = vadd.f32 %v2537, %v2601
        %2603 = vmatmul.f32.gmra.mxu0 %v2405
        %v2604 = vpop.f32.mrf.mxu0
        %v2605 = vadd.f32 %v2540, %v2604
        %2606 = vmatmul.f32.gmra.mxu0 %v2409
        %v2607 = vpop.f32.mrf.mxu0
        %v2608 = vadd.f32 %v2543, %v2607
        %2609 = vdwg.mxu0
        %2610 = vmatpush.msra.mxu0 %v2459
        %2611 = vmatpush.msra.mxu0 %v2458
        %2612 = vmatpush.msra.mxu0 %v2457
        %2613 = vmatpush.msra.mxu0 %v2456
        %2614 = vmatpush.msra.mxu0 %v2455
        %2615 = vmatpush.msra.mxu0 %v2454
        %2616 = vmatpush.msra.mxu0 %v2453
        %2617 = vmatpush.msra.mxu0 %v2452
        %2618 = vmatpush.msra.mxu0 %v2451
        %2619 = vmatpush.msra.mxu0 %v2450
        %2620 = vmatpush.msra.mxu0 %v2449
        %2621 = vmatpush.msra.mxu0 %v2448
        %2622 = vmatpush.msra.mxu0 %v2447
        %2623 = vmatpush.msra.mxu0 %v2446
        %2624 = vmatpush.msra.mxu0 %v2445
        %2625 = vmatpush.msra.mxu0 %v2444
        %2626 = vmatmul.f32.gmra.mxu0 %v2350
        %v2627 = vpop.f32.mrf.mxu0
        %v2628 = vadd.f32 %v2563, %v2627
        %2629 = vmatmul.f32.gmra.mxu0 %v2354
        %v2630 = vpop.f32.mrf.mxu0
        %v2631 = vadd.f32 %v2566, %v2630
        %2632 = vmatmul.f32.gmra.mxu0 %v2358
        %v2633 = vpop.f32.mrf.mxu0
        %v2634 = vadd.f32 %v2569, %v2633
        %2635 = vmatmul.f32.gmra.mxu0 %v2362
        %v2636 = vpop.f32.mrf.mxu0
        %v2637 = vadd.f32 %v2572, %v2636
        %2638 = vmatmul.f32.gmra.mxu0 %v2366
        %v2639 = vpop.f32.mrf.mxu0
        %v2640 = vadd.f32 %v2575, %v2639
        %2641 = vmatmul.f32.gmra.mxu0 %v2370
        %v2642 = vpop.f32.mrf.mxu0
        %v2643 = vadd.f32 %v2578, %v2642
        %2644 = vmatmul.f32.gmra.mxu0 %v2374
        %v2645 = vpop.f32.mrf.mxu0
        %v2646 = vadd.f32 %v2581, %v2645
        %2647 = vmatmul.f32.gmra.mxu0 %v2378
        %v2648 = vpop.f32.mrf.mxu0
        %v2649 = vadd.f32 %v2584, %v2648
        %2650 = vmatmul.f32.gmra.mxu0 %v2382
        %v2651 = vpop.f32.mrf.mxu0
        %v2652 = vadd.f32 %v2587, %v2651
        %2653 = vmatmul.f32.gmra.mxu0 %v2386
        %v2654 = vpop.f32.mrf.mxu0
        %v2655 = vadd.f32 %v2590, %v2654
        %2656 = vmatmul.f32.gmra.mxu0 %v2390
        %v2657 = vpop.f32.mrf.mxu0
        %v2658 = vadd.f32 %v2593, %v2657
        %2659 = vmatmul.f32.gmra.mxu0 %v2394
        %v2660 = vpop.f32.mrf.mxu0
        %v2661 = vadd.f32 %v2596, %v2660
        %2662 = vmatmul.f32.gmra.mxu0 %v2398
        %v2663 = vpop.f32.mrf.mxu0
        %v2664 = vadd.f32 %v2599, %v2663
        %2665 = vmatmul.f32.gmra.mxu0 %v2402
        %v2666 = vpop.f32.mrf.mxu0
        %v2667 = vadd.f32 %v2602, %v2666
        %2668 = vmatmul.f32.gmra.mxu0 %v2406
        %v2669 = vpop.f32.mrf.mxu0
        %v2670 = vadd.f32 %v2605, %v2669
        %2671 = vmatmul.f32.gmra.mxu0 %v2410
        %v2672 = vpop.f32.mrf.mxu0
        %v2673 = vadd.f32 %v2608, %v2672
        %2674 = vdwg.mxu0
        %2675 = vmatpush.msra.mxu0 %v2475
        %2676 = vmatpush.msra.mxu0 %v2474
        %2677 = vmatpush.msra.mxu0 %v2473
        %2678 = vmatpush.msra.mxu0 %v2472
        %2679 = vmatpush.msra.mxu0 %v2471
        %2680 = vmatpush.msra.mxu0 %v2470
        %2681 = vmatpush.msra.mxu0 %v2469
        %2682 = vmatpush.msra.mxu0 %v2468
        %2683 = vmatpush.msra.mxu0 %v2467
        %2684 = vmatpush.msra.mxu0 %v2466
        %2685 = vmatpush.msra.mxu0 %v2465
        %2686 = vmatpush.msra.mxu0 %v2464
        %2687 = vmatpush.msra.mxu0 %v2463
        %2688 = vmatpush.msra.mxu0 %v2462
        %2689 = vmatpush.msra.mxu0 %v2461
        %2690 = vmatpush.msra.mxu0 %v2460
        %2691 = vmatmul.f32.gmra.mxu0 %v2351
        %v2692 = vpop.f32.mrf.mxu0
        %v2693 = vadd.f32 %v2628, %v2692
        %2694 = vmatmul.f32.gmra.mxu0 %v2355
        %v2695 = vpop.f32.mrf.mxu0
        %v2696 = vadd.f32 %v2631, %v2695
        %2697 = vmatmul.f32.gmra.mxu0 %v2359
        %v2698 = vpop.f32.mrf.mxu0
        %v2699 = vadd.f32 %v2634, %v2698
        %2700 = vmatmul.f32.gmra.mxu0 %v2363
        %v2701 = vpop.f32.mrf.mxu0
        %v2702 = vadd.f32 %v2637, %v2701
        %2703 = vmatmul.f32.gmra.mxu0 %v2367
        %v2704 = vpop.f32.mrf.mxu0
        %v2705 = vadd.f32 %v2640, %v2704
        %2706 = vmatmul.f32.gmra.mxu0 %v2371
        %v2707 = vpop.f32.mrf.mxu0
        %v2708 = vadd.f32 %v2643, %v2707
        %2709 = vmatmul.f32.gmra.mxu0 %v2375
        %v2710 = vpop.f32.mrf.mxu0
        %v2711 = vadd.f32 %v2646, %v2710
        %2712 = vmatmul.f32.gmra.mxu0 %v2379
        %v2713 = vpop.f32.mrf.mxu0
        %v2714 = vadd.f32 %v2649, %v2713
        %2715 = vmatmul.f32.gmra.mxu0 %v2383
        %v2716 = vpop.f32.mrf.mxu0
        %v2717 = vadd.f32 %v2652, %v2716
        %2718 = vmatmul.f32.gmra.mxu0 %v2387
        %v2719 = vpop.f32.mrf.mxu0
        %v2720 = vadd.f32 %v2655, %v2719
        %2721 = vmatmul.f32.gmra.mxu0 %v2391
        %v2722 = vpop.f32.mrf.mxu0
        %v2723 = vadd.f32 %v2658, %v2722
        %2724 = vmatmul.f32.gmra.mxu0 %v2395
        %v2725 = vpop.f32.mrf.mxu0
        %v2726 = vadd.f32 %v2661, %v2725
        %2727 = vmatmul.f32.gmra.mxu0 %v2399
        %v2728 = vpop.f32.mrf.mxu0
        %v2729 = vadd.f32 %v2664, %v2728
        %2730 = vmatmul.f32.gmra.mxu0 %v2403
        %v2731 = vpop.f32.mrf.mxu0
        %v2732 = vadd.f32 %v2667, %v2731
        %2733 = vmatmul.f32.gmra.mxu0 %v2407
        %v2734 = vpop.f32.mrf.mxu0
        %v2735 = vadd.f32 %v2670, %v2734
        %2736 = vmatmul.f32.gmra.mxu0 %v2411
        %v2737 = vpop.f32.mrf.mxu0
        %v2738 = vadd.f32 %v2673, %v2737
        %2739 = vdwg.mxu0
        %vm2740 = vcmask 523264
        %v2741 = vsel %vm2740, %v2693, -inf
        %v2742 = vsel %vm2740, %v2696, -inf
        %v2743 = vmax.f32 %v2741, %v2742
        %v2744 = vrot.slane %v2743, 4
        %v2745 = vmax.f32 %v2743, %v2744
        %v2746 = vrot.slane %v2745, 2
        %v2747 = vmax.f32 %v2745, %v2746
        %v2748 = vrot.slane %v2747, 1
        %v2749 = vmax.f32 %v2747, %v2748
        %v2750 = vsel %vm2740, %v2699, -inf
        %v2751 = vsel %vm2740, %v2702, -inf
        %v2752 = vmax.f32 %v2750, %v2751
        %v2753 = vrot.slane %v2752, 4
        %v2754 = vmax.f32 %v2752, %v2753
        %v2755 = vrot.slane %v2754, 2
        %v2756 = vmax.f32 %v2754, %v2755
        %v2757 = vrot.slane %v2756, 1
        %v2758 = vmax.f32 %v2756, %v2757
        %v2759 = vsel %vm2740, %v2705, -inf
        %v2760 = vsel %vm2740, %v2708, -inf
        %v2761 = vmax.f32 %v2759, %v2760
        %v2762 = vrot.slane %v2761, 4
        %v2763 = vmax.f32 %v2761, %v2762
        %v2764 = vrot.slane %v2763, 2
        %v2765 = vmax.f32 %v2763, %v2764
        %v2766 = vrot.slane %v2765, 1
        %v2767 = vmax.f32 %v2765, %v2766
        %v2768 = vsel %vm2740, %v2711, -inf
        %v2769 = vsel %vm2740, %v2714, -inf
        %v2770 = vmax.f32 %v2768, %v2769
        %v2771 = vrot.slane %v2770, 4
        %v2772 = vmax.f32 %v2770, %v2771
        %v2773 = vrot.slane %v2772, 2
        %v2774 = vmax.f32 %v2772, %v2773
        %v2775 = vrot.slane %v2774, 1
        %v2776 = vmax.f32 %v2774, %v2775
        %v2777 = vsel %vm2740, %v2717, -inf
        %v2778 = vsel %vm2740, %v2720, -inf
        %v2779 = vmax.f32 %v2777, %v2778
        %v2780 = vrot.slane %v2779, 4
        %v2781 = vmax.f32 %v2779, %v2780
        %v2782 = vrot.slane %v2781, 2
        %v2783 = vmax.f32 %v2781, %v2782
        %v2784 = vrot.slane %v2783, 1
        %v2785 = vmax.f32 %v2783, %v2784
        %v2786 = vsel %vm2740, %v2723, -inf
        %v2787 = vsel %vm2740, %v2726, -inf
        %v2788 = vmax.f32 %v2786, %v2787
        %v2789 = vrot.slane %v2788, 4
        %v2790 = vmax.f32 %v2788, %v2789
        %v2791 = vrot.slane %v2790, 2
        %v2792 = vmax.f32 %v2790, %v2791
        %v2793 = vrot.slane %v2792, 1
        %v2794 = vmax.f32 %v2792, %v2793
        %v2795 = vsel %vm2740, %v2729, -inf
        %v2796 = vsel %vm2740, %v2732, -inf
        %v2797 = vmax.f32 %v2795, %v2796
        %v2798 = vrot.slane %v2797, 4
        %v2799 = vmax.f32 %v2797, %v2798
        %v2800 = vrot.slane %v2799, 2
        %v2801 = vmax.f32 %v2799, %v2800
        %v2802 = vrot.slane %v2801, 1
        %v2803 = vmax.f32 %v2801, %v2802
        %v2804 = vsel %vm2740, %v2735, -inf
        %v2805 = vsel %vm2740, %v2738, -inf
        %v2806 = vmax.f32 %v2804, %v2805
        %v2807 = vrot.slane %v2806, 4
        %v2808 = vmax.f32 %v2806, %v2807
        %v2809 = vrot.slane %v2808, 2
        %v2810 = vmax.f32 %v2808, %v2809
        %v2811 = vrot.slane %v2810, 1
        %v2812 = vmax.f32 %v2810, %v2811
        %v2821 = vsel %vm1119, %v2758, %v2749
        %v2822 = vsel %vm1121, %v2767, %v2821
        %v2823 = vsel %vm1123, %v2776, %v2822
        %v2824 = vsel %vm1125, %v2785, %v2823
        %v2825 = vsel %vm1127, %v2794, %v2824
        %v2826 = vsel %vm1129, %v2803, %v2825
        %v2827 = vsel %vm1131, %v2812, %v2826
        %2829 = vst.msk [vmem:[%s499] sm:$0xff] %vm2740, %v2827
        %p2830 = scmp.lt.s32.totalorder %s27, 1
        %s2831 = scalar_select %p2830, %s27, 1
        %s2832 = smul.addr %s2831, 8
        %s2833 = scalar_lea.vmem %s14, %s2832
        // Predicated region
        $region85: #{forward.2} parent=75 // pred_check
          %p2834 = pneg %p344
        $region86: #{forward.2} parent=75 // pred_check_branch
          %2836 = sbr.rel (%p2834) target = $region88
        $region87: #{forward.2} parent=75 // pred_region
          _
        $region88: #{forward.2} parent=75 // pred_fallthru
          _
      $region76: #{forward.2} parent=5 // pred_fallthru
        _
      %p2837 = scmp.le.s32.totalorder 2, %s22
      // Predicated region
      $region89: #{forward.2} parent=5 // pred_check
        %p2838 = pneg %p2837
      $region90: #{forward.2} parent=5 // pred_check_branch
        %2840 = sbr.rel (%p2838) target = $region92
      $region91: #{forward.2} parent=5 // pred_region
        %s2841 = ssub.s32 %s22, 2
        // Predicated region
        $region93: #{forward.2} parent=91 // pred_check
          %p2842 = pneg %p350
        $region94: #{forward.2} parent=91 // pred_check_branch
          %2844 = sbr.rel (%p2842) target = $region96
        $region95: #{forward.2} parent=91 // pred_region
          %p2845 = scmp.lt.s32.totalorder %s28, 1
          %s2846 = scalar_select %p2845, %s28, 1
          %s2847 = smul.addr %s2846, 8
          %s2848 = scalar_lea.vmem %s14, %s2847
        $region96: #{forward.2} parent=91 // pred_fallthru
          _
      $region92: #{forward.2} parent=5 // pred_fallthru
        _
    $region6: #{forward.2} parent=1 // loop_footer
      %s26 = sadd.s32 1, %s22
    $region7: #{forward.2} parent=1 // loop_footer_branch
      %21 = sbr.rel target = $region3
    $region8: #{forward.2} parent=1 // loop_exit
      _
    %2849 = vsyncpa [#allocation3], 1
    %s2850 = scalar_lea.sflag [#allocation3], 1
    %2851 = vsyncpa %s2850, 1
    %2852 = vsyncpa [#allocation5], 1

// kernel: forward.3
$region0: #{forward.3}
  #allocation0 [shape = 'u32[]', space=smem, size = 0x4, offset = 0x4, fixed_abs, tag = 'smem constant byte address 0x4 - core index']
  #allocation1 [shape = 'u32[72,128]{1,0:T(1,128)}', space=vmem, size = 0x9000, scoped, tag = 'internal scratch']
  %s0 = inlined_call_operand.vmem [shape: f32[2,4,64], index: 0, kind: input, shape index: {}]
  %s1 = inlined_call_operand.vmem [shape: f32[2,4,5], index: 1, kind: input, shape index: {}]
  %s2 = inlined_call_operand.vmem [shape: f32[5,128], index: 2, kind: input, shape index: {}]
  %s3 = inlined_call_operand.vmem [shape: f32[1,128], index: 3, kind: input, shape index: {}]
  %s4 = inlined_call_operand.vmem [shape: f32[128,64], index: 4, kind: input, shape index: {}]
  %s5 = inlined_call_operand.vmem [shape: f32[1,64], index: 5, kind: input, shape index: {}]
  %s6 = inlined_call_operand.vmem [shape: f32[2,1,64], index: 6, kind: input, shape index: {}]
  %s7 = inlined_call_operand.vmem [shape: f32[2,1,64], index: 7, kind: input, shape index: {}]
  %s8 = inlined_call_operand.vmem [shape: f32[2,64,192], index: 8, kind: input, shape index: {}]
  %s9 = inlined_call_operand.vmem [shape: f32[2,64,64], index: 9, kind: input, shape index: {}]
  %s10 = inlined_call_operand.vmem [shape: f32[2,1,64], index: 10, kind: input, shape index: {}]
  %s11 = inlined_call_operand.vmem [shape: f32[2,1,64], index: 11, kind: input, shape index: {}]
  %s12 = inlined_call_operand.vmem [shape: f32[2,1,64], index: 12, kind: input, shape index: {}]
  %s13 = inlined_call_operand.vmem [shape: f32[2,64,256], index: 13, kind: input, shape index: {}]
  %s14 = inlined_call_operand.vmem [shape: f32[2,1,256], index: 14, kind: input, shape index: {}]
  %s15 = inlined_call_operand.vmem [shape: f32[2,256,64], index: 15, kind: input, shape index: {}]
  %s16 = inlined_call_operand.vmem [shape: f32[2,1,64], index: 16, kind: input, shape index: {}]
  %s17 = inlined_call_operand.vmem [shape: f32[1,64], index: 17, kind: input, shape index: {}]
  %s18 = inlined_call_operand.vmem [shape: f32[1,64], index: 18, kind: input, shape index: {}]
  %s19 = inlined_call_operand.hbm [shape: f32[2,4,64], index: 19, kind: output, shape index: {}]
  %s20 = sld [smem:[#allocation0]]
  $region109: #{forward.3} parent=0
    _
  %s22 = ssub.s32 1, %s20
  %s23 = scalar_select 0, %s22, %s20
  $region1: #{forward.3} parent=0
    #allocation2 [shape = 'u8[4096]{0}', space=vmem, size = 0x1000, scoped, tag = 'output window, operand 0']
    #allocation3 [shape = 's32[2]{0}', space=sflag, size = 0x8, scoped, tag = 'scoped memory for forward.3']
    %24 = vsyncpa [#allocation3], 0
    %s25 = scalar_lea.sflag [#allocation3], 1
    %26 = vsyncpa %s25, 0
    loop: start=0, step=1, limit=4
    $region2: #{forward.3} parent=1 // loop_pre_header
      _
    $region3: #{forward.3} parent=1 // loop_header
      %s28 = sphi 0, %s32
      %p29 = scmp.ge.s32.totalorder %s28, 4
      %s38 = sphi 0, %s40
      %s41 = sphi 0, %s38
      %s42 = sphi 0, %s41
      %s58 = sphi 0, %s42
      %s64 = sphi 0, %s66
      %s67 = sphi 0, %s64
      %s68 = sphi 0, %s67
      %s84 = sphi 0, %s68
      %s88 = sphi 0, %s88
      %s90 = sphi 0, %s88
      %s91 = sphi 0, %s90
      %s105 = sphi 0, %s91
      %s109 = sphi 0, %s109
      %s111 = sphi 0, %s109
      %s112 = sphi 0, %s111
      %s126 = sphi 0, %s112
      %s130 = sphi 0, %s130
      %s132 = sphi 0, %s130
      %s133 = sphi 0, %s132
      %s147 = sphi 0, %s133
      %s151 = sphi 0, %s151
      %s153 = sphi 0, %s151
      %s154 = sphi 0, %s153
      %s168 = sphi 0, %s154
      %s172 = sphi 0, %s172
      %s174 = sphi 0, %s172
      %s175 = sphi 0, %s174
      %s189 = sphi 0, %s175
      %s193 = sphi 0, %s193
      %s195 = sphi 0, %s193
      %s196 = sphi 0, %s195
      %s210 = sphi 0, %s196
      %s214 = sphi 0, %s214
      %s216 = sphi 0, %s214
      %s217 = sphi 0, %s216
      %s231 = sphi 0, %s217
      %s235 = sphi 0, %s235
      %s237 = sphi 0, %s235
      %s238 = sphi 0, %s237
      %s252 = sphi 0, %s238
      %s256 = sphi 0, %s256
      %s258 = sphi 0, %s256
      %s259 = sphi 0, %s258
      %s273 = sphi 0, %s259
      %s277 = sphi 0, %s277
      %s279 = sphi 0, %s277
      %s280 = sphi 0, %s279
      %s294 = sphi 0, %s280
      %s298 = sphi 0, %s298
      %s300 = sphi 0, %s298
      %s301 = sphi 0, %s300
      %s315 = sphi 0, %s301
      %s319 = sphi 0, %s319
      %s321 = sphi 0, %s319
      %s322 = sphi 0, %s321
      %s336 = sphi 0, %s322
      %s340 = sphi 0, %s340
      %s342 = sphi 0, %s340
      %s343 = sphi 0, %s342
      %s357 = sphi 0, %s343
      %s361 = sphi 0, %s361
      %s363 = sphi 0, %s361
      %s364 = sphi 0, %s363
      %s378 = sphi 0, %s364
      %s382 = sphi 0, %s382
      %s384 = sphi 0, %s382
      %s385 = sphi 0, %s384
      %s399 = sphi 0, %s385
      %s403 = sphi 0, %s403
      %s405 = sphi 0, %s403
      %s406 = sphi 0, %s405
      %s420 = sphi 0, %s406
      %s424 = sphi 0, %s424
      %s426 = sphi 0, %s424
      %s427 = sphi 0, %s426
      %s441 = sphi 0, %s427
      %s447 = sphi 0, %s449
      %s450 = sphi 0, %s447
      %s451 = sphi 0, %s450
      %s467 = sphi 0, %s451
    $region4: #{forward.3} parent=1 // loop_header_branch
      %31 = sbr.rel (%p29) target = $region8
    $region5: #{forward.3} parent=1 // loop_body
      %s33 = ssub.s32 %s28, 1
      %s34 = ssub.s32 %s28, 2
      %s35 = sadd.s32 %s28, 1
      %s36 = ssub.s32 %s28, %s35
      %p37 = scmp.eq.s32.totalorder %s36, 0
      %s39 = sadd.s32 %s38, 1
      %s40 = scalar_select %p37, %s38, %s39
      %p43 = pneg %p37
      %p44 = scmp.eq.s32.totalorder %s28, 1
      %p45 = por %p43, %p44
      %p46 = scmp.ne.s32.totalorder %s38, %s41
      %p47 = scmp.eq.s32.totalorder %s28, 0
      %p48 = por %p46, %p47
      %p49 = scmp.ne.s32.totalorder %s38, %s41
      %p50 = scmp.eq.s32.totalorder %s33, 1
      %p51 = por %p49, %p50
      %p52 = scmp.ne.s32.totalorder %s41, %s42
      %p53 = scmp.eq.s32.totalorder %s33, 0
      %p54 = por %p52, %p53
      %p55 = scmp.ne.s32.totalorder %s41, %s42
      %p56 = scmp.eq.s32.totalorder %s34, 1
      %p57 = por %p55, %p56
      %p59 = scmp.ne.s32.totalorder %s42, %s58
      %p60 = scmp.eq.s32.totalorder %s34, 0
      %p61 = por %p59, %p60
      %s62 = ssub.s32 %s28, %s35
      %p63 = scmp.eq.s32.totalorder %s62, 0
      %s65 = sadd.s32 %s64, 1
      %s66 = scalar_select %p63, %s64, %s65
      %p69 = pneg %p63
      %p70 = scmp.eq.s32.totalorder %s28, 1
      %p71 = por %p69, %p70
      %p72 = scmp.ne.s32.totalorder %s64, %s67
      %p73 = scmp.eq.s32.totalorder %s28, 0
      %p74 = por %p72, %p73
      %p75 = scmp.ne.s32.totalorder %s64, %s67
      %p76 = scmp.eq.s32.totalorder %s33, 1
      %p77 = por %p75, %p76
      %p78 = scmp.ne.s32.totalorder %s67, %s68
      %p79 = scmp.eq.s32.totalorder %s33, 0
      %p80 = por %p78, %p79
      %p81 = scmp.ne.s32.totalorder %s67, %s68
      %p82 = scmp.eq.s32.totalorder %s34, 1
      %p83 = por %p81, %p82
      %p85 = scmp.ne.s32.totalorder %s68, %s84
      %p86 = scmp.eq.s32.totalorder %s34, 0
      %p87 = por %p85, %p86
      %s89 = sadd.s32 %s88, 1
      %p92 = scmp.eq.s32.totalorder %s28, 1
      %p93 = scmp.ne.s32.totalorder %s88, %s90
      %p94 = scmp.eq.s32.totalorder %s28, 0
      %p95 = por %p93, %p94
      %p96 = scmp.ne.s32.totalorder %s88, %s90
      %p97 = scmp.eq.s32.totalorder %s33, 1
      %p98 = por %p96, %p97
      %p99 = scmp.ne.s32.totalorder %s90, %s91
      %p100 = scmp.eq.s32.totalorder %s33, 0
      %p101 = por %p99, %p100
      %p102 = scmp.ne.s32.totalorder %s90, %s91
      %p103 = scmp.eq.s32.totalorder %s34, 1
      %p104 = por %p102, %p103
      %p106 = scmp.ne.s32.totalorder %s91, %s105
      %p107 = scmp.eq.s32.totalorder %s34, 0
      %p108 = por %p106, %p107
      %s110 = sadd.s32 %s109, 1
      %p113 = scmp.eq.s32.totalorder %s28, 1
      %p114 = scmp.ne.s32.totalorder %s109, %s111
      %p115 = scmp.eq.s32.totalorder %s28, 0
      %p116 = por %p114, %p115
      %p117 = scmp.ne.s32.totalorder %s109, %s111
      %p118 = scmp.eq.s32.totalorder %s33, 1
      %p119 = por %p117, %p118
      %p120 = scmp.ne.s32.totalorder %s111, %s112
      %p121 = scmp.eq.s32.totalorder %s33, 0
      %p122 = por %p120, %p121
      %p123 = scmp.ne.s32.totalorder %s111, %s112
      %p124 = scmp.eq.s32.totalorder %s34, 1
      %p125 = por %p123, %p124
      %p127 = scmp.ne.s32.totalorder %s112, %s126
      %p128 = scmp.eq.s32.totalorder %s34, 0
      %p129 = por %p127, %p128
      %s131 = sadd.s32 %s130, 1
      %p134 = scmp.eq.s32.totalorder %s28, 1
      %p135 = scmp.ne.s32.totalorder %s130, %s132
      %p136 = scmp.eq.s32.totalorder %s28, 0
      %p137 = por %p135, %p136
      %p138 = scmp.ne.s32.totalorder %s130, %s132
      %p139 = scmp.eq.s32.totalorder %s33, 1
      %p140 = por %p138, %p139
      %p141 = scmp.ne.s32.totalorder %s132, %s133
      %p142 = scmp.eq.s32.totalorder %s33, 0
      %p143 = por %p141, %p142
      %p144 = scmp.ne.s32.totalorder %s132, %s133
      %p145 = scmp.eq.s32.totalorder %s34, 1
      %p146 = por %p144, %p145
      %p148 = scmp.ne.s32.totalorder %s133, %s147
      %p149 = scmp.eq.s32.totalorder %s34, 0
      %p150 = por %p148, %p149
      %s152 = sadd.s32 %s151, 1
      %p155 = scmp.eq.s32.totalorder %s28, 1
      %p156 = scmp.ne.s32.totalorder %s151, %s153
      %p157 = scmp.eq.s32.totalorder %s28, 0
      %p158 = por %p156, %p157
      %p159 = scmp.ne.s32.totalorder %s151, %s153
      %p160 = scmp.eq.s32.totalorder %s33, 1
      %p161 = por %p159, %p160
      %p162 = scmp.ne.s32.totalorder %s153, %s154
      %p163 = scmp.eq.s32.totalorder %s33, 0
      %p164 = por %p162, %p163
      %p165 = scmp.ne.s32.totalorder %s153, %s154
      %p166 = scmp.eq.s32.totalorder %s34, 1
      %p167 = por %p165, %p166
      %p169 = scmp.ne.s32.totalorder %s154, %s168
      %p170 = scmp.eq.s32.totalorder %s34, 0
      %p171 = por %p169, %p170
      %s173 = sadd.s32 %s172, 1
      %p176 = scmp.eq.s32.totalorder %s28, 1
      %p177 = scmp.ne.s32.totalorder %s172, %s174
      %p178 = scmp.eq.s32.totalorder %s28, 0
      %p179 = por %p177, %p178
      %p180 = scmp.ne.s32.totalorder %s172, %s174
      %p181 = scmp.eq.s32.totalorder %s33, 1
      %p182 = por %p180, %p181
      %p183 = scmp.ne.s32.totalorder %s174, %s175
      %p184 = scmp.eq.s32.totalorder %s33, 0
      %p185 = por %p183, %p184
      %p186 = scmp.ne.s32.totalorder %s174, %s175
      %p187 = scmp.eq.s32.totalorder %s34, 1
      %p188 = por %p186, %p187
      %p190 = scmp.ne.s32.totalorder %s175, %s189
      %p191 = scmp.eq.s32.totalorder %s34, 0
      %p192 = por %p190, %p191
      %s194 = sadd.s32 %s193, 1
      %p197 = scmp.eq.s32.totalorder %s28, 1
      %p198 = scmp.ne.s32.totalorder %s193, %s195
      %p199 = scmp.eq.s32.totalorder %s28, 0
      %p200 = por %p198, %p199
      %p201 = scmp.ne.s32.totalorder %s193, %s195
      %p202 = scmp.eq.s32.totalorder %s33, 1
      %p203 = por %p201, %p202
      %p204 = scmp.ne.s32.totalorder %s195, %s196
      %p205 = scmp.eq.s32.totalorder %s33, 0
      %p206 = por %p204, %p205
      %p207 = scmp.ne.s32.totalorder %s195, %s196
      %p208 = scmp.eq.s32.totalorder %s34, 1
      %p209 = por %p207, %p208
      %p211 = scmp.ne.s32.totalorder %s196, %s210
      %p212 = scmp.eq.s32.totalorder %s34, 0
      %p213 = por %p211, %p212
      %s215 = sadd.s32 %s214, 1
      %p218 = scmp.eq.s32.totalorder %s28, 1
      %p219 = scmp.ne.s32.totalorder %s214, %s216
      %p220 = scmp.eq.s32.totalorder %s28, 0
      %p221 = por %p219, %p220
      %p222 = scmp.ne.s32.totalorder %s214, %s216
      %p223 = scmp.eq.s32.totalorder %s33, 1
      %p224 = por %p222, %p223
      %p225 = scmp.ne.s32.totalorder %s216, %s217
      %p226 = scmp.eq.s32.totalorder %s33, 0
      %p227 = por %p225, %p226
      %p228 = scmp.ne.s32.totalorder %s216, %s217
      %p229 = scmp.eq.s32.totalorder %s34, 1
      %p230 = por %p228, %p229
      %p232 = scmp.ne.s32.totalorder %s217, %s231
      %p233 = scmp.eq.s32.totalorder %s34, 0
      %p234 = por %p232, %p233
      %s236 = sadd.s32 %s235, 1
      %p239 = scmp.eq.s32.totalorder %s28, 1
      %p240 = scmp.ne.s32.totalorder %s235, %s237
      %p241 = scmp.eq.s32.totalorder %s28, 0
      %p242 = por %p240, %p241
      %p243 = scmp.ne.s32.totalorder %s235, %s237
      %p244 = scmp.eq.s32.totalorder %s33, 1
      %p245 = por %p243, %p244
      %p246 = scmp.ne.s32.totalorder %s237, %s238
      %p247 = scmp.eq.s32.totalorder %s33, 0
      %p248 = por %p246, %p247
      %p249 = scmp.ne.s32.totalorder %s237, %s238
      %p250 = scmp.eq.s32.totalorder %s34, 1
      %p251 = por %p249, %p250
      %p253 = scmp.ne.s32.totalorder %s238, %s252
      %p254 = scmp.eq.s32.totalorder %s34, 0
      %p255 = por %p253, %p254
      %s257 = sadd.s32 %s256, 1
      %p260 = scmp.eq.s32.totalorder %s28, 1
      %p261 = scmp.ne.s32.totalorder %s256, %s258
      %p262 = scmp.eq.s32.totalorder %s28, 0
      %p263 = por %p261, %p262
      %p264 = scmp.ne.s32.totalorder %s256, %s258
      %p265 = scmp.eq.s32.totalorder %s33, 1
      %p266 = por %p264, %p265
      %p267 = scmp.ne.s32.totalorder %s258, %s259
      %p268 = scmp.eq.s32.totalorder %s33, 0
      %p269 = por %p267, %p268
      %p270 = scmp.ne.s32.totalorder %s258, %s259
      %p271 = scmp.eq.s32.totalorder %s34, 1
      %p272 = por %p270, %p271
      %p274 = scmp.ne.s32.totalorder %s259, %s273
      %p275 = scmp.eq.s32.totalorder %s34, 0
      %p276 = por %p274, %p275
      %s278 = sadd.s32 %s277, 1
      %p281 = scmp.eq.s32.totalorder %s28, 1
      %p282 = scmp.ne.s32.totalorder %s277, %s279
      %p283 = scmp.eq.s32.totalorder %s28, 0
      %p284 = por %p282, %p283
      %p285 = scmp.ne.s32.totalorder %s277, %s279
      %p286 = scmp.eq.s32.totalorder %s33, 1
      %p287 = por %p285, %p286
      %p288 = scmp.ne.s32.totalorder %s279, %s280
      %p289 = scmp.eq.s32.totalorder %s33, 0
      %p290 = por %p288, %p289
      %p291 = scmp.ne.s32.totalorder %s279, %s280
      %p292 = scmp.eq.s32.totalorder %s34, 1
      %p293 = por %p291, %p292
      %p295 = scmp.ne.s32.totalorder %s280, %s294
      %p296 = scmp.eq.s32.totalorder %s34, 0
      %p297 = por %p295, %p296
      %s299 = sadd.s32 %s298, 1
      %p302 = scmp.eq.s32.totalorder %s28, 1
      %p303 = scmp.ne.s32.totalorder %s298, %s300
      %p304 = scmp.eq.s32.totalorder %s28, 0
      %p305 = por %p303, %p304
      %p306 = scmp.ne.s32.totalorder %s298, %s300
      %p307 = scmp.eq.s32.totalorder %s33, 1
      %p308 = por %p306, %p307
      %p309 = scmp.ne.s32.totalorder %s300, %s301
      %p310 = scmp.eq.s32.totalorder %s33, 0
      %p311 = por %p309, %p310
      %p312 = scmp.ne.s32.totalorder %s300, %s301
      %p313 = scmp.eq.s32.totalorder %s34, 1
      %p314 = por %p312, %p313
      %p316 = scmp.ne.s32.totalorder %s301, %s315
      %p317 = scmp.eq.s32.totalorder %s34, 0
      %p318 = por %p316, %p317
      %s320 = sadd.s32 %s319, 1
      %p323 = scmp.eq.s32.totalorder %s28, 1
      %p324 = scmp.ne.s32.totalorder %s319, %s321
      %p325 = scmp.eq.s32.totalorder %s28, 0
      %p326 = por %p324, %p325
      %p327 = scmp.ne.s32.totalorder %s319, %s321
      %p328 = scmp.eq.s32.totalorder %s33, 1
      %p329 = por %p327, %p328
      %p330 = scmp.ne.s32.totalorder %s321, %s322
      %p331 = scmp.eq.s32.totalorder %s33, 0
      %p332 = por %p330, %p331
      %p333 = scmp.ne.s32.totalorder %s321, %s322
      %p334 = scmp.eq.s32.totalorder %s34, 1
      %p335 = por %p333, %p334
      %p337 = scmp.ne.s32.totalorder %s322, %s336
      %p338 = scmp.eq.s32.totalorder %s34, 0
      %p339 = por %p337, %p338
      %s341 = sadd.s32 %s340, 1
      %p344 = scmp.eq.s32.totalorder %s28, 1
      %p345 = scmp.ne.s32.totalorder %s340, %s342
      %p346 = scmp.eq.s32.totalorder %s28, 0
      %p347 = por %p345, %p346
      %p348 = scmp.ne.s32.totalorder %s340, %s342
      %p349 = scmp.eq.s32.totalorder %s33, 1
      %p350 = por %p348, %p349
      %p351 = scmp.ne.s32.totalorder %s342, %s343
      %p352 = scmp.eq.s32.totalorder %s33, 0
      %p353 = por %p351, %p352
      %p354 = scmp.ne.s32.totalorder %s342, %s343
      %p355 = scmp.eq.s32.totalorder %s34, 1
      %p356 = por %p354, %p355
      %p358 = scmp.ne.s32.totalorder %s343, %s357
      %p359 = scmp.eq.s32.totalorder %s34, 0
      %p360 = por %p358, %p359
      %s362 = sadd.s32 %s361, 1
      %p365 = scmp.eq.s32.totalorder %s28, 1
      %p366 = scmp.ne.s32.totalorder %s361, %s363
      %p367 = scmp.eq.s32.totalorder %s28, 0
      %p368 = por %p366, %p367
      %p369 = scmp.ne.s32.totalorder %s361, %s363
      %p370 = scmp.eq.s32.totalorder %s33, 1
      %p371 = por %p369, %p370
      %p372 = scmp.ne.s32.totalorder %s363, %s364
      %p373 = scmp.eq.s32.totalorder %s33, 0
      %p374 = por %p372, %p373
      %p375 = scmp.ne.s32.totalorder %s363, %s364
      %p376 = scmp.eq.s32.totalorder %s34, 1
      %p377 = por %p375, %p376
      %p379 = scmp.ne.s32.totalorder %s364, %s378
      %p380 = scmp.eq.s32.totalorder %s34, 0
      %p381 = por %p379, %p380
      %s383 = sadd.s32 %s382, 1
      %p386 = scmp.eq.s32.totalorder %s28, 1
      %p387 = scmp.ne.s32.totalorder %s382, %s384
      %p388 = scmp.eq.s32.totalorder %s28, 0
      %p389 = por %p387, %p388
      %p390 = scmp.ne.s32.totalorder %s382, %s384
      %p391 = scmp.eq.s32.totalorder %s33, 1
      %p392 = por %p390, %p391
      %p393 = scmp.ne.s32.totalorder %s384, %s385
      %p394 = scmp.eq.s32.totalorder %s33, 0
      %p395 = por %p393, %p394
      %p396 = scmp.ne.s32.totalorder %s384, %s385
      %p397 = scmp.eq.s32.totalorder %s34, 1
      %p398 = por %p396, %p397
      %p400 = scmp.ne.s32.totalorder %s385, %s399
      %p401 = scmp.eq.s32.totalorder %s34, 0
      %p402 = por %p400, %p401
      %s404 = sadd.s32 %s403, 1
      %p407 = scmp.eq.s32.totalorder %s28, 1
      %p408 = scmp.ne.s32.totalorder %s403, %s405
      %p409 = scmp.eq.s32.totalorder %s28, 0
      %p410 = por %p408, %p409
      %p411 = scmp.ne.s32.totalorder %s403, %s405
      %p412 = scmp.eq.s32.totalorder %s33, 1
      %p413 = por %p411, %p412
      %p414 = scmp.ne.s32.totalorder %s405, %s406
      %p415 = scmp.eq.s32.totalorder %s33, 0
      %p416 = por %p414, %p415
      %p417 = scmp.ne.s32.totalorder %s405, %s406
      %p418 = scmp.eq.s32.totalorder %s34, 1
      %p419 = por %p417, %p418
      %p421 = scmp.ne.s32.totalorder %s406, %s420
      %p422 = scmp.eq.s32.totalorder %s34, 0
      %p423 = por %p421, %p422
      %s425 = sadd.s32 %s424, 1
      %p428 = scmp.eq.s32.totalorder %s28, 1
      %p429 = scmp.ne.s32.totalorder %s424, %s426
      %p430 = scmp.eq.s32.totalorder %s28, 0
      %p431 = por %p429, %p430
      %p432 = scmp.ne.s32.totalorder %s424, %s426
      %p433 = scmp.eq.s32.totalorder %s33, 1
      %p434 = por %p432, %p433
      %p435 = scmp.ne.s32.totalorder %s426, %s427
      %p436 = scmp.eq.s32.totalorder %s33, 0
      %p437 = por %p435, %p436
      %p438 = scmp.ne.s32.totalorder %s426, %s427
      %p439 = scmp.eq.s32.totalorder %s34, 1
      %p440 = por %p438, %p439
      %p442 = scmp.ne.s32.totalorder %s427, %s441
      %p443 = scmp.eq.s32.totalorder %s34, 0
      %p444 = por %p442, %p443
      %s445 = ssub.s32 %s28, %s35
      %p446 = scmp.eq.s32.totalorder %s445, 0
      %s448 = sadd.s32 %s447, 1
      %s449 = scalar_select %p446, %s447, %s448
      %p452 = pneg %p446
      %p453 = scmp.eq.s32.totalorder %s28, 1
      %p454 = por %p452, %p453
      %p455 = scmp.ne.s32.totalorder %s447, %s450
      %p456 = scmp.eq.s32.totalorder %s28, 0
      %p457 = por %p455, %p456
      %p458 = scmp.ne.s32.totalorder %s447, %s450
      %p459 = scmp.eq.s32.totalorder %s33, 1
      %p460 = por %p458, %p459
      %p461 = scmp.ne.s32.totalorder %s450, %s451
      %p462 = scmp.eq.s32.totalorder %s33, 0
      %p463 = por %p461, %p462
      %p464 = scmp.ne.s32.totalorder %s450, %s451
      %p465 = scmp.eq.s32.totalorder %s34, 1
      %p466 = por %p464, %p465
      %p468 = scmp.ne.s32.totalorder %s451, %s467
      %p469 = scmp.eq.s32.totalorder %s34, 0
      %p470 = por %p468, %p469
      %p471 = scmp.le.s32.totalorder 1, %s28
      %p472 = scmp.lt.s32.totalorder %s28, 3
      %p473 = pnand %p471, %p472
      %p474 = pneg %p473
      // Predicated region
      $region9: #{forward.3} parent=5 // pred_check
        _
      $region10: #{forward.3} parent=5 // pred_check_branch
        %476 = sbr.rel (%p473) target = $region12
      $region11: #{forward.3} parent=5 // pred_region
        %s477 = ssub.s32 %s28, 1
        // Predicated region
        $region13: #{forward.3} parent=11 // pred_check
          %p478 = pneg %p101
        $region14: #{forward.3} parent=11 // pred_check_branch
          %480 = sbr.rel (%p478) target = $region16
        $region15: #{forward.3} parent=11 // pred_region
          _
        $region16: #{forward.3} parent=11 // pred_fallthru
          _
        // Predicated region
        $region17: #{forward.3} parent=11 // pred_check
          %p481 = pneg %p122
        $region18: #{forward.3} parent=11 // pred_check_branch
          %483 = sbr.rel (%p481) target = $region20
        $region19: #{forward.3} parent=11 // pred_region
          _
        $region20: #{forward.3} parent=11 // pred_fallthru
          _
        // Predicated region
        $region21: #{forward.3} parent=11 // pred_check
          %p484 = pneg %p143
        $region22: #{forward.3} parent=11 // pred_check_branch
          %486 = sbr.rel (%p484) target = $region24
        $region23: #{forward.3} parent=11 // pred_region
          _
        $region24: #{forward.3} parent=11 // pred_fallthru
          _
        // Predicated region
        $region25: #{forward.3} parent=11 // pred_check
          %p487 = pneg %p164
        $region26: #{forward.3} parent=11 // pred_check_branch
          %489 = sbr.rel (%p487) target = $region28
        $region27: #{forward.3} parent=11 // pred_region
          _
        $region28: #{forward.3} parent=11 // pred_fallthru
          _
        // Predicated region
        $region29: #{forward.3} parent=11 // pred_check
          %p490 = pneg %p185
        $region30: #{forward.3} parent=11 // pred_check_branch
          %492 = sbr.rel (%p490) target = $region32
        $region31: #{forward.3} parent=11 // pred_region
          _
        $region32: #{forward.3} parent=11 // pred_fallthru
          _
        // Predicated region
        $region33: #{forward.3} parent=11 // pred_check
          %p493 = pneg %p206
        $region34: #{forward.3} parent=11 // pred_check_branch
          %495 = sbr.rel (%p493) target = $region36
        $region35: #{forward.3} parent=11 // pred_region
          _
        $region36: #{forward.3} parent=11 // pred_fallthru
          _
        // Predicated region
        $region37: #{forward.3} parent=11 // pred_check
          %p496 = pneg %p227
        $region38: #{forward.3} parent=11 // pred_check_branch
          %498 = sbr.rel (%p496) target = $region40
        $region39: #{forward.3} parent=11 // pred_region
          _
        $region40: #{forward.3} parent=11 // pred_fallthru
          _
        // Predicated region
        $region41: #{forward.3} parent=11 // pred_check
          %p499 = pneg %p248
        $region42: #{forward.3} parent=11 // pred_check_branch
          %501 = sbr.rel (%p499) target = $region44
        $region43: #{forward.3} parent=11 // pred_region
          _
        $region44: #{forward.3} parent=11 // pred_fallthru
          _
        // Predicated region
        $region45: #{forward.3} parent=11 // pred_check
          %p502 = pneg %p269
        $region46: #{forward.3} parent=11 // pred_check_branch
          %504 = sbr.rel (%p502) target = $region48
        $region47: #{forward.3} parent=11 // pred_region
          _
        $region48: #{forward.3} parent=11 // pred_fallthru
          _
        // Predicated region
        $region49: #{forward.3} parent=11 // pred_check
          %p505 = pneg %p290
        $region50: #{forward.3} parent=11 // pred_check_branch
          %507 = sbr.rel (%p505) target = $region52
        $region51: #{forward.3} parent=11 // pred_region
          _
        $region52: #{forward.3} parent=11 // pred_fallthru
          _
        // Predicated region
        $region53: #{forward.3} parent=11 // pred_check
          %p508 = pneg %p311
        $region54: #{forward.3} parent=11 // pred_check_branch
          %510 = sbr.rel (%p508) target = $region56
        $region55: #{forward.3} parent=11 // pred_region
          _
        $region56: #{forward.3} parent=11 // pred_fallthru
          _
        // Predicated region
        $region57: #{forward.3} parent=11 // pred_check
          %p511 = pneg %p332
        $region58: #{forward.3} parent=11 // pred_check_branch
          %513 = sbr.rel (%p511) target = $region60
        $region59: #{forward.3} parent=11 // pred_region
          _
        $region60: #{forward.3} parent=11 // pred_fallthru
          _
        // Predicated region
        $region61: #{forward.3} parent=11 // pred_check
          %p514 = pneg %p353
        $region62: #{forward.3} parent=11 // pred_check_branch
          %516 = sbr.rel (%p514) target = $region64
        $region63: #{forward.3} parent=11 // pred_region
          _
        $region64: #{forward.3} parent=11 // pred_fallthru
          _
        // Predicated region
        $region65: #{forward.3} parent=11 // pred_check
          %p517 = pneg %p374
        $region66: #{forward.3} parent=11 // pred_check_branch
          %519 = sbr.rel (%p517) target = $region68
        $region67: #{forward.3} parent=11 // pred_region
          _
        $region68: #{forward.3} parent=11 // pred_fallthru
          _
        // Predicated region
        $region69: #{forward.3} parent=11 // pred_check
          %p520 = pneg %p395
        $region70: #{forward.3} parent=11 // pred_check_branch
          %522 = sbr.rel (%p520) target = $region72
        $region71: #{forward.3} parent=11 // pred_region
          _
        $region72: #{forward.3} parent=11 // pred_fallthru
          _
        // Predicated region
        $region73: #{forward.3} parent=11 // pred_check
          %p523 = pneg %p416
        $region74: #{forward.3} parent=11 // pred_check_branch
          %525 = sbr.rel (%p523) target = $region76
        $region75: #{forward.3} parent=11 // pred_region
          _
        $region76: #{forward.3} parent=11 // pred_fallthru
          _
        // Predicated region
        $region77: #{forward.3} parent=11 // pred_check
          %p526 = pneg %p437
        $region78: #{forward.3} parent=11 // pred_check_branch
          %528 = sbr.rel (%p526) target = $region80
        $region79: #{forward.3} parent=11 // pred_region
          _
        $region80: #{forward.3} parent=11 // pred_fallthru
          _
      $region12: #{forward.3} parent=5 // pred_fallthru
        _
      %p529 = scmp.lt.s32.totalorder %s28, 2
      // Predicated region
      $region81: #{forward.3} parent=5 // pred_check
        %p530 = pneg %p529
      $region82: #{forward.3} parent=5 // pred_check_branch
        %532 = sbr.rel (%p530) target = $region84
      $region83: #{forward.3} parent=5 // pred_region
        // Predicated region
        $region85: #{forward.3} parent=83 // pred_check
          %p533 = pneg %p48
        $region86: #{forward.3} parent=83 // pred_check_branch
          %535 = sbr.rel (%p533) target = $region88
        $region87: #{forward.3} parent=83 // pred_region
          %p536 = scmp.lt.s32.totalorder %s28, 1
          %s537 = scalar_select %p536, %s28, 1
          %s538 = smul.addr %s537, 4
          %s539 = scalar_lea.vmem %s0, %s538
        $region88: #{forward.3} parent=83 // pred_fallthru
          _
        // Predicated region
        $region89: #{forward.3} parent=83 // pred_check
          %p540 = pneg %p74
        $region90: #{forward.3} parent=83 // pred_check_branch
          %542 = sbr.rel (%p540) target = $region92
        $region91: #{forward.3} parent=83 // pred_region
          %p543 = scmp.lt.s32.totalorder %s28, 1
          %s544 = scalar_select %p543, %s28, 1
          %s545 = smul.addr %s544, 4
          %s546 = scalar_lea.vmem %s1, %s545
        $region92: #{forward.3} parent=83 // pred_fallthru
          _
      $region84: #{forward.3} parent=5 // pred_fallthru
        _
      %p547 = scmp.le.s32.totalorder 1, %s28
      %p548 = scmp.lt.s32.totalorder %s28, 3
      %p549 = pnand %p547, %p548
      %p550 = pneg %p549
      // Predicated region
      $region93: #{forward.3} parent=5 // pred_check
        _
      $region94: #{forward.3} parent=5 // pred_check_branch
        %552 = sbr.rel (%p549) target = $region96
      $region95: #{forward.3} parent=5 // pred_region
        %s553 = ssub.s32 %s28, 1
        %p554 = scmp.lt.s32.totalorder %s33, 1
        %s555 = scalar_select %p554, %s33, 1
        %s556 = smul.addr %s555, 4
        %s557 = scalar_lea.vmem %s0, %s556
        %p558 = pneg %p54
        %p559 = pneg %p51
        %p560 = scmp.lt.s32.totalorder %s33, 1
        %s561 = scalar_select %p560, %s33, 1
        %s562 = smul.addr %s561, 4
        %s563 = scalar_lea.vmem %s1, %s562
        %p564 = pneg %p80
        %p565 = pneg %p77
        %p566 = pneg %p101
        %p567 = pneg %p98
        %p568 = pneg %p122
        %p569 = pneg %p119
        %p570 = pneg %p143
        %p571 = pneg %p140
        %p572 = pneg %p164
        %p573 = pneg %p161
        %p574 = pneg %p185
        %p575 = pneg %p182
        %p576 = pneg %p206
        %p577 = pneg %p203
        %p578 = pneg %p227
        %p579 = pneg %p224
        %p580 = pneg %p248
        %p581 = pneg %p245
        %p582 = pneg %p269
        %p583 = pneg %p266
        %p584 = pneg %p290
        %p585 = pneg %p287
        %p586 = pneg %p311
        %p587 = pneg %p308
        %p588 = pneg %p332
        %p589 = pneg %p329
        %p590 = pneg %p353
        %p591 = pneg %p350
        %p592 = pneg %p374
        %p593 = pneg %p371
        %p594 = pneg %p395
        %p595 = pneg %p392
        %p596 = pneg %p416
        %p597 = pneg %p413
        %p598 = pneg %p437
        %p599 = pneg %p434
        %p600 = pneg %p463
        %p601 = pneg %p460
        %s602 = sand.u32 %s450, 1
        %s603 = scalar_lea.sflag [#allocation3], %s602
        %s604 = sand.u32 %s450, 1
        %s605 = smul.addr %s604, 4
        %s606 = scalar_lea.vmem [#allocation2], %s605
        %p607 = scmp.lt.s32.totalorder %s33, 1
        %s608 = scalar_select %p607, %s33, 1
        %s609 = smul.addr %s608, 4
        %s610 = scalar_lea.vmem %s0, %s609
        %p611 = scmp.lt.s32.totalorder %s33, 1
        %s612 = scalar_select %p611, %s33, 1
        %s613 = smul.addr %s612, 4
        %s614 = scalar_lea.vmem %s1, %s613
        %v615 = vld [vmem:[%s614] sm:$0xf]
        %v616 = vld [vmem:[%s2] sm:$0x1f]
        %v617 = vld [vmem:[%s3] sm:$0x1]
        %v619 = vperm.slane %v617, 0
        %vm621 = vcmask 39936
        %v623 = vsel %vm621, %v615, 0
        %vm625 = vcmask 1044480
        %v627 = vsel %vm625, %v616, 0
        %629 = vmatpush.msra.mxu0 0.0
        %630 = vmatpush.msra.mxu0 0.0
        %631 = vmatpush.msra.mxu0 0.0
        %632 = vmatpush.msra.mxu0 0.0
        %633 = vmatpush.msra.mxu0 0.0
        %634 = vmatpush.msra.mxu0 0.0
        %635 = vmatpush.msra.mxu0 0.0
        %636 = vmatpush.msra.mxu0 0.0
        %637 = vmatpush.msra.mxu0 0.0
        %638 = vmatpush.msra.mxu0 0.0
        %639 = vmatpush.msra.mxu0 0.0
        %640 = vmatpush.msra.mxu0 0.0
        %641 = vmatpush.msra.mxu0 0.0
        %642 = vmatpush.msra.mxu0 0.0
        %643 = vmatpush.msra.mxu0 0.0
        %644 = vmatpush.msra.mxu0 %v627
        %645 = vmatmul.f32.gmra.mxu0 %v623
        %v646 = vpop.f32.mrf.mxu0
        %v647 = vadd.f32 %v619, %v646
        %648 = vdwg.mxu0
        %v649 = vmul.f32 %v647, 0.5
        %v650 = vmul.f32 %v647, 0.70710677
        %v651 = vmul.f32 %v650, %v650
        %v652 = vmin.f32 16.0, %v651
        %v653 = vmul.f32 %v652, 2.1237322e-06
        %v654 = vadd.f32 %v653, 0.00028619796
        %v655 = vmul.f32 %v652, %v654
        %v656 = vadd.f32 %v655, 0.0036580483
        %v657 = vmul.f32 %v652, %v656
        %v658 = vadd.f32 %v657, 0.05243302
        %v659 = vmul.f32 %v652, %v658
        %v660 = vadd.f32 %v659, 0.18741608
        %v661 = vmul.f32 %v652, %v660
        %v662 = vadd.f32 %v661, 1.1283791
        %v663 = vmul.f32 %v650, %v662
        %v664 = vmul.f32 %v652, 3.8918573e-05
        %v665 = vadd.f32 %v664, 0.001143296
        %v666 = vmul.f32 %v652, %v665
        %v667 = vadd.f32 %v666, 0.014752088
        %v668 = vmul.f32 %v652, %v667
        %v669 = vadd.f32 %v668, 0.112945676
        %v670 = vmul.f32 %v652, %v669
        %v671 = vadd.f32 %v670, 0.4994258
        %v672 = vmul.f32 %v652, %v671
        %v673 = vadd.f32 %v672, 1.0
        %v674 = vrcp.pop %v673
        %v675 = vmul.f32 %v673, %v674
        %v676 = vsub.f32 1.0, %v675
        %v677 = vmul.f32 %v674, %v676
        %v678 = vadd.f32 %v674, %v677
        %vm679 = vweird.f32 %v673
        %vm680 = vweird.f32 %v674
        %vm681 = vmor %vm679, %vm680
        %v682 = vsel %vm681, %v674, %v678
        %v683 = vand.u32 2147483647, %v673
        %vm684 = vcmp.eq.f32.partialorder %v683, 8.507059e+37
        %v685 = vand.u32 %v673, 2147483648
        %v686 = vor.u32 1.1754944e-38, %v685
        %v687 = vsel %vm684, %v686, %v682
        %v688 = vmul.f32 %v663, %v687
        %v689 = vmin.f32 %v688, 1.0
        %v690 = vmax.f32 %v689, -1.0
        %v691 = vadd.f32 %v690, 1.0
        %v692 = vmul.f32 %v649, %v691
        %v693 = vld [vmem:[%s4] sm:$0xff]
        %v694 = vld [vmem:[%s4 + $0x8] sm:$0xff]
        %v695 = vld [vmem:[%s4 + $0x10] sm:$0xff]
        %v696 = vld [vmem:[%s4 + $0x18] sm:$0xff]
        %v697 = vld [vmem:[%s4 + $0x20] sm:$0xff]
        %v698 = vld [vmem:[%s4 + $0x28] sm:$0xff]
        %v699 = vld [vmem:[%s4 + $0x30] sm:$0xff]
        %v700 = vld [vmem:[%s4 + $0x38] sm:$0xff]
        %v701 = vld [vmem:[%s4 + $0x40] sm:$0xff]
        %v702 = vld [vmem:[%s4 + $0x48] sm:$0xff]
        %v703 = vld [vmem:[%s4 + $0x50] sm:$0xff]
        %v704 = vld [vmem:[%s4 + $0x58] sm:$0xff]
        %v705 = vld [vmem:[%s4 + $0x60] sm:$0xff]
        %v706 = vld [vmem:[%s4 + $0x68] sm:$0xff]
        %v707 = vld [vmem:[%s4 + $0x70] sm:$0xff]
        %v708 = vld [vmem:[%s4 + $0x78] sm:$0xff]
        %v709 = vld [vmem:[%s5] sm:$0x1]
        %v711 = vperm.slane %v709, 0
        %713 = vmatpush.msra.mxu0 %v708
        %714 = vmatpush.msra.mxu0 %v707
        %715 = vmatpush.msra.mxu0 %v706
        %716 = vmatpush.msra.mxu0 %v705
        %717 = vmatpush.msra.mxu0 %v704
        %718 = vmatpush.msra.mxu0 %v703
        %719 = vmatpush.msra.mxu0 %v702
        %720 = vmatpush.msra.mxu0 %v701
        %721 = vmatpush.msra.mxu0 %v700
        %722 = vmatpush.msra.mxu0 %v699
        %723 = vmatpush.msra.mxu0 %v698
        %724 = vmatpush.msra.mxu0 %v697
        %725 = vmatpush.msra.mxu0 %v696
        %726 = vmatpush.msra.mxu0 %v695
        %727 = vmatpush.msra.mxu0 %v694
        %728 = vmatpush.msra.mxu0 %v693
        %729 = vmatmul.f32.gmra.mxu0 %v692
        %v730 = vpop.f32.mrf.mxu0
        %v731 = vadd.f32 %v711, %v730
        %732 = vdwg.mxu0
        %v733 = vld [vmem:[%s610] sm:$0xf]
        %v734 = vadd.f32 %v733, %v731
        %v735 = vld [vmem:[%s6] sm:$0x1]
        %v736 = vld [vmem:[%s7] sm:$0x1]
        %vm737 = vcmask 519168
        %v738 = vsel %vm737, %v734, 0.0
        %739 = vadd.xlane.f32.xlu0 %v738
        %v740 = vpop.xlane.xlu0 %739
        %v741 = vrcp.pop 64.0
        %v742 = vmul.f32 64.0, %v741
        %v743 = vsub.f32 1.0, %v742
        %v744 = vmul.f32 %v741, %v743
        %v745 = vadd.f32 %v741, %v744
        %vm746 = vweird.f32 %v741
        %v747 = vsel %vm746, %v741, %v745
        %v748 = vmul.f32 %v740, %v747
        %v749 = vsub.f32 %v734, %v748
        %v750 = vmul.f32 %v749, %v749
        %v751 = vsel %vm737, %v750, 0.0
        %752 = vadd.xlane.f32.xlu0 %v751
        %v753 = vpop.xlane.xlu0 %752
        %v754 = vmul.f32 %v753, %v747
        %v755 = vadd.f32 %v754, 1e-05
        %v756 = vrsqrt.pop %v755
        %v757 = vmul.f32 %v756, %v755
        %v758 = vmul.f32 %v757, %v756
        %v759 = vmul.f32 0.5, %v758
        %v760 = vsub.f32 1.5, %v759
        %v761 = vmul.f32 %v756, %v760
        %vm762 = vweird.f32 %v755
        %vm763 = vweird.f32 %v756
        %vm764 = vmor %vm762, %vm763
        %v765 = vsel %vm764, %v756, %v761
        %v766 = vmul.f32 %v749, %v765
        %v768 = vperm.slane %v735, 0
        %v770 = vmul.f32 %v766, %v768
        %v772 = vperm.slane %v736, 0
        %v774 = vadd.f32 %v770, %v772
        %v775 = vld [vmem:[%s8] sm:$0xff]
        %v776 = vld [vmem:[%s8 + $0x8] sm:$0xff]
        %v777 = vld [vmem:[%s8 + $0x10] sm:$0xff]
        %v778 = vld [vmem:[%s8 + $0x18] sm:$0xff]
        %v779 = vld [vmem:[%s8 + $0x20] sm:$0xff]
        %v780 = vld [vmem:[%s8 + $0x28] sm:$0xff]
        %v781 = vld [vmem:[%s8 + $0x30] sm:$0xff]
        %v782 = vld [vmem:[%s8 + $0x38] sm:$0xff]
        %v783 = vld [vmem:[%s8 + $0x40] sm:$0xff]
        %v784 = vld [vmem:[%s8 + $0x48] sm:$0xff]
        %v785 = vld [vmem:[%s8 + $0x50] sm:$0xff]
        %v786 = vld [vmem:[%s8 + $0x58] sm:$0xff]
        %v787 = vld [vmem:[%s8 + $0x60] sm:$0xff]
        %v788 = vld [vmem:[%s8 + $0x68] sm:$0xff]
        %v789 = vld [vmem:[%s8 + $0x70] sm:$0xff]
        %v790 = vld [vmem:[%s8 + $0x78] sm:$0xff]
        %vm791 = vcmask 523264
        %v793 = vsel %vm791, %v774, 0
        %795 = vmatpush.msra.mxu0 0.0
        %796 = vmatpush.msra.mxu0 0.0
        %797 = vmatpush.msra.mxu0 0.0
        %798 = vmatpush.msra.mxu0 0.0
        %799 = vmatpush.msra.mxu0 0.0
        %800 = vmatpush.msra.mxu0 0.0
        %801 = vmatpush.msra.mxu0 0.0
        %802 = vmatpush.msra.mxu0 0.0
        %803 = vmatpush.msra.mxu0 %v789
        %804 = vmatpush.msra.mxu0 %v787
        %805 = vmatpush.msra.mxu0 %v785
        %806 = vmatpush.msra.mxu0 %v783
        %807 = vmatpush.msra.mxu0 %v781
        %808 = vmatpush.msra.mxu0 %v779
        %809 = vmatpush.msra.mxu0 %v777
        %810 = vmatpush.msra.mxu0 %v775
        %811 = vmatmul.f32.gmra.mxu0 %v793
        %v812 = vpop.f32.mrf.mxu0
        %v813 = vadd.f32 0.0, %v812
        %814 = vdwg.mxu0
        %815 = vmatpush.msra.mxu0 0.0
        %816 = vmatpush.msra.mxu0 0.0
        %817 = vmatpush.msra.mxu0 0.0
        %818 = vmatpush.msra.mxu0 0.0
        %819 = vmatpush.msra.mxu0 0.0
        %820 = vmatpush.msra.mxu0 0.0
        %821 = vmatpush.msra.mxu0 0.0
        %822 = vmatpush.msra.mxu0 0.0
        %823 = vmatpush.msra.mxu0 %v790
        %824 = vmatpush.msra.mxu0 %v788
        %825 = vmatpush.msra.mxu0 %v786
        %826 = vmatpush.msra.mxu0 %v784
        %827 = vmatpush.msra.mxu0 %v782
        %828 = vmatpush.msra.mxu0 %v780
        %829 = vmatpush.msra.mxu0 %v778
        %830 = vmatpush.msra.mxu0 %v776
        %831 = vmatmul.f32.gmra.mxu0 %v793
        %v832 = vpop.f32.mrf.mxu0
        %v833 = vadd.f32 0.0, %v832
        %834 = vdwg.mxu0
        %836 = vrot.lane.b32.xlu0 %v813, 112
        %v837 = vpop.permute.xlu0 %836
        %838 = vrot.lane.b32.xlu0 %v813, 96
        %v839 = vpop.permute.xlu0 %838
        %840 = vrot.lane.b32.xlu0 %v813, 80
        %v841 = vpop.permute.xlu0 %840
        %843 = vrot.lane.b32.xlu0 %v833, 112
        %v844 = vpop.permute.xlu0 %843
        %845 = vrot.lane.b32.xlu0 %v833, 96
        %v846 = vpop.permute.xlu0 %845
        %847 = vrot.lane.b32.xlu0 %v833, 80
        %v848 = vpop.permute.xlu0 %847
        %849 = vrot.lane.b32.xlu0 %v813, 64
        %v850 = vpop.permute.xlu0 %849
        %vm851 = vcmask 130048
        %v852 = vsel %vm851, %v813, 0
        %v854 = vsel %vm851, %v850, 0
        %856 = vmatpush.xpose.msra.mxu0 0.0
        %857 = vmatpush.xpose.msra.mxu0 0.0
        %858 = vmatpush.xpose.msra.mxu0 0.0
        %859 = vmatpush.xpose.msra.mxu0 0.0
        %860 = vmatpush.xpose.msra.mxu0 0.0
        %861 = vmatpush.xpose.msra.mxu0 0.0
        %862 = vmatpush.xpose.msra.mxu0 0.0
        %863 = vmatpush.xpose.msra.mxu0 0.0
        %864 = vmatpush.xpose.msra.mxu0 0.0
        %865 = vmatpush.xpose.msra.mxu0 0.0
        %866 = vmatpush.xpose.msra.mxu0 0.0
        %867 = vmatpush.xpose.msra.mxu0 0.0
        %868 = vmatpush.xpose.msra.mxu0 0.0
        %869 = vmatpush.xpose.msra.mxu0 0.0
        %870 = vmatpush.xpose.msra.mxu0 0.0
        %871 = vmatpush.xpose.msra.mxu0 %v854
        %872 = vmatmul.f32.gmra.mxu0 %v852
        %v873 = vpop.f32.mrf.mxu0
        %v874 = vadd.f32 0.0, %v873
        %875 = vdwg.mxu0
        %876 = vrot.lane.b32.xlu0 %v837, 64
        %v877 = vpop.permute.xlu0 %876
        %v878 = vsel %vm851, %v837, 0
        %v880 = vsel %vm851, %v877, 0
        %882 = vmatpush.xpose.msra.mxu0 0.0
        %883 = vmatpush.xpose.msra.mxu0 0.0
        %884 = vmatpush.xpose.msra.mxu0 0.0
        %885 = vmatpush.xpose.msra.mxu0 0.0
        %886 = vmatpush.xpose.msra.mxu0 0.0
        %887 = vmatpush.xpose.msra.mxu0 0.0
        %888 = vmatpush.xpose.msra.mxu0 0.0
        %889 = vmatpush.xpose.msra.mxu0 0.0
        %890 = vmatpush.xpose.msra.mxu0 0.0
        %891 = vmatpush.xpose.msra.mxu0 0.0
        %892 = vmatpush.xpose.msra.mxu0 0.0
        %893 = vmatpush.xpose.msra.mxu0 0.0
        %894 = vmatpush.xpose.msra.mxu0 0.0
        %895 = vmatpush.xpose.msra.mxu0 0.0
        %896 = vmatpush.xpose.msra.mxu0 0.0
        %897 = vmatpush.xpose.msra.mxu0 %v880
        %898 = vmatmul.f32.gmra.mxu0 %v878
        %v899 = vpop.f32.mrf.mxu0
        %v900 = vadd.f32 0.0, %v899
        %901 = vdwg.mxu0
        %902 = vrot.lane.b32.xlu0 %v839, 64
        %v903 = vpop.permute.xlu0 %902
        %v904 = vsel %vm851, %v839, 0
        %v906 = vsel %vm851, %v903, 0
        %908 = vmatpush.xpose.msra.mxu0 0.0
        %909 = vmatpush.xpose.msra.mxu0 0.0
        %910 = vmatpush.xpose.msra.mxu0 0.0
        %911 = vmatpush.xpose.msra.mxu0 0.0
        %912 = vmatpush.xpose.msra.mxu0 0.0
        %913 = vmatpush.xpose.msra.mxu0 0.0
        %914 = vmatpush.xpose.msra.mxu0 0.0
        %915 = vmatpush.xpose.msra.mxu0 0.0
        %916 = vmatpush.xpose.msra.mxu0 0.0
        %917 = vmatpush.xpose.msra.mxu0 0.0
        %918 = vmatpush.xpose.msra.mxu0 0.0
        %919 = vmatpush.xpose.msra.mxu0 0.0
        %920 = vmatpush.xpose.msra.mxu0 0.0
        %921 = vmatpush.xpose.msra.mxu0 0.0
        %922 = vmatpush.xpose.msra.mxu0 0.0
        %923 = vmatpush.xpose.msra.mxu0 %v906
        %924 = vmatmul.f32.gmra.mxu0 %v904
        %v925 = vpop.f32.mrf.mxu0
        %v926 = vadd.f32 0.0, %v925
        %927 = vdwg.mxu0
        %928 = vrot.lane.b32.xlu0 %v841, 64
        %v929 = vpop.permute.xlu0 %928
        %v930 = vsel %vm851, %v841, 0
        %v932 = vsel %vm851, %v929, 0
        %934 = vmatpush.xpose.msra.mxu0 0.0
        %935 = vmatpush.xpose.msra.mxu0 0.0
        %936 = vmatpush.xpose.msra.mxu0 0.0
        %937 = vmatpush.xpose.msra.mxu0 0.0
        %938 = vmatpush.xpose.msra.mxu0 0.0
        %939 = vmatpush.xpose.msra.mxu0 0.0
        %940 = vmatpush.xpose.msra.mxu0 0.0
        %941 = vmatpush.xpose.msra.mxu0 0.0
        %942 = vmatpush.xpose.msra.mxu0 0.0
        %943 = vmatpush.xpose.msra.mxu0 0.0
        %944 = vmatpush.xpose.msra.mxu0 0.0
        %945 = vmatpush.xpose.msra.mxu0 0.0
        %946 = vmatpush.xpose.msra.mxu0 0.0
        %947 = vmatpush.xpose.msra.mxu0 0.0
        %948 = vmatpush.xpose.msra.mxu0 0.0
        %949 = vmatpush.xpose.msra.mxu0 %v932
        %950 = vmatmul.f32.gmra.mxu0 %v930
        %v951 = vpop.f32.mrf.mxu0
        %v952 = vadd.f32 0.0, %v951
        %953 = vdwg.mxu0
        %v954 = vmul.f32 %v874, 0.25
        %v955 = vmul.f32 %v900, 0.25
        %v956 = vmul.f32 %v926, 0.25
        %v957 = vmul.f32 %v952, 0.25
        %vm958 = vcmask 27648
        %v959 = vsel %vm958, %v954, -inf
        %960 = vmax.xlane.f32.xlu0 %v959
        %v961 = vpop.xlane.xlu0 %960
        %v962 = vsel %vm958, %v955, -inf
        %963 = vmax.xlane.f32.xlu0 %v962
        %v964 = vpop.xlane.xlu0 %963
        %v965 = vsel %vm958, %v956, -inf
        %966 = vmax.xlane.f32.xlu0 %v965
        %v967 = vpop.xlane.xlu0 %966
        %v968 = vsel %vm958, %v957, -inf
        %969 = vmax.xlane.f32.xlu0 %v968
        %v970 = vpop.xlane.xlu0 %969
        %v971 = vsub.f32 %v954, %v961
        %v972 = vsub.f32 %v955, %v964
        %v973 = vsub.f32 %v956, %v967
        %v974 = vsub.f32 %v957, %v970
        %v975 = vmul.f32 %v971, 1.442695
        %v976 = vpow.pop %v975
        %v977 = vmul.f32 %v972, 1.442695
        %v978 = vpow.pop %v977
        %v979 = vmul.f32 %v973, 1.442695
        %v980 = vpow.pop %v979
        %v981 = vmul.f32 %v974, 1.442695
        %v982 = vpow.pop %v981
        %v983 = vsel %vm958, %v976, 0.0
        %984 = vadd.xlane.f32.xlu0 %v983
        %v985 = vpop.xlane.xlu0 %984
        %v986 = vsel %vm958, %v978, 0.0
        %987 = vadd.xlane.f32.xlu0 %v986
        %v988 = vpop.xlane.xlu0 %987
        %v989 = vsel %vm958, %v980, 0.0
        %990 = vadd.xlane.f32.xlu0 %v989
        %v991 = vpop.xlane.xlu0 %990
        %v992 = vsel %vm958, %v982, 0.0
        %993 = vadd.xlane.f32.xlu0 %v992
        %v994 = vpop.xlane.xlu0 %993
        %v995 = vrcp.pop %v985
        %v996 = vrcp.pop %v988
        %v997 = vrcp.pop %v991
        %v998 = vrcp.pop %v994
        %v999 = vmul.f32 %v976, %v995
        %v1000 = vmul.f32 %v978, %v996
        %v1001 = vmul.f32 %v980, %v997
        %v1002 = vmul.f32 %v982, %v998
        %vm1003 = vcmask 31744
        %v1005 = vsel %vm1003, %v999, 0
        %vm1007 = vcmask 1043456
        %v1008 = vsel %vm1007, %v833, 0
        %1010 = vmatpush.msra.mxu0 0.0
        %1011 = vmatpush.msra.mxu0 0.0
        %1012 = vmatpush.msra.mxu0 0.0
        %1013 = vmatpush.msra.mxu0 0.0
        %1014 = vmatpush.msra.mxu0 0.0
        %1015 = vmatpush.msra.mxu0 0.0
        %1016 = vmatpush.msra.mxu0 0.0
        %1017 = vmatpush.msra.mxu0 0.0
        %1018 = vmatpush.msra.mxu0 0.0
        %1019 = vmatpush.msra.mxu0 0.0
        %1020 = vmatpush.msra.mxu0 0.0
        %1021 = vmatpush.msra.mxu0 0.0
        %1022 = vmatpush.msra.mxu0 0.0
        %1023 = vmatpush.msra.mxu0 0.0
        %1024 = vmatpush.msra.mxu0 0.0
        %1025 = vmatpush.msra.mxu0 %v1008
        %1026 = vmatmul.f32.gmra.mxu0 %v1005
        %v1027 = vpop.f32.mrf.mxu0
        %v1028 = vadd.f32 0.0, %v1027
        %1029 = vdwg.mxu0
        %v1031 = vsel %vm1003, %v1000, 0
        %v1033 = vsel %vm1007, %v844, 0
        %1035 = vmatpush.msra.mxu0 0.0
        %1036 = vmatpush.msra.mxu0 0.0
        %1037 = vmatpush.msra.mxu0 0.0
        %1038 = vmatpush.msra.mxu0 0.0
        %1039 = vmatpush.msra.mxu0 0.0
        %1040 = vmatpush.msra.mxu0 0.0
        %1041 = vmatpush.msra.mxu0 0.0
        %1042 = vmatpush.msra.mxu0 0.0
        %1043 = vmatpush.msra.mxu0 0.0
        %1044 = vmatpush.msra.mxu0 0.0
        %1045 = vmatpush.msra.mxu0 0.0
        %1046 = vmatpush.msra.mxu0 0.0
        %1047 = vmatpush.msra.mxu0 0.0
        %1048 = vmatpush.msra.mxu0 0.0
        %1049 = vmatpush.msra.mxu0 0.0
        %1050 = vmatpush.msra.mxu0 %v1033
        %1051 = vmatmul.f32.gmra.mxu0 %v1031
        %v1052 = vpop.f32.mrf.mxu0
        %v1053 = vadd.f32 0.0, %v1052
        %1054 = vdwg.mxu0
        %v1056 = vsel %vm1003, %v1001, 0
        %v1058 = vsel %vm1007, %v846, 0
        %1060 = vmatpush.msra.mxu0 0.0
        %1061 = vmatpush.msra.mxu0 0.0
        %1062 = vmatpush.msra.mxu0 0.0
        %1063 = vmatpush.msra.mxu0 0.0
        %1064 = vmatpush.msra.mxu0 0.0
        %1065 = vmatpush.msra.mxu0 0.0
        %1066 = vmatpush.msra.mxu0 0.0
        %1067 = vmatpush.msra.mxu0 0.0
        %1068 = vmatpush.msra.mxu0 0.0
        %1069 = vmatpush.msra.mxu0 0.0
        %1070 = vmatpush.msra.mxu0 0.0
        %1071 = vmatpush.msra.mxu0 0.0
        %1072 = vmatpush.msra.mxu0 0.0
        %1073 = vmatpush.msra.mxu0 0.0
        %1074 = vmatpush.msra.mxu0 0.0
        %1075 = vmatpush.msra.mxu0 %v1058
        %1076 = vmatmul.f32.gmra.mxu0 %v1056
        %v1077 = vpop.f32.mrf.mxu0
        %v1078 = vadd.f32 0.0, %v1077
        %1079 = vdwg.mxu0
        %v1081 = vsel %vm1003, %v1002, 0
        %v1083 = vsel %vm1007, %v848, 0
        %1085 = vmatpush.msra.mxu0 0.0
        %1086 = vmatpush.msra.mxu0 0.0
        %1087 = vmatpush.msra.mxu0 0.0
        %1088 = vmatpush.msra.mxu0 0.0
        %1089 = vmatpush.msra.mxu0 0.0
        %1090 = vmatpush.msra.mxu0 0.0
        %1091 = vmatpush.msra.mxu0 0.0
        %1092 = vmatpush.msra.mxu0 0.0
        %1093 = vmatpush.msra.mxu0 0.0
        %1094 = vmatpush.msra.mxu0 0.0
        %1095 = vmatpush.msra.mxu0 0.0
        %1096 = vmatpush.msra.mxu0 0.0
        %1097 = vmatpush.msra.mxu0 0.0
        %1098 = vmatpush.msra.mxu0 0.0
        %1099 = vmatpush.msra.mxu0 0.0
        %1100 = vmatpush.msra.mxu0 %v1083
        %1101 = vmatmul.f32.gmra.mxu0 %v1081
        %v1102 = vpop.f32.mrf.mxu0
        %v1103 = vadd.f32 0.0, %v1102
        %1104 = vdwg.mxu0
        %1106 = vrot.lane.b32.xlu0 %v1053, 16
        %v1107 = vpop.permute.xlu0 %1106
        %1110 = vrot.lane.b32.xlu0 %v1078, 32
        %v1111 = vpop.permute.xlu0 %1110
        %1114 = vrot.lane.b32.xlu0 %v1103, 48
        %v1115 = vpop.permute.xlu0 %1114
        %v1117 = vsel %vm851, %v1028, %v1107
        %vm1118 = vcmask 261120
        %v1119 = vsel %vm1118, %v1117, %v1111
        %vm1120 = vcmask 392192
        %v1121 = vsel %vm1120, %v1119, %v1115
        %v1122 = vld [vmem:[%s9] sm:$0xff]
        %v1123 = vld [vmem:[%s9 + $0x8] sm:$0xff]
        %v1124 = vld [vmem:[%s9 + $0x10] sm:$0xff]
        %v1125 = vld [vmem:[%s9 + $0x18] sm:$0xff]
        %v1126 = vld [vmem:[%s9 + $0x20] sm:$0xff]
        %v1127 = vld [vmem:[%s9 + $0x28] sm:$0xff]
        %v1128 = vld [vmem:[%s9 + $0x30] sm:$0xff]
        %v1129 = vld [vmem:[%s9 + $0x38] sm:$0xff]
        %v1130 = vld [vmem:[%s10] sm:$0x1]
        %v1132 = vperm.slane %v1130, 0
        %v1135 = vsel %vm791, %v1121, 0
        %1137 = vmatpush.msra.mxu0 0.0
        %1138 = vmatpush.msra.mxu0 0.0
        %1139 = vmatpush.msra.mxu0 0.0
        %1140 = vmatpush.msra.mxu0 0.0
        %1141 = vmatpush.msra.mxu0 0.0
        %1142 = vmatpush.msra.mxu0 0.0
        %1143 = vmatpush.msra.mxu0 0.0
        %1144 = vmatpush.msra.mxu0 0.0
        %1145 = vmatpush.msra.mxu0 %v1129
        %1146 = vmatpush.msra.mxu0 %v1128
        %1147 = vmatpush.msra.mxu0 %v1127
        %1148 = vmatpush.msra.mxu0 %v1126
        %1149 = vmatpush.msra.mxu0 %v1125
        %1150 = vmatpush.msra.mxu0 %v1124
        %1151 = vmatpush.msra.mxu0 %v1123
        %1152 = vmatpush.msra.mxu0 %v1122
        %1153 = vmatmul.f32.gmra.mxu0 %v1135
        %v1154 = vpop.f32.mrf.mxu0
        %v1155 = vadd.f32 %v1132, %v1154
        %1156 = vdwg.mxu0
        %v1157 = vadd.f32 %v734, %v1155
        %v1158 = vld [vmem:[%s11] sm:$0x1]
        %v1159 = vld [vmem:[%s12] sm:$0x1]
        %v1160 = vsel %vm737, %v1157, 0.0
        %1161 = vadd.xlane.f32.xlu0 %v1160
        %v1162 = vpop.xlane.xlu0 %1161
        %v1163 = vmul.f32 %v1162, %v747
        %v1164 = vsub.f32 %v1157, %v1163
        %v1165 = vmul.f32 %v1164, %v1164
        %v1166 = vsel %vm737, %v1165, 0.0
        %1167 = vadd.xlane.f32.xlu0 %v1166
        %v1168 = vpop.xlane.xlu0 %1167
        %v1169 = vmul.f32 %v1168, %v747
        %v1170 = vadd.f32 %v1169, 1e-05
        %v1171 = vrsqrt.pop %v1170
        %v1172 = vmul.f32 %v1171, %v1170
        %v1173 = vmul.f32 %v1172, %v1171
        %v1174 = vmul.f32 0.5, %v1173
        %v1175 = vsub.f32 1.5, %v1174
        %v1176 = vmul.f32 %v1171, %v1175
        %vm1177 = vweird.f32 %v1170
        %vm1178 = vweird.f32 %v1171
        %vm1179 = vmor %vm1177, %vm1178
        %v1180 = vsel %vm1179, %v1171, %v1176
        %v1181 = vmul.f32 %v1164, %v1180
        %v1183 = vperm.slane %v1158, 0
        %v1185 = vmul.f32 %v1181, %v1183
        %v1187 = vperm.slane %v1159, 0
        %v1189 = vadd.f32 %v1185, %v1187
        %v1190 = vld [vmem:[%s13] sm:$0xff]
        %v1191 = vld [vmem:[%s13 + $0x8] sm:$0xff]
        %v1192 = vld [vmem:[%s13 + $0x10] sm:$0xff]
        %v1193 = vld [vmem:[%s13 + $0x18] sm:$0xff]
        %v1194 = vld [vmem:[%s13 + $0x20] sm:$0xff]
        %v1195 = vld [vmem:[%s13 + $0x28] sm:$0xff]
        %v1196 = vld [vmem:[%s13 + $0x30] sm:$0xff]
        %v1197 = vld [vmem:[%s13 + $0x38] sm:$0xff]
        %v1198 = vld [vmem:[%s13 + $0x40] sm:$0xff]
        %v1199 = vld [vmem:[%s13 + $0x48] sm:$0xff]
        %v1200 = vld [vmem:[%s13 + $0x50] sm:$0xff]
        %v1201 = vld [vmem:[%s13 + $0x58] sm:$0xff]
        %v1202 = vld [vmem:[%s13 + $0x60] sm:$0xff]
        %v1203 = vld [vmem:[%s13 + $0x68] sm:$0xff]
        %v1204 = vld [vmem:[%s13 + $0x70] sm:$0xff]
        %v1205 = vld [vmem:[%s13 + $0x78] sm:$0xff]
        %v1206 = vld [vmem:[%s14] sm:$0x3]
        %v1208 = vperm.slane %v1206, 0
        %v1209 = vperm.slane %v1206, 1
        %v1213 = vsel %vm791, %v1189, 0
        %1215 = vmatpush.msra.mxu0 0.0
        %1216 = vmatpush.msra.mxu0 0.0
        %1217 = vmatpush.msra.mxu0 0.0
        %1218 = vmatpush.msra.mxu0 0.0
        %1219 = vmatpush.msra.mxu0 0.0
        %1220 = vmatpush.msra.mxu0 0.0
        %1221 = vmatpush.msra.mxu0 0.0
        %1222 = vmatpush.msra.mxu0 0.0
        %1223 = vmatpush.msra.mxu0 %v1204
        %1224 = vmatpush.msra.mxu0 %v1202
        %1225 = vmatpush.msra.mxu0 %v1200
        %1226 = vmatpush.msra.mxu0 %v1198
        %1227 = vmatpush.msra.mxu0 %v1196
        %1228 = vmatpush.msra.mxu0 %v1194
        %1229 = vmatpush.msra.mxu0 %v1192
        %1230 = vmatpush.msra.mxu0 %v1190
        %1231 = vmatmul.f32.gmra.mxu0 %v1213
        %v1232 = vpop.f32.mrf.mxu0
        %v1233 = vadd.f32 %v1208, %v1232
        %1234 = vdwg.mxu0
        %1235 = vmatpush.msra.mxu0 0.0
        %1236 = vmatpush.msra.mxu0 0.0
        %1237 = vmatpush.msra.mxu0 0.0
        %1238 = vmatpush.msra.mxu0 0.0
        %1239 = vmatpush.msra.mxu0 0.0
        %1240 = vmatpush.msra.mxu0 0.0
        %1241 = vmatpush.msra.mxu0 0.0
        %1242 = vmatpush.msra.mxu0 0.0
        %1243 = vmatpush.msra.mxu0 %v1205
        %1244 = vmatpush.msra.mxu0 %v1203
        %1245 = vmatpush.msra.mxu0 %v1201
        %1246 = vmatpush.msra.mxu0 %v1199
        %1247 = vmatpush.msra.mxu0 %v1197
        %1248 = vmatpush.msra.mxu0 %v1195
        %1249 = vmatpush.msra.mxu0 %v1193
        %1250 = vmatpush.msra.mxu0 %v1191
        %1251 = vmatmul.f32.gmra.mxu0 %v1213
        %v1252 = vpop.f32.mrf.mxu0
        %v1253 = vadd.f32 %v1209, %v1252
        %1254 = vdwg.mxu0
        %v1255 = vmul.f32 %v1233, 0.5
        %v1256 = vmul.f32 %v1253, 0.5
        %v1257 = vmul.f32 %v1233, 0.70710677
        %v1258 = vmul.f32 %v1253, 0.70710677
        %v1259 = vmul.f32 %v1257, %v1257
        %v1260 = vmin.f32 16.0, %v1259
        %v1261 = vmul.f32 %v1260, 2.1237322e-06
        %v1262 = vadd.f32 %v1261, 0.00028619796
        %v1263 = vmul.f32 %v1260, %v1262
        %v1264 = vadd.f32 %v1263, 0.0036580483
        %v1265 = vmul.f32 %v1260, %v1264
        %v1266 = vadd.f32 %v1265, 0.05243302
        %v1267 = vmul.f32 %v1260, %v1266
        %v1268 = vadd.f32 %v1267, 0.18741608
        %v1269 = vmul.f32 %v1260, %v1268
        %v1270 = vadd.f32 %v1269, 1.1283791
        %v1271 = vmul.f32 %v1257, %v1270
        %v1272 = vmul.f32 %v1260, 3.8918573e-05
        %v1273 = vadd.f32 %v1272, 0.001143296
        %v1274 = vmul.f32 %v1260, %v1273
        %v1275 = vadd.f32 %v1274, 0.014752088
        %v1276 = vmul.f32 %v1260, %v1275
        %v1277 = vadd.f32 %v1276, 0.112945676
        %v1278 = vmul.f32 %v1260, %v1277
        %v1279 = vadd.f32 %v1278, 0.4994258
        %v1280 = vmul.f32 %v1260, %v1279
        %v1281 = vadd.f32 %v1280, 1.0
        %v1282 = vrcp.pop %v1281
        %v1283 = vmul.f32 %v1281, %v1282
        %v1284 = vsub.f32 1.0, %v1283
        %v1285 = vmul.f32 %v1282, %v1284
        %v1286 = vadd.f32 %v1282, %v1285
        %vm1287 = vweird.f32 %v1281
        %vm1288 = vweird.f32 %v1282
        %vm1289 = vmor %vm1287, %vm1288
        %v1290 = vsel %vm1289, %v1282, %v1286
        %v1291 = vand.u32 2147483647, %v1281
        %vm1292 = vcmp.eq.f32.partialorder %v1291, 8.507059e+37
        %v1293 = vand.u32 %v1281, 2147483648
        %v1294 = vor.u32 1.1754944e-38, %v1293
        %v1295 = vsel %vm1292, %v1294, %v1290
        %v1296 = vmul.f32 %v1271, %v1295
        %v1297 = vmin.f32 %v1296, 1.0
        %v1298 = vmax.f32 %v1297, -1.0
        %v1299 = vmul.f32 %v1258, %v1258
        %v1300 = vmin.f32 16.0, %v1299
        %v1301 = vmul.f32 %v1300, 2.1237322e-06
        %v1302 = vadd.f32 %v1301, 0.00028619796
        %v1303 = vmul.f32 %v1300, %v1302
        %v1304 = vadd.f32 %v1303, 0.0036580483
        %v1305 = vmul.f32 %v1300, %v1304
        %v1306 = vadd.f32 %v1305, 0.05243302
        %v1307 = vmul.f32 %v1300, %v1306
        %v1308 = vadd.f32 %v1307, 0.18741608
        %v1309 = vmul.f32 %v1300, %v1308
        %v1310 = vadd.f32 %v1309, 1.1283791
        %v1311 = vmul.f32 %v1258, %v1310
        %v1312 = vmul.f32 %v1300, 3.8918573e-05
        %v1313 = vadd.f32 %v1312, 0.001143296
        %v1314 = vmul.f32 %v1300, %v1313
        %v1315 = vadd.f32 %v1314, 0.014752088
        %v1316 = vmul.f32 %v1300, %v1315
        %v1317 = vadd.f32 %v1316, 0.112945676
        %v1318 = vmul.f32 %v1300, %v1317
        %v1319 = vadd.f32 %v1318, 0.4994258
        %v1320 = vmul.f32 %v1300, %v1319
        %v1321 = vadd.f32 %v1320, 1.0
        %v1322 = vrcp.pop %v1321
        %v1323 = vmul.f32 %v1321, %v1322
        %v1324 = vsub.f32 1.0, %v1323
        %v1325 = vmul.f32 %v1322, %v1324
        %v1326 = vadd.f32 %v1322, %v1325
        %vm1327 = vweird.f32 %v1321
        %vm1328 = vweird.f32 %v1322
        %vm1329 = vmor %vm1327, %vm1328
        %v1330 = vsel %vm1329, %v1322, %v1326
        %v1331 = vand.u32 2147483647, %v1321
        %vm1332 = vcmp.eq.f32.partialorder %v1331, 8.507059e+37
        %v1333 = vand.u32 %v1321, 2147483648
        %v1334 = vor.u32 1.1754944e-38, %v1333
        %v1335 = vsel %vm1332, %v1334, %v1330
        %v1336 = vmul.f32 %v1311, %v1335
        %v1337 = vmin.f32 %v1336, 1.0
        %v1338 = vmax.f32 %v1337, -1.0
        %v1339 = vadd.f32 %v1298, 1.0
        %v1340 = vadd.f32 %v1338, 1.0
        %v1341 = vmul.f32 %v1255, %v1339
        %v1342 = vmul.f32 %v1256, %v1340
        %v1343 = vld [vmem:[%s15] sm:$0xff]
        %v1344 = vld [vmem:[%s15 + $0x8] sm:$0xff]
        %v1345 = vld [vmem:[%s15 + $0x10] sm:$0xff]
        %v1346 = vld [vmem:[%s15 + $0x18] sm:$0xff]
        %v1347 = vld [vmem:[%s15 + $0x20] sm:$0xff]
        %v1348 = vld [vmem:[%s15 + $0x28] sm:$0xff]
        %v1349 = vld [vmem:[%s15 + $0x30] sm:$0xff]
        %v1350 = vld [vmem:[%s15 + $0x38] sm:$0xff]
        %v1351 = vld [vmem:[%s15 + $0x40] sm:$0xff]
        %v1352 = vld [vmem:[%s15 + $0x48] sm:$0xff]
        %v1353 = vld [vmem:[%s15 + $0x50] sm:$0xff]
        %v1354 = vld [vmem:[%s15 + $0x58] sm:$0xff]
        %v1355 = vld [vmem:[%s15 + $0x60] sm:$0xff]
        %v1356 = vld [vmem:[%s15 + $0x68] sm:$0xff]
        %v1357 = vld [vmem:[%s15 + $0x70] sm:$0xff]
        %v1358 = vld [vmem:[%s15 + $0x78] sm:$0xff]
        %v1359 = vld [vmem:[%s15 + $0x80] sm:$0xff]
        %v1360 = vld [vmem:[%s15 + $0x88] sm:$0xff]
        %v1361 = vld [vmem:[%s15 + $0x90] sm:$0xff]
        %v1362 = vld [vmem:[%s15 + $0x98] sm:$0xff]
        %v1363 = vld [vmem:[%s15 + $0xa0] sm:$0xff]
        %v1364 = vld [vmem:[%s15 + $0xa8] sm:$0xff]
        %v1365 = vld [vmem:[%s15 + $0xb0] sm:$0xff]
        %v1366 = vld [vmem:[%s15 + $0xb8] sm:$0xff]
        %v1367 = vld [vmem:[%s15 + $0xc0] sm:$0xff]
        %v1368 = vld [vmem:[%s15 + $0xc8] sm:$0xff]
        %v1369 = vld [vmem:[%s15 + $0xd0] sm:$0xff]
        %v1370 = vld [vmem:[%s15 + $0xd8] sm:$0xff]
        %v1371 = vld [vmem:[%s15 + $0xe0] sm:$0xff]
        %v1372 = vld [vmem:[%s15 + $0xe8] sm:$0xff]
        %v1373 = vld [vmem:[%s15 + $0xf0] sm:$0xff]
        %v1374 = vld [vmem:[%s15 + $0xf8] sm:$0xff]
        %v1375 = vld [vmem:[%s16] sm:$0x1]
        %v1377 = vperm.slane %v1375, 0
        %1379 = vmatpush.msra.mxu0 %v1358
        %1380 = vmatpush.msra.mxu0 %v1357
        %1381 = vmatpush.msra.mxu0 %v1356
        %1382 = vmatpush.msra.mxu0 %v1355
        %1383 = vmatpush.msra.mxu0 %v1354
        %1384 = vmatpush.msra.mxu0 %v1353
        %1385 = vmatpush.msra.mxu0 %v1352
        %1386 = vmatpush.msra.mxu0 %v1351
        %1387 = vmatpush.msra.mxu0 %v1350
        %1388 = vmatpush.msra.mxu0 %v1349
        %1389 = vmatpush.msra.mxu0 %v1348
        %1390 = vmatpush.msra.mxu0 %v1347
        %1391 = vmatpush.msra.mxu0 %v1346
        %1392 = vmatpush.msra.mxu0 %v1345
        %1393 = vmatpush.msra.mxu0 %v1344
        %1394 = vmatpush.msra.mxu0 %v1343
        %1395 = vmatmul.f32.gmra.mxu0 %v1341
        %v1396 = vpop.f32.mrf.mxu0
        %v1397 = vadd.f32 %v1377, %v1396
        %1398 = vdwg.mxu0
        %1399 = vmatpush.msra.mxu0 %v1374
        %1400 = vmatpush.msra.mxu0 %v1373
        %1401 = vmatpush.msra.mxu0 %v1372
        %1402 = vmatpush.msra.mxu0 %v1371
        %1403 = vmatpush.msra.mxu0 %v1370
        %1404 = vmatpush.msra.mxu0 %v1369
        %1405 = vmatpush.msra.mxu0 %v1368
        %1406 = vmatpush.msra.mxu0 %v1367
        %1407 = vmatpush.msra.mxu0 %v1366
        %1408 = vmatpush.msra.mxu0 %v1365
        %1409 = vmatpush.msra.mxu0 %v1364
        %1410 = vmatpush.msra.mxu0 %v1363
        %1411 = vmatpush.msra.mxu0 %v1362
        %1412 = vmatpush.msra.mxu0 %v1361
        %1413 = vmatpush.msra.mxu0 %v1360
        %1414 = vmatpush.msra.mxu0 %v1359
        %1415 = vmatmul.f32.gmra.mxu0 %v1342
        %v1416 = vpop.f32.mrf.mxu0
        %v1417 = vadd.f32 %v1397, %v1416
        %1418 = vdwg.mxu0
        %v1419 = vadd.f32 %v1157, %v1417
        %v1420 = vadd.f32 %v1419, %v731
        %s1421 = scalar_lea.vmem %s6, 1
        %v1422 = vld [vmem:[%s1421] sm:$0x1]
        %s1423 = scalar_lea.vmem %s7, 1
        %v1424 = vld [vmem:[%s1423] sm:$0x1]
        %v1425 = vsel %vm737, %v1420, 0.0
        %1426 = vadd.xlane.f32.xlu0 %v1425
        %v1427 = vpop.xlane.xlu0 %1426
        %v1428 = vmul.f32 %v1427, %v747
        %v1429 = vsub.f32 %v1420, %v1428
        %v1430 = vmul.f32 %v1429, %v1429
        %v1431 = vsel %vm737, %v1430, 0.0
        %1432 = vadd.xlane.f32.xlu0 %v1431
        %v1433 = vpop.xlane.xlu0 %1432
        %v1434 = vmul.f32 %v1433, %v747
        %v1435 = vadd.f32 %v1434, 1e-05
        %v1436 = vrsqrt.pop %v1435
        %v1437 = vmul.f32 %v1436, %v1435
        %v1438 = vmul.f32 %v1437, %v1436
        %v1439 = vmul.f32 0.5, %v1438
        %v1440 = vsub.f32 1.5, %v1439
        %v1441 = vmul.f32 %v1436, %v1440
        %vm1442 = vweird.f32 %v1435
        %vm1443 = vweird.f32 %v1436
        %vm1444 = vmor %vm1442, %vm1443
        %v1445 = vsel %vm1444, %v1436, %v1441
        %v1446 = vmul.f32 %v1429, %v1445
        %v1448 = vperm.slane %v1422, 0
        %v1450 = vmul.f32 %v1446, %v1448
        %v1452 = vperm.slane %v1424, 0
        %v1454 = vadd.f32 %v1450, %v1452
        %s1455 = scalar_lea.vmem %s8, 128
        %v1456 = vld [vmem:[%s1455] sm:$0xff]
        %v1457 = vld [vmem:[%s1455 + $0x8] sm:$0xff]
        %v1458 = vld [vmem:[%s1455 + $0x10] sm:$0xff]
        %v1459 = vld [vmem:[%s1455 + $0x18] sm:$0xff]
        %v1460 = vld [vmem:[%s1455 + $0x20] sm:$0xff]
        %v1461 = vld [vmem:[%s1455 + $0x28] sm:$0xff]
        %v1462 = vld [vmem:[%s1455 + $0x30] sm:$0xff]
        %v1463 = vld [vmem:[%s1455 + $0x38] sm:$0xff]
        %v1464 = vld [vmem:[%s1455 + $0x40] sm:$0xff]
        %v1465 = vld [vmem:[%s1455 + $0x48] sm:$0xff]
        %v1466 = vld [vmem:[%s1455 + $0x50] sm:$0xff]
        %v1467 = vld [vmem:[%s1455 + $0x58] sm:$0xff]
        %v1468 = vld [vmem:[%s1455 + $0x60] sm:$0xff]
        %v1469 = vld [vmem:[%s1455 + $0x68] sm:$0xff]
        %v1470 = vld [vmem:[%s1455 + $0x70] sm:$0xff]
        %v1471 = vld [vmem:[%s1455 + $0x78] sm:$0xff]
        %v1473 = vsel %vm791, %v1454, 0
        %1475 = vmatpush.msra.mxu0 0.0
        %1476 = vmatpush.msra.mxu0 0.0
        %1477 = vmatpush.msra.mxu0 0.0
        %1478 = vmatpush.msra.mxu0 0.0
        %1479 = vmatpush.msra.mxu0 0.0
        %1480 = vmatpush.msra.mxu0 0.0
        %1481 = vmatpush.msra.mxu0 0.0
        %1482 = vmatpush.msra.mxu0 0.0
        %1483 = vmatpush.msra.mxu0 %v1470
        %1484 = vmatpush.msra.mxu0 %v1468
        %1485 = vmatpush.msra.mxu0 %v1466
        %1486 = vmatpush.msra.mxu0 %v1464
        %1487 = vmatpush.msra.mxu0 %v1462
        %1488 = vmatpush.msra.mxu0 %v1460
        %1489 = vmatpush.msra.mxu0 %v1458
        %1490 = vmatpush.msra.mxu0 %v1456
        %1491 = vmatmul.f32.gmra.mxu0 %v1473
        %v1492 = vpop.f32.mrf.mxu0
        %v1493 = vadd.f32 0.0, %v1492
        %1494 = vdwg.mxu0
        %1495 = vmatpush.msra.mxu0 0.0
        %1496 = vmatpush.msra.mxu0 0.0
        %1497 = vmatpush.msra.mxu0 0.0
        %1498 = vmatpush.msra.mxu0 0.0
        %1499 = vmatpush.msra.mxu0 0.0
        %1500 = vmatpush.msra.mxu0 0.0
        %1501 = vmatpush.msra.mxu0 0.0
        %1502 = vmatpush.msra.mxu0 0.0
        %1503 = vmatpush.msra.mxu0 %v1471
        %1504 = vmatpush.msra.mxu0 %v1469
        %1505 = vmatpush.msra.mxu0 %v1467
        %1506 = vmatpush.msra.mxu0 %v1465
        %1507 = vmatpush.msra.mxu0 %v1463
        %1508 = vmatpush.msra.mxu0 %v1461
        %1509 = vmatpush.msra.mxu0 %v1459
        %1510 = vmatpush.msra.mxu0 %v1457
        %1511 = vmatmul.f32.gmra.mxu0 %v1473
        %v1512 = vpop.f32.mrf.mxu0
        %v1513 = vadd.f32 0.0, %v1512
        %1514 = vdwg.mxu0
        %1516 = vrot.lane.b32.xlu0 %v1493, 112
        %v1517 = vpop.permute.xlu0 %1516
        %1518 = vrot.lane.b32.xlu0 %v1493, 96
        %v1519 = vpop.permute.xlu0 %1518
        %1520 = vrot.lane.b32.xlu0 %v1493, 80
        %v1521 = vpop.permute.xlu0 %1520
        %1523 = vrot.lane.b32.xlu0 %v1513, 112
        %v1524 = vpop.permute.xlu0 %1523
        %1525 = vrot.lane.b32.xlu0 %v1513, 96
        %v1526 = vpop.permute.xlu0 %1525
        %1527 = vrot.lane.b32.xlu0 %v1513, 80
        %v1528 = vpop.permute.xlu0 %1527
        %1529 = vrot.lane.b32.xlu0 %v1493, 64
        %v1530 = vpop.permute.xlu0 %1529
        %v1531 = vsel %vm851, %v1493, 0
        %v1533 = vsel %vm851, %v1530, 0
        %1535 = vmatpush.xpose.msra.mxu0 0.0
        %1536 = vmatpush.xpose.msra.mxu0 0.0
        %1537 = vmatpush.xpose.msra.mxu0 0.0
        %1538 = vmatpush.xpose.msra.mxu0 0.0
        %1539 = vmatpush.xpose.msra.mxu0 0.0
        %1540 = vmatpush.xpose.msra.mxu0 0.0
        %1541 = vmatpush.xpose.msra.mxu0 0.0
        %1542 = vmatpush.xpose.msra.mxu0 0.0
        %1543 = vmatpush.xpose.msra.mxu0 0.0
        %1544 = vmatpush.xpose.msra.mxu0 0.0
        %1545 = vmatpush.xpose.msra.mxu0 0.0
        %1546 = vmatpush.xpose.msra.mxu0 0.0
        %1547 = vmatpush.xpose.msra.mxu0 0.0
        %1548 = vmatpush.xpose.msra.mxu0 0.0
        %1549 = vmatpush.xpose.msra.mxu0 0.0
        %1550 = vmatpush.xpose.msra.mxu0 %v1533
        %1551 = vmatmul.f32.gmra.mxu0 %v1531
        %v1552 = vpop.f32.mrf.mxu0
        %v1553 = vadd.f32 0.0, %v1552
        %1554 = vdwg.mxu0
        %1555 = vrot.lane.b32.xlu0 %v1517, 64
        %v1556 = vpop.permute.xlu0 %1555
        %v1557 = vsel %vm851, %v1517, 0
        %v1559 = vsel %vm851, %v1556, 0
        %1561 = vmatpush.xpose.msra.mxu0 0.0
        %1562 = vmatpush.xpose.msra.mxu0 0.0
        %1563 = vmatpush.xpose.msra.mxu0 0.0
        %1564 = vmatpush.xpose.msra.mxu0 0.0
        %1565 = vmatpush.xpose.msra.mxu0 0.0
        %1566 = vmatpush.xpose.msra.mxu0 0.0
        %1567 = vmatpush.xpose.msra.mxu0 0.0
        %1568 = vmatpush.xpose.msra.mxu0 0.0
        %1569 = vmatpush.xpose.msra.mxu0 0.0
        %1570 = vmatpush.xpose.msra.mxu0 0.0
        %1571 = vmatpush.xpose.msra.mxu0 0.0
        %1572 = vmatpush.xpose.msra.mxu0 0.0
        %1573 = vmatpush.xpose.msra.mxu0 0.0
        %1574 = vmatpush.xpose.msra.mxu0 0.0
        %1575 = vmatpush.xpose.msra.mxu0 0.0
        %1576 = vmatpush.xpose.msra.mxu0 %v1559
        %1577 = vmatmul.f32.gmra.mxu0 %v1557
        %v1578 = vpop.f32.mrf.mxu0
        %v1579 = vadd.f32 0.0, %v1578
        %1580 = vdwg.mxu0
        %1581 = vrot.lane.b32.xlu0 %v1519, 64
        %v1582 = vpop.permute.xlu0 %1581
        %v1583 = vsel %vm851, %v1519, 0
        %v1585 = vsel %vm851, %v1582, 0
        %1587 = vmatpush.xpose.msra.mxu0 0.0
        %1588 = vmatpush.xpose.msra.mxu0 0.0
        %1589 = vmatpush.xpose.msra.mxu0 0.0
        %1590 = vmatpush.xpose.msra.mxu0 0.0
        %1591 = vmatpush.xpose.msra.mxu0 0.0
        %1592 = vmatpush.xpose.msra.mxu0 0.0
        %1593 = vmatpush.xpose.msra.mxu0 0.0
        %1594 = vmatpush.xpose.msra.mxu0 0.0
        %1595 = vmatpush.xpose.msra.mxu0 0.0
        %1596 = vmatpush.xpose.msra.mxu0 0.0
        %1597 = vmatpush.xpose.msra.mxu0 0.0
        %1598 = vmatpush.xpose.msra.mxu0 0.0
        %1599 = vmatpush.xpose.msra.mxu0 0.0
        %1600 = vmatpush.xpose.msra.mxu0 0.0
        %1601 = vmatpush.xpose.msra.mxu0 0.0
        %1602 = vmatpush.xpose.msra.mxu0 %v1585
        %1603 = vmatmul.f32.gmra.mxu0 %v1583
        %v1604 = vpop.f32.mrf.mxu0
        %v1605 = vadd.f32 0.0, %v1604
        %1606 = vdwg.mxu0
        %1607 = vrot.lane.b32.xlu0 %v1521, 64
        %v1608 = vpop.permute.xlu0 %1607
        %v1609 = vsel %vm851, %v1521, 0
        %v1611 = vsel %vm851, %v1608, 0
        %1613 = vmatpush.xpose.msra.mxu0 0.0
        %1614 = vmatpush.xpose.msra.mxu0 0.0
        %1615 = vmatpush.xpose.msra.mxu0 0.0
        %1616 = vmatpush.xpose.msra.mxu0 0.0
        %1617 = vmatpush.xpose.msra.mxu0 0.0
        %1618 = vmatpush.xpose.msra.mxu0 0.0
        %1619 = vmatpush.xpose.msra.mxu0 0.0
        %1620 = vmatpush.xpose.msra.mxu0 0.0
        %1621 = vmatpush.xpose.msra.mxu0 0.0
        %1622 = vmatpush.xpose.msra.mxu0 0.0
        %1623 = vmatpush.xpose.msra.mxu0 0.0
        %1624 = vmatpush.xpose.msra.mxu0 0.0
        %1625 = vmatpush.xpose.msra.mxu0 0.0
        %1626 = vmatpush.xpose.msra.mxu0 0.0
        %1627 = vmatpush.xpose.msra.mxu0 0.0
        %1628 = vmatpush.xpose.msra.mxu0 %v1611
        %1629 = vmatmul.f32.gmra.mxu0 %v1609
        %v1630 = vpop.f32.mrf.mxu0
        %v1631 = vadd.f32 0.0, %v1630
        %1632 = vdwg.mxu0
        %v1633 = vmul.f32 %v1553, 0.25
        %v1634 = vmul.f32 %v1579, 0.25
        %v1635 = vmul.f32 %v1605, 0.25
        %v1636 = vmul.f32 %v1631, 0.25
        %v1637 = vsel %vm958, %v1633, -inf
        %1638 = vmax.xlane.f32.xlu0 %v1637
        %v1639 = vpop.xlane.xlu0 %1638
        %v1640 = vsel %vm958, %v1634, -inf
        %1641 = vmax.xlane.f32.xlu0 %v1640
        %v1642 = vpop.xlane.xlu0 %1641
        %v1643 = vsel %vm958, %v1635, -inf
        %1644 = vmax.xlane.f32.xlu0 %v1643
        %v1645 = vpop.xlane.xlu0 %1644
        %v1646 = vsel %vm958, %v1636, -inf
        %1647 = vmax.xlane.f32.xlu0 %v1646
        %v1648 = vpop.xlane.xlu0 %1647
        %v1649 = vsub.f32 %v1633, %v1639
        %v1650 = vsub.f32 %v1634, %v1642
        %v1651 = vsub.f32 %v1635, %v1645
        %v1652 = vsub.f32 %v1636, %v1648
        %v1653 = vmul.f32 %v1649, 1.442695
        %v1654 = vpow.pop %v1653
        %v1655 = vmul.f32 %v1650, 1.442695
        %v1656 = vpow.pop %v1655
        %v1657 = vmul.f32 %v1651, 1.442695
        %v1658 = vpow.pop %v1657
        %v1659 = vmul.f32 %v1652, 1.442695
        %v1660 = vpow.pop %v1659
        %v1661 = vsel %vm958, %v1654, 0.0
        %1662 = vadd.xlane.f32.xlu0 %v1661
        %v1663 = vpop.xlane.xlu0 %1662
        %v1664 = vsel %vm958, %v1656, 0.0
        %1665 = vadd.xlane.f32.xlu0 %v1664
        %v1666 = vpop.xlane.xlu0 %1665
        %v1667 = vsel %vm958, %v1658, 0.0
        %1668 = vadd.xlane.f32.xlu0 %v1667
        %v1669 = vpop.xlane.xlu0 %1668
        %v1670 = vsel %vm958, %v1660, 0.0
        %1671 = vadd.xlane.f32.xlu0 %v1670
        %v1672 = vpop.xlane.xlu0 %1671
        %v1673 = vrcp.pop %v1663
        %v1674 = vrcp.pop %v1666
        %v1675 = vrcp.pop %v1669
        %v1676 = vrcp.pop %v1672
        %v1677 = vmul.f32 %v1654, %v1673
        %v1678 = vmul.f32 %v1656, %v1674
        %v1679 = vmul.f32 %v1658, %v1675
        %v1680 = vmul.f32 %v1660, %v1676
        %v1682 = vsel %vm1003, %v1677, 0
        %v1684 = vsel %vm1007, %v1513, 0
        %1686 = vmatpush.msra.mxu0 0.0
        %1687 = vmatpush.msra.mxu0 0.0
        %1688 = vmatpush.msra.mxu0 0.0
        %1689 = vmatpush.msra.mxu0 0.0
        %1690 = vmatpush.msra.mxu0 0.0
        %1691 = vmatpush.msra.mxu0 0.0
        %1692 = vmatpush.msra.mxu0 0.0
        %1693 = vmatpush.msra.mxu0 0.0
        %1694 = vmatpush.msra.mxu0 0.0
        %1695 = vmatpush.msra.mxu0 0.0
        %1696 = vmatpush.msra.mxu0 0.0
        %1697 = vmatpush.msra.mxu0 0.0
        %1698 = vmatpush.msra.mxu0 0.0
        %1699 = vmatpush.msra.mxu0 0.0
        %1700 = vmatpush.msra.mxu0 0.0
        %1701 = vmatpush.msra.mxu0 %v1684
        %1702 = vmatmul.f32.gmra.mxu0 %v1682
        %v1703 = vpop.f32.mrf.mxu0
        %v1704 = vadd.f32 0.0, %v1703
        %1705 = vdwg.mxu0
        %v1707 = vsel %vm1003, %v1678, 0
        %v1709 = vsel %vm1007, %v1524, 0
        %1711 = vmatpush.msra.mxu0 0.0
        %1712 = vmatpush.msra.mxu0 0.0
        %1713 = vmatpush.msra.mxu0 0.0
        %1714 = vmatpush.msra.mxu0 0.0
        %1715 = vmatpush.msra.mxu0 0.0
        %1716 = vmatpush.msra.mxu0 0.0
        %1717 = vmatpush.msra.mxu0 0.0
        %1718 = vmatpush.msra.mxu0 0.0
        %1719 = vmatpush.msra.mxu0 0.0
        %1720 = vmatpush.msra.mxu0 0.0
        %1721 = vmatpush.msra.mxu0 0.0
        %1722 = vmatpush.msra.mxu0 0.0
        %1723 = vmatpush.msra.mxu0 0.0
        %1724 = vmatpush.msra.mxu0 0.0
        %1725 = vmatpush.msra.mxu0 0.0
        %1726 = vmatpush.msra.mxu0 %v1709
        %1727 = vmatmul.f32.gmra.mxu0 %v1707
        %v1728 = vpop.f32.mrf.mxu0
        %v1729 = vadd.f32 0.0, %v1728
        %1730 = vdwg.mxu0
        %v1732 = vsel %vm1003, %v1679, 0
        %v1734 = vsel %vm1007, %v1526, 0
        %1736 = vmatpush.msra.mxu0 0.0
        %1737 = vmatpush.msra.mxu0 0.0
        %1738 = vmatpush.msra.mxu0 0.0
        %1739 = vmatpush.msra.mxu0 0.0
        %1740 = vmatpush.msra.mxu0 0.0
        %1741 = vmatpush.msra.mxu0 0.0
        %1742 = vmatpush.msra.mxu0 0.0
        %1743 = vmatpush.msra.mxu0 0.0
        %1744 = vmatpush.msra.mxu0 0.0
        %1745 = vmatpush.msra.mxu0 0.0
        %1746 = vmatpush.msra.mxu0 0.0
        %1747 = vmatpush.msra.mxu0 0.0
        %1748 = vmatpush.msra.mxu0 0.0
        %1749 = vmatpush.msra.mxu0 0.0
        %1750 = vmatpush.msra.mxu0 0.0
        %1751 = vmatpush.msra.mxu0 %v1734
        %1752 = vmatmul.f32.gmra.mxu0 %v1732
        %v1753 = vpop.f32.mrf.mxu0
        %v1754 = vadd.f32 0.0, %v1753
        %1755 = vdwg.mxu0
        %v1757 = vsel %vm1003, %v1680, 0
        %v1759 = vsel %vm1007, %v1528, 0
        %1761 = vmatpush.msra.mxu0 0.0
        %1762 = vmatpush.msra.mxu0 0.0
        %1763 = vmatpush.msra.mxu0 0.0
        %1764 = vmatpush.msra.mxu0 0.0
        %1765 = vmatpush.msra.mxu0 0.0
        %1766 = vmatpush.msra.mxu0 0.0
        %1767 = vmatpush.msra.mxu0 0.0
        %1768 = vmatpush.msra.mxu0 0.0
        %1769 = vmatpush.msra.mxu0 0.0
        %1770 = vmatpush.msra.mxu0 0.0
        %1771 = vmatpush.msra.mxu0 0.0
        %1772 = vmatpush.msra.mxu0 0.0
        %1773 = vmatpush.msra.mxu0 0.0
        %1774 = vmatpush.msra.mxu0 0.0
        %1775 = vmatpush.msra.mxu0 0.0
        %1776 = vmatpush.msra.mxu0 %v1759
        %1777 = vmatmul.f32.gmra.mxu0 %v1757
        %v1778 = vpop.f32.mrf.mxu0
        %v1779 = vadd.f32 0.0, %v1778
        %1780 = vdwg.mxu0
        %1782 = vrot.lane.b32.xlu0 %v1729, 16
        %v1783 = vpop.permute.xlu0 %1782
        %1786 = vrot.lane.b32.xlu0 %v1754, 32
        %v1787 = vpop.permute.xlu0 %1786
        %1790 = vrot.lane.b32.xlu0 %v1779, 48
        %v1791 = vpop.permute.xlu0 %1790
        %v1793 = vsel %vm851, %v1704, %v1783
        %v1794 = vsel %vm1118, %v1793, %v1787
        %v1795 = vsel %vm1120, %v1794, %v1791
        %s1796 = scalar_lea.vmem %s9, 64
        %v1797 = vld [vmem:[%s1796] sm:$0xff]
        %v1798 = vld [vmem:[%s1796 + $0x8] sm:$0xff]
        %v1799 = vld [vmem:[%s1796 + $0x10] sm:$0xff]
        %v1800 = vld [vmem:[%s1796 + $0x18] sm:$0xff]
        %v1801 = vld [vmem:[%s1796 + $0x20] sm:$0xff]
        %v1802 = vld [vmem:[%s1796 + $0x28] sm:$0xff]
        %v1803 = vld [vmem:[%s1796 + $0x30] sm:$0xff]
        %v1804 = vld [vmem:[%s1796 + $0x38] sm:$0xff]
        %s1805 = scalar_lea.vmem %s10, 1
        %v1806 = vld [vmem:[%s1805] sm:$0x1]
        %v1808 = vperm.slane %v1806, 0
        %v1811 = vsel %vm791, %v1795, 0
        %1813 = vmatpush.msra.mxu0 0.0
        %1814 = vmatpush.msra.mxu0 0.0
        %1815 = vmatpush.msra.mxu0 0.0
        %1816 = vmatpush.msra.mxu0 0.0
        %1817 = vmatpush.msra.mxu0 0.0
        %1818 = vmatpush.msra.mxu0 0.0
        %1819 = vmatpush.msra.mxu0 0.0
        %1820 = vmatpush.msra.mxu0 0.0
        %1821 = vmatpush.msra.mxu0 %v1804
        %1822 = vmatpush.msra.mxu0 %v1803
        %1823 = vmatpush.msra.mxu0 %v1802
        %1824 = vmatpush.msra.mxu0 %v1801
        %1825 = vmatpush.msra.mxu0 %v1800
        %1826 = vmatpush.msra.mxu0 %v1799
        %1827 = vmatpush.msra.mxu0 %v1798
        %1828 = vmatpush.msra.mxu0 %v1797
        %1829 = vmatmul.f32.gmra.mxu0 %v1811
        %v1830 = vpop.f32.mrf.mxu0
        %v1831 = vadd.f32 %v1808, %v1830
        %1832 = vdwg.mxu0
        %v1833 = vadd.f32 %v1420, %v1831
        %s1834 = scalar_lea.vmem %s11, 1
        %v1835 = vld [vmem:[%s1834] sm:$0x1]
        %s1836 = scalar_lea.vmem %s12, 1
        %v1837 = vld [vmem:[%s1836] sm:$0x1]
        %v1838 = vsel %vm737, %v1833, 0.0
        %1839 = vadd.xlane.f32.xlu0 %v1838
        %v1840 = vpop.xlane.xlu0 %1839
        %v1841 = vmul.f32 %v1840, %v747
        %v1842 = vsub.f32 %v1833, %v1841
        %v1843 = vmul.f32 %v1842, %v1842
        %v1844 = vsel %vm737, %v1843, 0.0
        %1845 = vadd.xlane.f32.xlu0 %v1844
        %v1846 = vpop.xlane.xlu0 %1845
        %v1847 = vmul.f32 %v1846, %v747
        %v1848 = vadd.f32 %v1847, 1e-05
        %v1849 = vrsqrt.pop %v1848
        %v1850 = vmul.f32 %v1849, %v1848
        %v1851 = vmul.f32 %v1850, %v1849
        %v1852 = vmul.f32 0.5, %v1851
        %v1853 = vsub.f32 1.5, %v1852
        %v1854 = vmul.f32 %v1849, %v1853
        %vm1855 = vweird.f32 %v1848
        %vm1856 = vweird.f32 %v1849
        %vm1857 = vmor %vm1855, %vm1856
        %v1858 = vsel %vm1857, %v1849, %v1854
        %v1859 = vmul.f32 %v1842, %v1858
        %v1861 = vperm.slane %v1835, 0
        %v1863 = vmul.f32 %v1859, %v1861
        %v1865 = vperm.slane %v1837, 0
        %v1867 = vadd.f32 %v1863, %v1865
        %s1868 = scalar_lea.vmem %s13, 128
        %v1869 = vld [vmem:[%s1868] sm:$0xff]
        %v1870 = vld [vmem:[%s1868 + $0x8] sm:$0xff]
        %v1871 = vld [vmem:[%s1868 + $0x10] sm:$0xff]
        %v1872 = vld [vmem:[%s1868 + $0x18] sm:$0xff]
        %v1873 = vld [vmem:[%s1868 + $0x20] sm:$0xff]
        %v1874 = vld [vmem:[%s1868 + $0x28] sm:$0xff]
        %v1875 = vld [vmem:[%s1868 + $0x30] sm:$0xff]
        %v1876 = vld [vmem:[%s1868 + $0x38] sm:$0xff]
        %v1877 = vld [vmem:[%s1868 + $0x40] sm:$0xff]
        %v1878 = vld [vmem:[%s1868 + $0x48] sm:$0xff]
        %v1879 = vld [vmem:[%s1868 + $0x50] sm:$0xff]
        %v1880 = vld [vmem:[%s1868 + $0x58] sm:$0xff]
        %v1881 = vld [vmem:[%s1868 + $0x60] sm:$0xff]
        %v1882 = vld [vmem:[%s1868 + $0x68] sm:$0xff]
        %v1883 = vld [vmem:[%s1868 + $0x70] sm:$0xff]
        %v1884 = vld [vmem:[%s1868 + $0x78] sm:$0xff]
        %s1885 = scalar_lea.vmem %s14, 2
        %v1886 = vld [vmem:[%s1885] sm:$0x3]
        %v1888 = vperm.slane %v1886, 0
        %v1889 = vperm.slane %v1886, 1
        %v1893 = vsel %vm791, %v1867, 0
        %1895 = vmatpush.msra.mxu0 0.0
        %1896 = vmatpush.msra.mxu0 0.0
        %1897 = vmatpush.msra.mxu0 0.0
        %1898 = vmatpush.msra.mxu0 0.0
        %1899 = vmatpush.msra.mxu0 0.0
        %1900 = vmatpush.msra.mxu0 0.0
        %1901 = vmatpush.msra.mxu0 0.0
        %1902 = vmatpush.msra.mxu0 0.0
        %1903 = vmatpush.msra.mxu0 %v1883
        %1904 = vmatpush.msra.mxu0 %v1881
        %1905 = vmatpush.msra.mxu0 %v1879
        %1906 = vmatpush.msra.mxu0 %v1877
        %1907 = vmatpush.msra.mxu0 %v1875
        %1908 = vmatpush.msra.mxu0 %v1873
        %1909 = vmatpush.msra.mxu0 %v1871
        %1910 = vmatpush.msra.mxu0 %v1869
        %1911 = vmatmul.f32.gmra.mxu0 %v1893
        %v1912 = vpop.f32.mrf.mxu0
        %v1913 = vadd.f32 %v1888, %v1912
        %1914 = vdwg.mxu0
        %1915 = vmatpush.msra.mxu0 0.0
        %1916 = vmatpush.msra.mxu0 0.0
        %1917 = vmatpush.msra.mxu0 0.0
        %1918 = vmatpush.msra.mxu0 0.0
        %1919 = vmatpush.msra.mxu0 0.0
        %1920 = vmatpush.msra.mxu0 0.0
        %1921 = vmatpush.msra.mxu0 0.0
        %1922 = vmatpush.msra.mxu0 0.0
        %1923 = vmatpush.msra.mxu0 %v1884
        %1924 = vmatpush.msra.mxu0 %v1882
        %1925 = vmatpush.msra.mxu0 %v1880
        %1926 = vmatpush.msra.mxu0 %v1878
        %1927 = vmatpush.msra.mxu0 %v1876
        %1928 = vmatpush.msra.mxu0 %v1874
        %1929 = vmatpush.msra.mxu0 %v1872
        %1930 = vmatpush.msra.mxu0 %v1870
        %1931 = vmatmul.f32.gmra.mxu0 %v1893
        %v1932 = vpop.f32.mrf.mxu0
        %v1933 = vadd.f32 %v1889, %v1932
        %1934 = vdwg.mxu0
        %v1935 = vmul.f32 %v1913, 0.5
        %v1936 = vmul.f32 %v1933, 0.5
        %v1937 = vmul.f32 %v1913, 0.70710677
        %v1938 = vmul.f32 %v1933, 0.70710677
        %v1939 = vmul.f32 %v1937, %v1937
        %v1940 = vmin.f32 16.0, %v1939
        %v1941 = vmul.f32 %v1940, 2.1237322e-06
        %v1942 = vadd.f32 %v1941, 0.00028619796
        %v1943 = vmul.f32 %v1940, %v1942
        %v1944 = vadd.f32 %v1943, 0.0036580483
        %v1945 = vmul.f32 %v1940, %v1944
        %v1946 = vadd.f32 %v1945, 0.05243302
        %v1947 = vmul.f32 %v1940, %v1946
        %v1948 = vadd.f32 %v1947, 0.18741608
        %v1949 = vmul.f32 %v1940, %v1948
        %v1950 = vadd.f32 %v1949, 1.1283791
        %v1951 = vmul.f32 %v1937, %v1950
        %v1952 = vmul.f32 %v1940, 3.8918573e-05
        %v1953 = vadd.f32 %v1952, 0.001143296
        %v1954 = vmul.f32 %v1940, %v1953
        %v1955 = vadd.f32 %v1954, 0.014752088
        %v1956 = vmul.f32 %v1940, %v1955
        %v1957 = vadd.f32 %v1956, 0.112945676
        %v1958 = vmul.f32 %v1940, %v1957
        %v1959 = vadd.f32 %v1958, 0.4994258
        %v1960 = vmul.f32 %v1940, %v1959
        %v1961 = vadd.f32 %v1960, 1.0
        %v1962 = vrcp.pop %v1961
        %v1963 = vmul.f32 %v1961, %v1962
        %v1964 = vsub.f32 1.0, %v1963
        %v1965 = vmul.f32 %v1962, %v1964
        %v1966 = vadd.f32 %v1962, %v1965
        %vm1967 = vweird.f32 %v1961
        %vm1968 = vweird.f32 %v1962
        %vm1969 = vmor %vm1967, %vm1968
        %v1970 = vsel %vm1969, %v1962, %v1966
        %v1971 = vand.u32 2147483647, %v1961
        %vm1972 = vcmp.eq.f32.partialorder %v1971, 8.507059e+37
        %v1973 = vand.u32 %v1961, 2147483648
        %v1974 = vor.u32 1.1754944e-38, %v1973
        %v1975 = vsel %vm1972, %v1974, %v1970
        %v1976 = vmul.f32 %v1951, %v1975
        %v1977 = vmin.f32 %v1976, 1.0
        %v1978 = vmax.f32 %v1977, -1.0
        %v1979 = vmul.f32 %v1938, %v1938
        %v1980 = vmin.f32 16.0, %v1979
        %v1981 = vmul.f32 %v1980, 2.1237322e-06
        %v1982 = vadd.f32 %v1981, 0.00028619796
        %v1983 = vmul.f32 %v1980, %v1982
        %v1984 = vadd.f32 %v1983, 0.0036580483
        %v1985 = vmul.f32 %v1980, %v1984
        %v1986 = vadd.f32 %v1985, 0.05243302
        %v1987 = vmul.f32 %v1980, %v1986
        %v1988 = vadd.f32 %v1987, 0.18741608
        %v1989 = vmul.f32 %v1980, %v1988
        %v1990 = vadd.f32 %v1989, 1.1283791
        %v1991 = vmul.f32 %v1938, %v1990
        %v1992 = vmul.f32 %v1980, 3.8918573e-05
        %v1993 = vadd.f32 %v1992, 0.001143296
        %v1994 = vmul.f32 %v1980, %v1993
        %v1995 = vadd.f32 %v1994, 0.014752088
        %v1996 = vmul.f32 %v1980, %v1995
        %v1997 = vadd.f32 %v1996, 0.112945676
        %v1998 = vmul.f32 %v1980, %v1997
        %v1999 = vadd.f32 %v1998, 0.4994258
        %v2000 = vmul.f32 %v1980, %v1999
        %v2001 = vadd.f32 %v2000, 1.0
        %v2002 = vrcp.pop %v2001
        %v2003 = vmul.f32 %v2001, %v2002
        %v2004 = vsub.f32 1.0, %v2003
        %v2005 = vmul.f32 %v2002, %v2004
        %v2006 = vadd.f32 %v2002, %v2005
        %vm2007 = vweird.f32 %v2001
        %vm2008 = vweird.f32 %v2002
        %vm2009 = vmor %vm2007, %vm2008
        %v2010 = vsel %vm2009, %v2002, %v2006
        %v2011 = vand.u32 2147483647, %v2001
        %vm2012 = vcmp.eq.f32.partialorder %v2011, 8.507059e+37
        %v2013 = vand.u32 %v2001, 2147483648
        %v2014 = vor.u32 1.1754944e-38, %v2013
        %v2015 = vsel %vm2012, %v2014, %v2010
        %v2016 = vmul.f32 %v1991, %v2015
        %v2017 = vmin.f32 %v2016, 1.0
        %v2018 = vmax.f32 %v2017, -1.0
        %v2019 = vadd.f32 %v1978, 1.0
        %v2020 = vadd.f32 %v2018, 1.0
        %v2021 = vmul.f32 %v1935, %v2019
        %v2022 = vmul.f32 %v1936, %v2020
        %s2023 = scalar_lea.vmem %s15, 256
        %v2024 = vld [vmem:[%s2023] sm:$0xff]
        %v2025 = vld [vmem:[%s2023 + $0x8] sm:$0xff]
        %v2026 = vld [vmem:[%s2023 + $0x10] sm:$0xff]
        %v2027 = vld [vmem:[%s2023 + $0x18] sm:$0xff]
        %v2028 = vld [vmem:[%s2023 + $0x20] sm:$0xff]
        %v2029 = vld [vmem:[%s2023 + $0x28] sm:$0xff]
        %v2030 = vld [vmem:[%s2023 + $0x30] sm:$0xff]
        %v2031 = vld [vmem:[%s2023 + $0x38] sm:$0xff]
        %v2032 = vld [vmem:[%s2023 + $0x40] sm:$0xff]
        %v2033 = vld [vmem:[%s2023 + $0x48] sm:$0xff]
        %v2034 = vld [vmem:[%s2023 + $0x50] sm:$0xff]
        %v2035 = vld [vmem:[%s2023 + $0x58] sm:$0xff]
        %v2036 = vld [vmem:[%s2023 + $0x60] sm:$0xff]
        %v2037 = vld [vmem:[%s2023 + $0x68] sm:$0xff]
        %v2038 = vld [vmem:[%s2023 + $0x70] sm:$0xff]
        %v2039 = vld [vmem:[%s2023 + $0x78] sm:$0xff]
        %v2040 = vld [vmem:[%s2023 + $0x80] sm:$0xff]
        %v2041 = vld [vmem:[%s2023 + $0x88] sm:$0xff]
        %v2042 = vld [vmem:[%s2023 + $0x90] sm:$0xff]
        %v2043 = vld [vmem:[%s2023 + $0x98] sm:$0xff]
        %v2044 = vld [vmem:[%s2023 + $0xa0] sm:$0xff]
        %v2045 = vld [vmem:[%s2023 + $0xa8] sm:$0xff]
        %v2046 = vld [vmem:[%s2023 + $0xb0] sm:$0xff]
        %v2047 = vld [vmem:[%s2023 + $0xb8] sm:$0xff]
        %v2048 = vld [vmem:[%s2023 + $0xc0] sm:$0xff]
        %v2049 = vld [vmem:[%s2023 + $0xc8] sm:$0xff]
        %v2050 = vld [vmem:[%s2023 + $0xd0] sm:$0xff]
        %v2051 = vld [vmem:[%s2023 + $0xd8] sm:$0xff]
        %v2052 = vld [vmem:[%s2023 + $0xe0] sm:$0xff]
        %v2053 = vld [vmem:[%s2023 + $0xe8] sm:$0xff]
        %v2054 = vld [vmem:[%s2023 + $0xf0] sm:$0xff]
        %v2055 = vld [vmem:[%s2023 + $0xf8] sm:$0xff]
        %s2056 = scalar_lea.vmem %s16, 1
        %v2057 = vld [vmem:[%s2056] sm:$0x1]
        %v2059 = vperm.slane %v2057, 0
        %2061 = vmatpush.msra.mxu0 %v2039
        %2062 = vmatpush.msra.mxu0 %v2038
        %2063 = vmatpush.msra.mxu0 %v2037
        %2064 = vmatpush.msra.mxu0 %v2036
        %2065 = vmatpush.msra.mxu0 %v2035
        %2066 = vmatpush.msra.mxu0 %v2034
        %2067 = vmatpush.msra.mxu0 %v2033
        %2068 = vmatpush.msra.mxu0 %v2032
        %2069 = vmatpush.msra.mxu0 %v2031
        %2070 = vmatpush.msra.mxu0 %v2030
        %2071 = vmatpush.msra.mxu0 %v2029
        %2072 = vmatpush.msra.mxu0 %v2028
        %2073 = vmatpush.msra.mxu0 %v2027
        %2074 = vmatpush.msra.mxu0 %v2026
        %2075 = vmatpush.msra.mxu0 %v2025
        %2076 = vmatpush.msra.mxu0 %v2024
        %2077 = vmatmul.f32.gmra.mxu0 %v2021
        %v2078 = vpop.f32.mrf.mxu0
        %v2079 = vadd.f32 %v2059, %v2078
        %2080 = vdwg.mxu0
        %2081 = vmatpush.msra.mxu0 %v2055
        %2082 = vmatpush.msra.mxu0 %v2054
        %2083 = vmatpush.msra.mxu0 %v2053
        %2084 = vmatpush.msra.mxu0 %v2052
        %2085 = vmatpush.msra.mxu0 %v2051
        %2086 = vmatpush.msra.mxu0 %v2050
        %2087 = vmatpush.msra.mxu0 %v2049
        %2088 = vmatpush.msra.mxu0 %v2048
        %2089 = vmatpush.msra.mxu0 %v2047
        %2090 = vmatpush.msra.mxu0 %v2046
        %2091 = vmatpush.msra.mxu0 %v2045
        %2092 = vmatpush.msra.mxu0 %v2044
        %2093 = vmatpush.msra.mxu0 %v2043
        %2094 = vmatpush.msra.mxu0 %v2042
        %2095 = vmatpush.msra.mxu0 %v2041
        %2096 = vmatpush.msra.mxu0 %v2040
        %2097 = vmatmul.f32.gmra.mxu0 %v2022
        %v2098 = vpop.f32.mrf.mxu0
        %v2099 = vadd.f32 %v2079, %v2098
        %2100 = vdwg.mxu0
        %v2101 = vadd.f32 %v1833, %v2099
        %v2102 = vld [vmem:[%s17] sm:$0x1]
        %v2103 = vld [vmem:[%s18] sm:$0x1]
        %v2104 = vsel %vm737, %v2101, 0.0
        %2105 = vadd.xlane.f32.xlu0 %v2104
        %v2106 = vpop.xlane.xlu0 %2105
        %v2107 = vmul.f32 %v2106, %v747
        %v2108 = vsub.f32 %v2101, %v2107
        %v2109 = vmul.f32 %v2108, %v2108
        %v2110 = vsel %vm737, %v2109, 0.0
        %2111 = vadd.xlane.f32.xlu0 %v2110
        %v2112 = vpop.xlane.xlu0 %2111
        %v2113 = vmul.f32 %v2112, %v747
        %v2114 = vadd.f32 %v2113, 1e-05
        %v2115 = vrsqrt.pop %v2114
        %v2116 = vmul.f32 %v2115, %v2114
        %v2117 = vmul.f32 %v2116, %v2115
        %v2118 = vmul.f32 0.5, %v2117
        %v2119 = vsub.f32 1.5, %v2118
        %v2120 = vmul.f32 %v2115, %v2119
        %vm2121 = vweird.f32 %v2114
        %vm2122 = vweird.f32 %v2115
        %vm2123 = vmor %vm2121, %vm2122
        %v2124 = vsel %vm2123, %v2115, %v2120
        %v2125 = vmul.f32 %v2108, %v2124
        %v2127 = vperm.slane %v2102, 0
        %v2129 = vmul.f32 %v2125, %v2127
        %v2131 = vperm.slane %v2103, 0
        %v2133 = vadd.f32 %v2129, %v2131
        %2134 = vst.msk [vmem:[%s606] sm:$0xf] %vm737, %v2133
        %s2135 = sand.u32 %s450, 1
        %s2136 = scalar_lea.sflag [#allocation3], %s2135
        %s2137 = sand.u32 %s450, 1
        %s2138 = smul.addr %s2137, 4
        %s2139 = scalar_lea.vmem [#allocation2], %s2138
        // Predicated region
        $region97: #{forward.3} parent=95 // pred_check
          %p2140 = pneg %p460
        $region98: #{forward.3} parent=95 // pred_check_branch
          %2142 = sbr.rel (%p2140) target = $region100
        $region99: #{forward.3} parent=95 // pred_region
          %2144 = vsyncadd %s2136, 0
          %s2145 = smul.addr %s33, 4
          %s2146 = scalar_lea.hbm %s19, %s2145
          %s2148 = sshll.u32 %s2139, 4
          %s2149 = int_to_ptr.vmem [resolvable:$true] %s2148
          %s2150 = sshll.u32 %s2146, 4
          %s2151 = int_to_ptr.hbm [resolvable:$true] %s2150
          %2153 = dma.vmem_to_hbm [thread:$0]  %s2149, 64, %s2151, %s2136
        $region100: #{forward.3} parent=95 // pred_fallthru
          _
      $region96: #{forward.3} parent=5 // pred_fallthru
        _
      %p2154 = scmp.le.s32.totalorder 2, %s28
      // Predicated region
      $region101: #{forward.3} parent=5 // pred_check
        %p2155 = pneg %p2154
      $region102: #{forward.3} parent=5 // pred_check_branch
        %2157 = sbr.rel (%p2155) target = $region104
      $region103: #{forward.3} parent=5 // pred_region
        %s2158 = ssub.s32 %s28, 2
        // Predicated region
        $region105: #{forward.3} parent=103 // pred_check
          %p2159 = pneg %p466
        $region106: #{forward.3} parent=103 // pred_check_branch
          %2161 = sbr.rel (%p2159) target = $region108
        $region107: #{forward.3} parent=103 // pred_region
          %s2162 = sand.u32 %s451, 1
          %s2163 = scalar_lea.sflag [#allocation3], %s2162
          %s2164 = sand.u32 %s451, 1
          %s2165 = smul.addr %s2164, 4
          %s2166 = scalar_lea.vmem [#allocation2], %s2165
          %2168 = dma.done %s2163, 64
        $region108: #{forward.3} parent=103 // pred_fallthru
          _
      $region104: #{forward.3} parent=5 // pred_fallthru
        _
    $region6: #{forward.3} parent=1 // loop_footer
      %s32 = sadd.s32 1, %s28
    $region7: #{forward.3} parent=1 // loop_footer_branch
      %27 = sbr.rel target = $region3
    $region8: #{forward.3} parent=1 // loop_exit
      _
    %2169 = vsyncpa [#allocation3], 1
    %s2170 = scalar_lea.sflag [#allocation3], 1
    %2171 = vsyncpa %s2170, 1

</llo_original>
